<compile_context>
chip_gen: v5e
topology: v5e:2x2
jax: 0.10.0
libtpu: 0.0.40
codegen_flags: <defaults>
</compile_context>

<pallas_src>
import numpy as np
import jax
import jax.numpy as jnp
from jax import lax
from jax.experimental import pallas as pl
from jax.experimental.pallas import tpu as pltpu

# ---------------- static model dimensions ----------------
N_BATCH = 2
C_IN = 9           # num_channels (conv1 in_channels)
H_IN = 25          # "input_width" of the original model (time axis)
W_IN = 9           # spatial width == num_channels (conv1 kernel spans it fully)
KH1, KH2 = 7, 3    # kernel_size_1, kernel_size_2
C1, C2 = 128, 128
FC1, NUM_LABELS = 512, 2

H1 = H_IN - KH1 + 1          # 19  (after conv1)
HP1 = (H1 - 2) // 2 + 1      # 9   (after pool1)
H2 = HP1 - KH2 + 1           # 7   (after conv2)
HP2 = (H2 - 2) // 2 + 1      # 3   (after pool2)

ROWS1 = 2 * HP1              # 18 conv1 rows needed per sample (h1=18 dropped by pool1)
KCOL = KH1 * W_IN * C_IN     # 567 im2col contraction size
KCOL_PAD = 640               # 5 x 128 lanes (zero padded)
NB_TILE = 8                  # batch tile (sublane-aligned M everywhere)
OUT_LANES = HP2 * 128        # 384 lane-dense output per sample

# pool1 output positions in "parity-major" order (even h's then odd h's).  With
# this ordering every conv2 tap reads ONE contiguous slice of the pooled map.
_H_PM = np.array([0, 2, 4, 6, 8, 1, 3, 5, 7])
# conv1 (= im2col) row order per sample: even member of each pool pair first,
# then the odd member, so pool1 = max(rows[:9*NB], rows[9*NB:]).
_H1_ORDER = np.concatenate([2 * _H_PM, 2 * _H_PM + 1])            # (18,)
# Start position (within the parity-major p1 block) of the contiguous 3-position
# slice used by conv2 tap kh, for even (h2=0,2,4) and odd (h2=1,3,5) output rows.
_EVEN_START = (0, 5, 1)
_ODD_START = (5, 1, 6)


# ---------------- fused Pallas kernel (one batch tile per grid step) ----------------
def cnn_kernel(xcol_ref, w1_ref, b1_ref, w2_ref, b2_ref,
               wp_ref, b1t_ref, wf2_ref, b2t_ref, out_ref):
    f32, bf16 = jnp.float32, jnp.bfloat16
    nb = out_ref.shape[0]                                        # static batch-tile size

    # ---- conv1: one im2col matmul (18*NB, 640) x (640, 128) + bias + ReLU -------
    y1 = jnp.dot(xcol_ref[...], w1_ref[...], preferred_element_type=f32)
    y1 = jnp.maximum(y1 + b1_ref[...], 0.0)                      # (18*NB, 128)

    # ---- pool1: the two pool-pair members are contiguous half-blocks ------------
    half = HP1 * nb
    p1 = jnp.maximum(y1[:half, :], y1[half:, :])                 # (9*NB, 128), pos-major
    # dropout1: identity (inference)
    p1b = p1.astype(bf16)

    # ---- conv2: taps K-stacked, even/odd rows M-stacked -> ONE matmul -----------
    lhs_e = jnp.concatenate([p1b[a * nb:(a + HP2) * nb, :] for a in _EVEN_START], axis=1)
    lhs_o = jnp.concatenate([p1b[a * nb:(a + HP2) * nb, :] for a in _ODD_START], axis=1)
    lhs2 = jnp.concatenate([lhs_e, lhs_o], axis=0)               # (6*NB, 384)
    y2 = jnp.dot(lhs2, w2_ref[...], preferred_element_type=f32)  # (6*NB, 128)

    # ---- pool2 (+ bias/ReLU folded after the max) --------------------------------
    p2 = jnp.maximum(jnp.maximum(y2[:HP2 * nb, :], y2[HP2 * nb:, :]) + b2_ref[...], 0.0)
    # dropout2: identity (inference)
    p2b = p2.astype(bf16)                                        # (3*NB, 128), pos-major

    # ---- fc1: K-stacked over the 3 pooled-h positions; NCHW view(-1,128) --------
    #      permutation is folded into wp -> ONE (NB, 384) x (384, 1536) matmul.
    lhs_f = jnp.concatenate([p2b[h * nb:(h + 1) * nb, :] for h in range(HP2)], axis=1)
    h_act = jnp.maximum(jnp.dot(lhs_f, wp_ref[...], preferred_element_type=f32)
                        + b1t_ref[...], 0.0)                     # (NB, 1536)
    # dropout3: identity (inference)

    # ---- fc2: block-diagonal weight -> ONE matmul, ONE dense aligned store ------
    out_ref[...] = (jnp.dot(h_act.astype(bf16), wf2_ref[...],
                            preferred_element_type=f32) + b2t_ref[...])


# ---------------- one-time weight packing (hoisted out of the per-call path) ------
def prepare_params(conv1_w, conv1_b, conv2_w, conv2_b, fc1_w, fc1_b, fc2_w, fc2_b):
    # conv1 im2col weight [kh, kw*C+ci, out], K zero-padded 567 -> 640.
    w1 = jnp.transpose(conv1_w, (2, 3, 1, 0)).reshape(KCOL, C1)
    w1 = jnp.zeros((KCOL_PAD, C1), jnp.float32).at[:KCOL].set(w1).astype(jnp.bfloat16)
    b1 = conv1_b.reshape(1, C1).astype(jnp.float32)

    # conv2: 3 taps stacked along K -> (384, 128).
    w2 = jnp.transpose(conv2_w[:, :, :, 0], (2, 1, 0)).reshape(KH2 * C1, C2).astype(jnp.bfloat16)
    b2 = conv2_b.reshape(1, C2).astype(jnp.float32)

    # fc1 with the `x.view(-1,128)` (NCHW flatten) permutation folded in, K-stacked
    # over pooled-h:  wp[128*h + c, 512*r + f] = fc1_w[f, 3*c + h - 128*r] (masked).
    wf1 = fc1_w.T                                                             # (128, 512)
    c_idx = np.arange(C2)
    rows = []
    for h in range(HP2):
        blocks = []
        for r in range(HP2):
            j = HP2 * c_idx + h - C2 * r
            valid = (j >= 0) & (j < C2)
            blk = jnp.where(valid[:, None],
                            jnp.take(wf1, np.clip(j, 0, C2 - 1), axis=0), 0.0)
            blocks.append(blk)
        rows.append(jnp.concatenate(blocks, axis=1))                          # (128, 1536)
    wp = jnp.concatenate(rows, axis=0).astype(jnp.bfloat16)                   # (384, 1536)
    b1t = jnp.tile(fc1_b, HP2).reshape(1, HP2 * FC1).astype(jnp.float32)      # (1, 1536)

    # fc2: block-diagonal (1536, 384); output lanes 128*r + j = logits(view row r, label j).
    wf2 = jnp.zeros((HP2 * FC1, OUT_LANES), jnp.float32)
    for r in range(HP2):
        wf2 = wf2.at[r * FC1:(r + 1) * FC1, r * 128:r * 128 + NUM_LABELS].set(fc2_w.T)
    wf2 = wf2.astype(jnp.bfloat16)
    b2pad = jnp.zeros((128,), jnp.float32).at[:NUM_LABELS].set(fc2_b)
    b2t = jnp.tile(b2pad, HP2).reshape(1, OUT_LANES).astype(jnp.float32)      # (1, 384)

    return (w1, b1, w2, b2, wp, b1t, wf2, b2t)


# ---------------- per-call wrapper (im2col + pallas_call + output unpack) ---------
@jax.jit
def cnn_forward(x, params):
    w1, b1, w2, b2, wp, b1t, wf2, b2t = params
    n = x.shape[0]
    n_pad = ((n + NB_TILE - 1) // NB_TILE) * NB_TILE
    num_tiles = n_pad // NB_TILE
    if n_pad != n:
        x = jnp.pad(x, ((0, n_pad - n), (0, 0), (0, 0), (0, 0)))

    # im2col, channels-last; rows ordered (tile, pool-member, parity-major pos, sample).
    # TODO(synk): at large batch, fuse this gather into the kernel (feed x as bf16
    # (N,25,81) and build/shift the 18 windows in VMEM) to avoid the 5x HBM expansion.
    x_r = jnp.transpose(x, (0, 2, 3, 1)).reshape(n_pad, H_IN, W_IN * C_IN)    # (Np,25,81)
    win = _H1_ORDER[:, None] + np.arange(KH1)[None, :]                        # (18, 7)
    xw = x_r[:, win, :].reshape(num_tiles, NB_TILE, ROWS1, KCOL)
    xw = jnp.transpose(xw, (0, 2, 1, 3)).reshape(num_tiles * ROWS1 * NB_TILE, KCOL)
    xcol = jnp.pad(xw, ((0, 0), (0, KCOL_PAD - KCOL))).astype(jnp.bfloat16)   # (Np*18, 640)

    out = pl.pallas_call(
        cnn_kernel,
        out_shape=jax.ShapeDtypeStruct((n_pad, OUT_LANES), jnp.float32),
        grid=(num_tiles,),
        in_specs=[
            pl.BlockSpec((ROWS1 * NB_TILE, KCOL_PAD), lambda bi: (bi, 0)),
            pl.BlockSpec(w1.shape, lambda bi: (0, 0)),
            pl.BlockSpec(b1.shape, lambda bi: (0, 0)),
            pl.BlockSpec(w2.shape, lambda bi: (0, 0)),
            pl.BlockSpec(b2.shape, lambda bi: (0, 0)),
            pl.BlockSpec(wp.shape, lambda bi: (0, 0)),
            pl.BlockSpec(b1t.shape, lambda bi: (0, 0)),
            pl.BlockSpec(wf2.shape, lambda bi: (0, 0)),
            pl.BlockSpec(b2t.shape, lambda bi: (0, 0)),
        ],
        out_specs=pl.BlockSpec((NB_TILE, OUT_LANES), lambda bi: (bi, 0)),
        compiler_params=pltpu.CompilerParams(dimension_semantics=("parallel",)),
    )(xcol, w1, b1, w2, b2, wp, b1t, wf2, b2t)

    # lanes 128*r + j -> torch row order 3*s + r, columns j < NUM_LABELS.
    out = out.reshape(n_pad, HP2, 128)[:, :, :NUM_LABELS].reshape(n_pad * HP2, NUM_LABELS)
    return out[: n * HP2]


# ---------------- pure-JAX reference (mirrors the PyTorch forward) ----------------
def torch_reference(x, conv1_w, conv1_b, conv2_w, conv2_b, fc1_w, fc1_b, fc2_w, fc2_b):
    dn = ("NCHW", "OIHW", "NCHW")
    y = lax.conv_general_dilated(x, conv1_w, (1, 1), "VALID", dimension_numbers=dn)
    y = jnp.maximum(y + conv1_b[None, :, None, None], 0.0)
    y = lax.reduce_window(y, -jnp.inf, lax.max, (1, 1, 2, 1), (1, 1, 2, 2), "VALID")
    y = lax.conv_general_dilated(y, conv2_w, (1, 1), "VALID", dimension_numbers=dn)
    y = jnp.maximum(y + conv2_b[None, :, None, None], 0.0)
    y = lax.reduce_window(y, -jnp.inf, lax.max, (1, 1, 2, 1), (1, 1, 2, 2), "VALID")
    z = y.reshape(-1, 128)
    h = jnp.maximum(z @ fc1_w.T + fc1_b, 0.0)
    return h @ fc2_w.T + fc2_b


if __name__ == "__main__":
    key = jax.random.PRNGKey(0)
    ks = jax.random.split(key, 9)

    def uinit(k, shape, fan_in):
        b = 1.0 / np.sqrt(fan_in)
        return jax.random.uniform(k, shape, jnp.float32, -b, b)

    x = jax.random.normal(ks[0], (N_BATCH, C_IN, H_IN, W_IN), jnp.float32)
    conv1_w = uinit(ks[1], (C1, C_IN, KH1, W_IN), C_IN * KH1 * W_IN)
    conv1_b = uinit(ks[2], (C1,), C_IN * KH1 * W_IN)
    conv2_w = uinit(ks[3], (C2, C1, KH2, 1), C1 * KH2)
    conv2_b = uinit(ks[4], (C2,), C1 * KH2)
    fc1_w = uinit(ks[5], (FC1, C2), C2)
    fc1_b = uinit(ks[6], (FC1,), C2)
    fc2_w = uinit(ks[7], (NUM_LABELS, FC1), FC1)
    fc2_b = uinit(ks[8], (NUM_LABELS,), FC1)

    raw_params = (conv1_w, conv1_b, conv2_w, conv2_b, fc1_w, fc1_b, fc2_w, fc2_b)
    packed = prepare_params(*raw_params)                 # one-time weight packing

    out = jax.block_until_ready(cnn_forward(x, packed))
    assert out.shape == (N_BATCH * HP2, NUM_LABELS)

    ref = jax.block_until_ready(torch_reference(x, *raw_params))
    np.testing.assert_allclose(np.asarray(out), np.asarray(ref), atol=5e-2, rtol=5e-2)

    print("KERNEL_OK")
</pallas_src>

<mosaic_0001>
module attributes {stable_mosaic.version = 11 : i64} {
  func.func @cnn_kernel(%arg0: i32, %arg1: memref<144x640xbf16, #tpu.memory_space<vmem>>, %arg2: memref<640x128xbf16, #tpu.memory_space<vmem>>, %arg3: memref<1x128xf32, #tpu.memory_space<vmem>>, %arg4: memref<384x128xbf16, #tpu.memory_space<vmem>>, %arg5: memref<1x128xf32, #tpu.memory_space<vmem>>, %arg6: memref<384x1536xbf16, #tpu.memory_space<vmem>>, %arg7: memref<1x1536xf32, #tpu.memory_space<vmem>>, %arg8: memref<1536x384xbf16, #tpu.memory_space<vmem>>, %arg9: memref<1x384xf32, #tpu.memory_space<vmem>>, %arg10: memref<8x384xf32, #tpu.memory_space<vmem>>) attributes {dimension_semantics = [#tpu.dimension_semantics<parallel>], iteration_bounds = array<i64: 1>, scalar_prefetch = 0 : i64, scratch_operands = 0 : i64, tpu.core_type = #tpu.core_type<tc>, window_params = [{transform_indices = @transform_0, window_bounds = array<i64: 144, 640>}, {pipeline_mode = #tpu.pipeline_mode<synchronous>, transform_indices = @transform_1, window_bounds = array<i64: 640, 128>}, {pipeline_mode = #tpu.pipeline_mode<synchronous>, transform_indices = @transform_2, window_bounds = array<i64: 1, 128>}, {pipeline_mode = #tpu.pipeline_mode<synchronous>, transform_indices = @transform_3, window_bounds = array<i64: 384, 128>}, {pipeline_mode = #tpu.pipeline_mode<synchronous>, transform_indices = @transform_4, window_bounds = array<i64: 1, 128>}, {pipeline_mode = #tpu.pipeline_mode<synchronous>, transform_indices = @transform_5, window_bounds = array<i64: 384, 1536>}, {pipeline_mode = #tpu.pipeline_mode<synchronous>, transform_indices = @transform_6, window_bounds = array<i64: 1, 1536>}, {pipeline_mode = #tpu.pipeline_mode<synchronous>, transform_indices = @transform_7, window_bounds = array<i64: 1536, 384>}, {pipeline_mode = #tpu.pipeline_mode<synchronous>, transform_indices = @transform_8, window_bounds = array<i64: 1, 384>}, {transform_indices = @transform_9, window_bounds = array<i64: 8, 384>}]} {
    %c0 = arith.constant 0 : index
    %c0_0 = arith.constant 0 : index
    %0 = vector.load %arg1[%c0, %c0_0] : memref<144x640xbf16, #tpu.memory_space<vmem>>, vector<144x640xbf16>
    %c0_1 = arith.constant 0 : index
    %c0_2 = arith.constant 0 : index
    %1 = vector.load %arg2[%c0_1, %c0_2] : memref<640x128xbf16, #tpu.memory_space<vmem>>, vector<640x128xbf16>
    %cst = arith.constant dense<0.000000e+00> : vector<144x128xf32>
    %2 = tpu.matmul %0, %1, %cst {dimension_numbers = #tpu.dot_dimension_numbers<[1], [0], [0], [1], [0, 0, 1, 1], [], []>} : vector<144x640xbf16>, vector<640x128xbf16>, vector<144x128xf32> -> vector<144x128xf32>
    %c0_3 = arith.constant 0 : index
    %c0_4 = arith.constant 0 : index
    %3 = vector.load %arg3[%c0_3, %c0_4] : memref<1x128xf32, #tpu.memory_space<vmem>>, vector<1x128xf32>
    %4 = vector.broadcast %3 : vector<1x128xf32> to vector<144x128xf32>
    %5 = arith.addf %2, %4 : vector<144x128xf32>
    %cst_5 = arith.constant 0.000000e+00 : f32
    %6 = vector.broadcast %cst_5 : f32 to vector<144x128xf32>
    %7 = arith.maximumf %5, %6 : vector<144x128xf32>
    %8 = vector.extract_strided_slice %7 {offsets = [0, 0], sizes = [72, 128], strides = [1, 1]} : vector<144x128xf32> to vector<72x128xf32>
    %9 = vector.extract_strided_slice %7 {offsets = [72, 0], sizes = [72, 128], strides = [1, 1]} : vector<144x128xf32> to vector<72x128xf32>
    %10 = arith.maximumf %8, %9 : vector<72x128xf32>
    %11 = arith.truncf %10 : vector<72x128xf32> to vector<72x128xbf16>
    %12 = vector.extract_strided_slice %11 {offsets = [0, 0], sizes = [24, 128], strides = [1, 1]} : vector<72x128xbf16> to vector<24x128xbf16>
    %13 = vector.extract_strided_slice %11 {offsets = [40, 0], sizes = [24, 128], strides = [1, 1]} : vector<72x128xbf16> to vector<24x128xbf16>
    %14 = vector.extract_strided_slice %11 {offsets = [8, 0], sizes = [24, 128], strides = [1, 1]} : vector<72x128xbf16> to vector<24x128xbf16>
    %15 = tpu.concatenate %12, %13, %14 in 1 : vector<24x128xbf16>, vector<24x128xbf16>, vector<24x128xbf16> -> vector<24x384xbf16>
    %16 = vector.extract_strided_slice %11 {offsets = [40, 0], sizes = [24, 128], strides = [1, 1]} : vector<72x128xbf16> to vector<24x128xbf16>
    %17 = vector.extract_strided_slice %11 {offsets = [8, 0], sizes = [24, 128], strides = [1, 1]} : vector<72x128xbf16> to vector<24x128xbf16>
    %18 = vector.extract_strided_slice %11 {offsets = [48, 0], sizes = [24, 128], strides = [1, 1]} : vector<72x128xbf16> to vector<24x128xbf16>
    %19 = tpu.concatenate %16, %17, %18 in 1 : vector<24x128xbf16>, vector<24x128xbf16>, vector<24x128xbf16> -> vector<24x384xbf16>
    %20 = tpu.concatenate %15, %19 in 0 : vector<24x384xbf16>, vector<24x384xbf16> -> vector<48x384xbf16>
    %c0_6 = arith.constant 0 : index
    %c0_7 = arith.constant 0 : index
    %21 = vector.load %arg4[%c0_6, %c0_7] : memref<384x128xbf16, #tpu.memory_space<vmem>>, vector<384x128xbf16>
    %cst_8 = arith.constant dense<0.000000e+00> : vector<48x128xf32>
    %22 = tpu.matmul %20, %21, %cst_8 {dimension_numbers = #tpu.dot_dimension_numbers<[1], [0], [0], [1], [0, 0, 1, 1], [], []>} : vector<48x384xbf16>, vector<384x128xbf16>, vector<48x128xf32> -> vector<48x128xf32>
    %23 = vector.extract_strided_slice %22 {offsets = [0, 0], sizes = [24, 128], strides = [1, 1]} : vector<48x128xf32> to vector<24x128xf32>
    %24 = vector.extract_strided_slice %22 {offsets = [24, 0], sizes = [24, 128], strides = [1, 1]} : vector<48x128xf32> to vector<24x128xf32>
    %25 = arith.maximumf %23, %24 : vector<24x128xf32>
    %c0_9 = arith.constant 0 : index
    %c0_10 = arith.constant 0 : index
    %26 = vector.load %arg5[%c0_9, %c0_10] : memref<1x128xf32, #tpu.memory_space<vmem>>, vector<1x128xf32>
    %27 = vector.broadcast %26 : vector<1x128xf32> to vector<24x128xf32>
    %28 = arith.addf %25, %27 : vector<24x128xf32>
    %cst_11 = arith.constant 0.000000e+00 : f32
    %29 = vector.broadcast %cst_11 : f32 to vector<24x128xf32>
    %30 = arith.maximumf %28, %29 : vector<24x128xf32>
    %31 = arith.truncf %30 : vector<24x128xf32> to vector<24x128xbf16>
    %32 = vector.extract_strided_slice %31 {offsets = [0, 0], sizes = [8, 128], strides = [1, 1]} : vector<24x128xbf16> to vector<8x128xbf16>
    %33 = vector.extract_strided_slice %31 {offsets = [8, 0], sizes = [8, 128], strides = [1, 1]} : vector<24x128xbf16> to vector<8x128xbf16>
    %34 = vector.extract_strided_slice %31 {offsets = [16, 0], sizes = [8, 128], strides = [1, 1]} : vector<24x128xbf16> to vector<8x128xbf16>
    %35 = tpu.concatenate %32, %33, %34 in 1 : vector<8x128xbf16>, vector<8x128xbf16>, vector<8x128xbf16> -> vector<8x384xbf16>
    %c0_12 = arith.constant 0 : index
    %c0_13 = arith.constant 0 : index
    %36 = vector.load %arg6[%c0_12, %c0_13] : memref<384x1536xbf16, #tpu.memory_space<vmem>>, vector<384x1536xbf16>
    %cst_14 = arith.constant dense<0.000000e+00> : vector<8x1536xf32>
    %37 = tpu.matmul %35, %36, %cst_14 {dimension_numbers = #tpu.dot_dimension_numbers<[1], [0], [0], [1], [0, 0, 1, 1], [], []>} : vector<8x384xbf16>, vector<384x1536xbf16>, vector<8x1536xf32> -> vector<8x1536xf32>
    %c0_15 = arith.constant 0 : index
    %c0_16 = arith.constant 0 : index
    %38 = vector.load %arg7[%c0_15, %c0_16] : memref<1x1536xf32, #tpu.memory_space<vmem>>, vector<1x1536xf32>
    %39 = vector.broadcast %38 : vector<1x1536xf32> to vector<8x1536xf32>
    %40 = arith.addf %37, %39 : vector<8x1536xf32>
    %cst_17 = arith.constant 0.000000e+00 : f32
    %41 = vector.broadcast %cst_17 : f32 to vector<8x1536xf32>
    %42 = arith.maximumf %40, %41 : vector<8x1536xf32>
    %43 = arith.truncf %42 : vector<8x1536xf32> to vector<8x1536xbf16>
    %c0_18 = arith.constant 0 : index
    %c0_19 = arith.constant 0 : index
    %44 = vector.load %arg8[%c0_18, %c0_19] : memref<1536x384xbf16, #tpu.memory_space<vmem>>, vector<1536x384xbf16>
    %cst_20 = arith.constant dense<0.000000e+00> : vector<8x384xf32>
    %45 = tpu.matmul %43, %44, %cst_20 {dimension_numbers = #tpu.dot_dimension_numbers<[1], [0], [0], [1], [0, 0, 1, 1], [], []>} : vector<8x1536xbf16>, vector<1536x384xbf16>, vector<8x384xf32> -> vector<8x384xf32>
    %c0_21 = arith.constant 0 : index
    %c0_22 = arith.constant 0 : index
    %46 = vector.load %arg9[%c0_21, %c0_22] : memref<1x384xf32, #tpu.memory_space<vmem>>, vector<1x384xf32>
    %47 = vector.broadcast %46 : vector<1x384xf32> to vector<8x384xf32>
    %48 = arith.addf %45, %47 : vector<8x384xf32>
    %c0_23 = arith.constant 0 : index
    %c0_24 = arith.constant 0 : index
    %49 = vector.load %arg10[%c0_23, %c0_24] : memref<8x384xf32, #tpu.memory_space<vmem>>, vector<8x384xf32>
    tpu.vector_store %arg10[%c0_23, %c0_24], %48 {strides = array<i32>} : memref<8x384xf32, #tpu.memory_space<vmem>>, vector<8x384xf32>,
    return
  }
  func.func @transform_0(%arg0: i32) -> (i32, i32) {
    %c0_i32 = arith.constant 0 : i32
    %c0_i32_0 = arith.constant 0 : i32
    return %arg0, %c0_i32 : i32, i32
  }
  func.func @transform_1(%arg0: i32) -> (i32, i32) {
    %c0_i32 = arith.constant 0 : i32
    %c0_i32_0 = arith.constant 0 : i32
    %c0_i32_1 = arith.constant 0 : i32
    return %c0_i32, %c0_i32_0 : i32, i32
  }
  func.func @transform_2(%arg0: i32) -> (i32, i32) {
    %c0_i32 = arith.constant 0 : i32
    %c0_i32_0 = arith.constant 0 : i32
    %c0_i32_1 = arith.constant 0 : i32
    return %c0_i32, %c0_i32_0 : i32, i32
  }
  func.func @transform_3(%arg0: i32) -> (i32, i32) {
    %c0_i32 = arith.constant 0 : i32
    %c0_i32_0 = arith.constant 0 : i32
    %c0_i32_1 = arith.constant 0 : i32
    return %c0_i32, %c0_i32_0 : i32, i32
  }
  func.func @transform_4(%arg0: i32) -> (i32, i32) {
    %c0_i32 = arith.constant 0 : i32
    %c0_i32_0 = arith.constant 0 : i32
    %c0_i32_1 = arith.constant 0 : i32
    return %c0_i32, %c0_i32_0 : i32, i32
  }
  func.func @transform_5(%arg0: i32) -> (i32, i32) {
    %c0_i32 = arith.constant 0 : i32
    %c0_i32_0 = arith.constant 0 : i32
    %c0_i32_1 = arith.constant 0 : i32
    return %c0_i32, %c0_i32_0 : i32, i32
  }
  func.func @transform_6(%arg0: i32) -> (i32, i32) {
    %c0_i32 = arith.constant 0 : i32
    %c0_i32_0 = arith.constant 0 : i32
    %c0_i32_1 = arith.constant 0 : i32
    return %c0_i32, %c0_i32_0 : i32, i32
  }
  func.func @transform_7(%arg0: i32) -> (i32, i32) {
    %c0_i32 = arith.constant 0 : i32
    %c0_i32_0 = arith.constant 0 : i32
    %c0_i32_1 = arith.constant 0 : i32
    return %c0_i32, %c0_i32_0 : i32, i32
  }
  func.func @transform_8(%arg0: i32) -> (i32, i32) {
    %c0_i32 = arith.constant 0 : i32
    %c0_i32_0 = arith.constant 0 : i32
    %c0_i32_1 = arith.constant 0 : i32
    return %c0_i32, %c0_i32_0 : i32, i32
  }
  func.func @transform_9(%arg0: i32) -> (i32, i32) {
    %c0_i32 = arith.constant 0 : i32
    %c0_i32_0 = arith.constant 0 : i32
    return %arg0, %c0_i32 : i32, i32
  }
}

</mosaic_0001>

<llo_original>
// kernel: cnn_forward.1
$region0: #{cnn_forward.1}
  #allocation0 [shape = 'u32[]', space=smem, size = 0x4, offset = 0x4, fixed_abs, tag = 'smem constant byte address 0x4 - core index']
  #allocation1 [shape = 'u32[72,128]{1,0:T(1,128)}', space=vmem, size = 0x9000, scoped, tag = 'internal scratch']
  %s0 = inlined_call_operand.vmem [shape: bf16[144,640], index: 0, kind: input, shape index: {}]
  %s1 = inlined_call_operand.vmem [shape: bf16[640,128], index: 1, kind: input, shape index: {}]
  %s2 = inlined_call_operand.vmem [shape: f32[1,128], index: 2, kind: input, shape index: {}]
  %s3 = inlined_call_operand.vmem [shape: bf16[384,128], index: 3, kind: input, shape index: {}]
  %s4 = inlined_call_operand.vmem [shape: f32[1,128], index: 4, kind: input, shape index: {}]
  %s5 = inlined_call_operand.vmem [shape: bf16[384,1536], index: 5, kind: input, shape index: {}]
  %s6 = inlined_call_operand.vmem [shape: f32[1,1536], index: 6, kind: input, shape index: {}]
  %s7 = inlined_call_operand.vmem [shape: bf16[1536,384], index: 7, kind: input, shape index: {}]
  %s8 = inlined_call_operand.vmem [shape: f32[1,384], index: 8, kind: input, shape index: {}]
  %s9 = inlined_call_operand.vmem [shape: f32[8,384], index: 9, kind: output, shape index: {}]
  %s10 = sld [smem:[#allocation0]]
  $region46: #{cnn_forward.1} parent=0
    _
  %s12 = ssub.s32 1, %s10
  %s13 = scalar_select 0, %s12, %s10
  // Predicated region
  $region2: #{cnn_forward.1} parent=0 // pred_check
    _
  $region3: #{cnn_forward.1} parent=0 // pred_check_branch
    %15 = sbr.rel (0) target = $region5
  $region4: #{cnn_forward.1} parent=0 // pred_region
    _
  $region5: #{cnn_forward.1} parent=0 // pred_fallthru
    _
  // Predicated region
  $region6: #{cnn_forward.1} parent=0 // pred_check
    _
  $region7: #{cnn_forward.1} parent=0 // pred_check_branch
    %17 = sbr.rel (0) target = $region9
  $region8: #{cnn_forward.1} parent=0 // pred_region
    _
  $region9: #{cnn_forward.1} parent=0 // pred_fallthru
    _
  // Predicated region
  $region10: #{cnn_forward.1} parent=0 // pred_check
    _
  $region11: #{cnn_forward.1} parent=0 // pred_check_branch
    %19 = sbr.rel (0) target = $region13
  $region12: #{cnn_forward.1} parent=0 // pred_region
    _
  $region13: #{cnn_forward.1} parent=0 // pred_fallthru
    _
  // Predicated region
  $region14: #{cnn_forward.1} parent=0 // pred_check
    _
  $region15: #{cnn_forward.1} parent=0 // pred_check_branch
    %21 = sbr.rel (0) target = $region17
  $region16: #{cnn_forward.1} parent=0 // pred_region
    _
  $region17: #{cnn_forward.1} parent=0 // pred_fallthru
    _
  // Predicated region
  $region18: #{cnn_forward.1} parent=0 // pred_check
    _
  $region19: #{cnn_forward.1} parent=0 // pred_check_branch
    %23 = sbr.rel (0) target = $region21
  $region20: #{cnn_forward.1} parent=0 // pred_region
    _
  $region21: #{cnn_forward.1} parent=0 // pred_fallthru
    _
  // Predicated region
  $region22: #{cnn_forward.1} parent=0 // pred_check
    _
  $region23: #{cnn_forward.1} parent=0 // pred_check_branch
    %25 = sbr.rel (0) target = $region25
  $region24: #{cnn_forward.1} parent=0 // pred_region
    _
  $region25: #{cnn_forward.1} parent=0 // pred_fallthru
    _
  // Predicated region
  $region26: #{cnn_forward.1} parent=0 // pred_check
    _
  $region27: #{cnn_forward.1} parent=0 // pred_check_branch
    %27 = sbr.rel (0) target = $region29
  $region28: #{cnn_forward.1} parent=0 // pred_region
    _
  $region29: #{cnn_forward.1} parent=0 // pred_fallthru
    _
  // Predicated region
  $region30: #{cnn_forward.1} parent=0 // pred_check
    _
  $region31: #{cnn_forward.1} parent=0 // pred_check_branch
    %29 = sbr.rel (0) target = $region33
  $region32: #{cnn_forward.1} parent=0 // pred_region
    _
  $region33: #{cnn_forward.1} parent=0 // pred_fallthru
    _
  // Predicated region
  $region34: #{cnn_forward.1} parent=0 // pred_check
    _
  $region35: #{cnn_forward.1} parent=0 // pred_check_branch
    %31 = sbr.rel (0) target = $region37
  $region36: #{cnn_forward.1} parent=0 // pred_region
    _
  $region37: #{cnn_forward.1} parent=0 // pred_fallthru
    _
  %v32 = vld [vmem:[%s0] sm:$0xff]
  %v33 = vld [vmem:[%s0 + $0x8] sm:$0xff]
  %v34 = vld [vmem:[%s0 + $0x10] sm:$0xf]
  %v35 = vld [vmem:[%s0 + $0x14] sm:$0xff]
  %v36 = vld [vmem:[%s0 + $0x1c] sm:$0xff]
  %v37 = vld [vmem:[%s0 + $0x24] sm:$0xf]
  %v38 = vld [vmem:[%s0 + $0x28] sm:$0xff]
  %v39 = vld [vmem:[%s0 + $0x30] sm:$0xff]
  %v40 = vld [vmem:[%s0 + $0x38] sm:$0xf]
  %v41 = vld [vmem:[%s0 + $0x3c] sm:$0xff]
  %v42 = vld [vmem:[%s0 + $0x44] sm:$0xff]
  %v43 = vld [vmem:[%s0 + $0x4c] sm:$0xf]
  %v44 = vld [vmem:[%s0 + $0x50] sm:$0xff]
  %v45 = vld [vmem:[%s0 + $0x58] sm:$0xff]
  %v46 = vld [vmem:[%s0 + $0x60] sm:$0xf]
  %v47 = vld [vmem:[%s0 + $0x64] sm:$0xff]
  %v48 = vld [vmem:[%s0 + $0x6c] sm:$0xff]
  %v49 = vld [vmem:[%s0 + $0x74] sm:$0xf]
  %v50 = vld [vmem:[%s0 + $0x78] sm:$0xff]
  %v51 = vld [vmem:[%s0 + $0x80] sm:$0xff]
  %v52 = vld [vmem:[%s0 + $0x88] sm:$0xf]
  %v53 = vld [vmem:[%s0 + $0x8c] sm:$0xff]
  %v54 = vld [vmem:[%s0 + $0x94] sm:$0xff]
  %v55 = vld [vmem:[%s0 + $0x9c] sm:$0xf]
  %v56 = vld [vmem:[%s0 + $0xa0] sm:$0xff]
  %v57 = vld [vmem:[%s0 + $0xa8] sm:$0xff]
  %v58 = vld [vmem:[%s0 + $0xb0] sm:$0xf]
  %v59 = vld [vmem:[%s0 + $0xb4] sm:$0xff]
  %v60 = vld [vmem:[%s0 + $0xbc] sm:$0xff]
  %v61 = vld [vmem:[%s0 + $0xc4] sm:$0xf]
  %v62 = vld [vmem:[%s0 + $0xc8] sm:$0xff]
  %v63 = vld [vmem:[%s0 + $0xd0] sm:$0xff]
  %v64 = vld [vmem:[%s0 + $0xd8] sm:$0xf]
  %v65 = vld [vmem:[%s0 + $0xdc] sm:$0xff]
  %v66 = vld [vmem:[%s0 + $0xe4] sm:$0xff]
  %v67 = vld [vmem:[%s0 + $0xec] sm:$0xf]
  %v68 = vld [vmem:[%s0 + $0xf0] sm:$0xff]
  %v69 = vld [vmem:[%s0 + $0xf8] sm:$0xff]
  %v70 = vld [vmem:[%s0 + $0x100] sm:$0xf]
  %v71 = vld [vmem:[%s0 + $0x104] sm:$0xff]
  %v72 = vld [vmem:[%s0 + $0x10c] sm:$0xff]
  %v73 = vld [vmem:[%s0 + $0x114] sm:$0xf]
  %v74 = vld [vmem:[%s0 + $0x118] sm:$0xff]
  %v75 = vld [vmem:[%s0 + $0x120] sm:$0xff]
  %v76 = vld [vmem:[%s0 + $0x128] sm:$0xf]
  %v77 = vld [vmem:[%s0 + $0x12c] sm:$0xff]
  %v78 = vld [vmem:[%s0 + $0x134] sm:$0xff]
  %v79 = vld [vmem:[%s0 + $0x13c] sm:$0xf]
  %v80 = vld [vmem:[%s0 + $0x140] sm:$0xff]
  %v81 = vld [vmem:[%s0 + $0x148] sm:$0xff]
  %v82 = vld [vmem:[%s0 + $0x150] sm:$0xf]
  %v83 = vld [vmem:[%s0 + $0x154] sm:$0xff]
  %v84 = vld [vmem:[%s0 + $0x15c] sm:$0xff]
  %v85 = vld [vmem:[%s0 + $0x164] sm:$0xf]
  %v86 = vld [vmem:[%s1] sm:$0xf]
  %v87 = vld [vmem:[%s1 + $0x4] sm:$0xf]
  %v88 = vld [vmem:[%s1 + $0x8] sm:$0xf]
  %v89 = vld [vmem:[%s1 + $0xc] sm:$0xf]
  %v90 = vld [vmem:[%s1 + $0x10] sm:$0xf]
  %v91 = vld [vmem:[%s1 + $0x14] sm:$0xf]
  %v92 = vld [vmem:[%s1 + $0x18] sm:$0xf]
  %v93 = vld [vmem:[%s1 + $0x1c] sm:$0xf]
  %v94 = vld [vmem:[%s1 + $0x20] sm:$0xf]
  %v95 = vld [vmem:[%s1 + $0x24] sm:$0xf]
  %v96 = vld [vmem:[%s1 + $0x28] sm:$0xf]
  %v97 = vld [vmem:[%s1 + $0x2c] sm:$0xf]
  %v98 = vld [vmem:[%s1 + $0x30] sm:$0xf]
  %v99 = vld [vmem:[%s1 + $0x34] sm:$0xf]
  %v100 = vld [vmem:[%s1 + $0x38] sm:$0xf]
  %v101 = vld [vmem:[%s1 + $0x3c] sm:$0xf]
  %v102 = vld [vmem:[%s1 + $0x40] sm:$0xf]
  %v103 = vld [vmem:[%s1 + $0x44] sm:$0xf]
  %v104 = vld [vmem:[%s1 + $0x48] sm:$0xf]
  %v105 = vld [vmem:[%s1 + $0x4c] sm:$0xf]
  %v106 = vld [vmem:[%s1 + $0x50] sm:$0xf]
  %v107 = vld [vmem:[%s1 + $0x54] sm:$0xf]
  %v108 = vld [vmem:[%s1 + $0x58] sm:$0xf]
  %v109 = vld [vmem:[%s1 + $0x5c] sm:$0xf]
  %v110 = vld [vmem:[%s1 + $0x60] sm:$0xf]
  %v111 = vld [vmem:[%s1 + $0x64] sm:$0xf]
  %v112 = vld [vmem:[%s1 + $0x68] sm:$0xf]
  %v113 = vld [vmem:[%s1 + $0x6c] sm:$0xf]
  %v114 = vld [vmem:[%s1 + $0x70] sm:$0xf]
  %v115 = vld [vmem:[%s1 + $0x74] sm:$0xf]
  %v116 = vld [vmem:[%s1 + $0x78] sm:$0xf]
  %v117 = vld [vmem:[%s1 + $0x7c] sm:$0xf]
  %v118 = vld [vmem:[%s1 + $0x80] sm:$0xf]
  %v119 = vld [vmem:[%s1 + $0x84] sm:$0xf]
  %v120 = vld [vmem:[%s1 + $0x88] sm:$0xf]
  %v121 = vld [vmem:[%s1 + $0x8c] sm:$0xf]
  %v122 = vld [vmem:[%s1 + $0x90] sm:$0xf]
  %v123 = vld [vmem:[%s1 + $0x94] sm:$0xf]
  %v124 = vld [vmem:[%s1 + $0x98] sm:$0xf]
  %v125 = vld [vmem:[%s1 + $0x9c] sm:$0xf]
  %v126 = vld [vmem:[%s1 + $0xa0] sm:$0xf]
  %v127 = vld [vmem:[%s1 + $0xa4] sm:$0xf]
  %v128 = vld [vmem:[%s1 + $0xa8] sm:$0xf]
  %v129 = vld [vmem:[%s1 + $0xac] sm:$0xf]
  %v130 = vld [vmem:[%s1 + $0xb0] sm:$0xf]
  %v131 = vld [vmem:[%s1 + $0xb4] sm:$0xf]
  %v132 = vld [vmem:[%s1 + $0xb8] sm:$0xf]
  %v133 = vld [vmem:[%s1 + $0xbc] sm:$0xf]
  %v134 = vld [vmem:[%s1 + $0xc0] sm:$0xf]
  %v135 = vld [vmem:[%s1 + $0xc4] sm:$0xf]
  %v136 = vld [vmem:[%s1 + $0xc8] sm:$0xf]
  %v137 = vld [vmem:[%s1 + $0xcc] sm:$0xf]
  %v138 = vld [vmem:[%s1 + $0xd0] sm:$0xf]
  %v139 = vld [vmem:[%s1 + $0xd4] sm:$0xf]
  %v140 = vld [vmem:[%s1 + $0xd8] sm:$0xf]
  %v141 = vld [vmem:[%s1 + $0xdc] sm:$0xf]
  %v142 = vld [vmem:[%s1 + $0xe0] sm:$0xf]
  %v143 = vld [vmem:[%s1 + $0xe4] sm:$0xf]
  %v144 = vld [vmem:[%s1 + $0xe8] sm:$0xf]
  %v145 = vld [vmem:[%s1 + $0xec] sm:$0xf]
  %v146 = vld [vmem:[%s1 + $0xf0] sm:$0xf]
  %v147 = vld [vmem:[%s1 + $0xf4] sm:$0xf]
  %v148 = vld [vmem:[%s1 + $0xf8] sm:$0xf]
  %v149 = vld [vmem:[%s1 + $0xfc] sm:$0xf]
  %v150 = vld [vmem:[%s1 + $0x100] sm:$0xf]
  %v151 = vld [vmem:[%s1 + $0x104] sm:$0xf]
  %v152 = vld [vmem:[%s1 + $0x108] sm:$0xf]
  %v153 = vld [vmem:[%s1 + $0x10c] sm:$0xf]
  %v154 = vld [vmem:[%s1 + $0x110] sm:$0xf]
  %v155 = vld [vmem:[%s1 + $0x114] sm:$0xf]
  %v156 = vld [vmem:[%s1 + $0x118] sm:$0xf]
  %v157 = vld [vmem:[%s1 + $0x11c] sm:$0xf]
  %v158 = vld [vmem:[%s1 + $0x120] sm:$0xf]
  %v159 = vld [vmem:[%s1 + $0x124] sm:$0xf]
  %v160 = vld [vmem:[%s1 + $0x128] sm:$0xf]
  %v161 = vld [vmem:[%s1 + $0x12c] sm:$0xf]
  %v162 = vld [vmem:[%s1 + $0x130] sm:$0xf]
  %v163 = vld [vmem:[%s1 + $0x134] sm:$0xf]
  %v164 = vld [vmem:[%s1 + $0x138] sm:$0xf]
  %v165 = vld [vmem:[%s1 + $0x13c] sm:$0xf]
  %v166 = vld [vmem:[%s2] sm:$0x1]
  %v168 = vperm.slane %v166, 0
  %v224 = vunpack.c.l.b16 %v32
  %v225 = vunpack.c.h.b16 %v32
  %v226 = vunpack.c.l.b16 %v33
  %v227 = vunpack.c.h.b16 %v33
  %v228 = vunpack.c.l.b16 %v34
  %v229 = vunpack.c.l.b16 %v35
  %v230 = vunpack.c.h.b16 %v35
  %v231 = vunpack.c.l.b16 %v36
  %v232 = vunpack.c.h.b16 %v36
  %v233 = vunpack.c.l.b16 %v37
  %v234 = vunpack.c.l.b16 %v38
  %v235 = vunpack.c.h.b16 %v38
  %v236 = vunpack.c.l.b16 %v39
  %v237 = vunpack.c.h.b16 %v39
  %v238 = vunpack.c.l.b16 %v40
  %v239 = vunpack.c.l.b16 %v41
  %v240 = vunpack.c.h.b16 %v41
  %v241 = vunpack.c.l.b16 %v42
  %v242 = vunpack.c.h.b16 %v42
  %v243 = vunpack.c.l.b16 %v43
  %v244 = vunpack.c.l.b16 %v44
  %v245 = vunpack.c.h.b16 %v44
  %v246 = vunpack.c.l.b16 %v45
  %v247 = vunpack.c.h.b16 %v45
  %v248 = vunpack.c.l.b16 %v46
  %v249 = vunpack.c.l.b16 %v47
  %v250 = vunpack.c.h.b16 %v47
  %v251 = vunpack.c.l.b16 %v48
  %v252 = vunpack.c.h.b16 %v48
  %v253 = vunpack.c.l.b16 %v49
  %v254 = vunpack.c.l.b16 %v50
  %v255 = vunpack.c.h.b16 %v50
  %v256 = vunpack.c.l.b16 %v51
  %v257 = vunpack.c.h.b16 %v51
  %v258 = vunpack.c.l.b16 %v52
  %v259 = vunpack.c.l.b16 %v53
  %v260 = vunpack.c.h.b16 %v53
  %v261 = vunpack.c.l.b16 %v54
  %v262 = vunpack.c.h.b16 %v54
  %v263 = vunpack.c.l.b16 %v55
  %v264 = vunpack.c.l.b16 %v56
  %v265 = vunpack.c.h.b16 %v56
  %v266 = vunpack.c.l.b16 %v57
  %v267 = vunpack.c.h.b16 %v57
  %v268 = vunpack.c.l.b16 %v58
  %v269 = vunpack.c.l.b16 %v59
  %v270 = vunpack.c.h.b16 %v59
  %v271 = vunpack.c.l.b16 %v60
  %v272 = vunpack.c.h.b16 %v60
  %v273 = vunpack.c.l.b16 %v61
  %v274 = vunpack.c.l.b16 %v62
  %v275 = vunpack.c.h.b16 %v62
  %v276 = vunpack.c.l.b16 %v63
  %v277 = vunpack.c.h.b16 %v63
  %v278 = vunpack.c.l.b16 %v64
  %v279 = vunpack.c.l.b16 %v65
  %v280 = vunpack.c.h.b16 %v65
  %v281 = vunpack.c.l.b16 %v66
  %v282 = vunpack.c.h.b16 %v66
  %v283 = vunpack.c.l.b16 %v67
  %v284 = vunpack.c.l.b16 %v68
  %v285 = vunpack.c.h.b16 %v68
  %v286 = vunpack.c.l.b16 %v69
  %v287 = vunpack.c.h.b16 %v69
  %v288 = vunpack.c.l.b16 %v70
  %v289 = vunpack.c.l.b16 %v71
  %v290 = vunpack.c.h.b16 %v71
  %v291 = vunpack.c.l.b16 %v72
  %v292 = vunpack.c.h.b16 %v72
  %v293 = vunpack.c.l.b16 %v73
  %v294 = vunpack.c.l.b16 %v74
  %v295 = vunpack.c.h.b16 %v74
  %v296 = vunpack.c.l.b16 %v75
  %v297 = vunpack.c.h.b16 %v75
  %v298 = vunpack.c.l.b16 %v76
  %v299 = vunpack.c.l.b16 %v77
  %v300 = vunpack.c.h.b16 %v77
  %v301 = vunpack.c.l.b16 %v78
  %v302 = vunpack.c.h.b16 %v78
  %v303 = vunpack.c.l.b16 %v79
  %v304 = vunpack.c.l.b16 %v80
  %v305 = vunpack.c.h.b16 %v80
  %v306 = vunpack.c.l.b16 %v81
  %v307 = vunpack.c.h.b16 %v81
  %v308 = vunpack.c.l.b16 %v82
  %v309 = vunpack.c.l.b16 %v83
  %v310 = vunpack.c.h.b16 %v83
  %v311 = vunpack.c.l.b16 %v84
  %v312 = vunpack.c.h.b16 %v84
  %v313 = vunpack.c.l.b16 %v85
  %v314 = vpack.c.b16 %v229, %v224
  %v315 = vpack.c.b16 %v230, %v225
  %v316 = vpack.c.b16 %v231, %v226
  %v317 = vpack.c.b16 %v232, %v227
  %v318 = vpack.c.b16 %v233, %v228
  %v319 = vpack.c.b16 %v239, %v234
  %v320 = vpack.c.b16 %v240, %v235
  %v321 = vpack.c.b16 %v241, %v236
  %v322 = vpack.c.b16 %v242, %v237
  %v323 = vpack.c.b16 %v243, %v238
  %v324 = vpack.c.b16 %v249, %v244
  %v325 = vpack.c.b16 %v250, %v245
  %v326 = vpack.c.b16 %v251, %v246
  %v327 = vpack.c.b16 %v252, %v247
  %v328 = vpack.c.b16 %v253, %v248
  %v329 = vpack.c.b16 %v259, %v254
  %v330 = vpack.c.b16 %v260, %v255
  %v331 = vpack.c.b16 %v261, %v256
  %v332 = vpack.c.b16 %v262, %v257
  %v333 = vpack.c.b16 %v263, %v258
  %v334 = vpack.c.b16 %v269, %v264
  %v335 = vpack.c.b16 %v270, %v265
  %v336 = vpack.c.b16 %v271, %v266
  %v337 = vpack.c.b16 %v272, %v267
  %v338 = vpack.c.b16 %v273, %v268
  %v339 = vpack.c.b16 %v279, %v274
  %v340 = vpack.c.b16 %v280, %v275
  %v341 = vpack.c.b16 %v281, %v276
  %v342 = vpack.c.b16 %v282, %v277
  %v343 = vpack.c.b16 %v283, %v278
  %v344 = vpack.c.b16 %v289, %v284
  %v345 = vpack.c.b16 %v290, %v285
  %v346 = vpack.c.b16 %v291, %v286
  %v347 = vpack.c.b16 %v292, %v287
  %v348 = vpack.c.b16 %v293, %v288
  %v349 = vpack.c.b16 %v299, %v294
  %v350 = vpack.c.b16 %v300, %v295
  %v351 = vpack.c.b16 %v301, %v296
  %v352 = vpack.c.b16 %v302, %v297
  %v353 = vpack.c.b16 %v303, %v298
  %v354 = vpack.c.b16 %v309, %v304
  %v355 = vpack.c.b16 %v310, %v305
  %v356 = vpack.c.b16 %v311, %v306
  %v357 = vpack.c.b16 %v312, %v307
  %v358 = vpack.c.b16 %v313, %v308
  %v484 = vunpack.c.l.b16 %v86
  %v485 = vunpack.c.l.b16 %v87
  %v486 = vunpack.c.l.b16 %v88
  %v487 = vunpack.c.l.b16 %v89
  %v488 = vunpack.c.l.b16 %v90
  %v489 = vunpack.c.l.b16 %v91
  %v490 = vunpack.c.l.b16 %v92
  %v491 = vunpack.c.l.b16 %v93
  %v492 = vunpack.c.l.b16 %v94
  %v493 = vunpack.c.l.b16 %v95
  %v494 = vunpack.c.l.b16 %v96
  %v495 = vunpack.c.l.b16 %v97
  %v496 = vunpack.c.l.b16 %v98
  %v497 = vunpack.c.l.b16 %v99
  %v498 = vunpack.c.l.b16 %v100
  %v499 = vunpack.c.l.b16 %v101
  %v500 = vunpack.c.l.b16 %v102
  %v501 = vunpack.c.l.b16 %v103
  %v502 = vunpack.c.l.b16 %v104
  %v503 = vunpack.c.l.b16 %v105
  %v504 = vunpack.c.l.b16 %v106
  %v505 = vunpack.c.l.b16 %v107
  %v506 = vunpack.c.l.b16 %v108
  %v507 = vunpack.c.l.b16 %v109
  %v508 = vunpack.c.l.b16 %v110
  %v509 = vunpack.c.l.b16 %v111
  %v510 = vunpack.c.l.b16 %v112
  %v511 = vunpack.c.l.b16 %v113
  %v512 = vunpack.c.l.b16 %v114
  %v513 = vunpack.c.l.b16 %v115
  %v514 = vunpack.c.l.b16 %v116
  %v515 = vunpack.c.l.b16 %v117
  %v516 = vunpack.c.l.b16 %v118
  %v517 = vunpack.c.l.b16 %v119
  %v518 = vunpack.c.l.b16 %v120
  %v519 = vunpack.c.l.b16 %v121
  %v520 = vunpack.c.l.b16 %v122
  %v521 = vunpack.c.l.b16 %v123
  %v522 = vunpack.c.l.b16 %v124
  %v523 = vunpack.c.l.b16 %v125
  %v524 = vunpack.c.l.b16 %v126
  %v525 = vunpack.c.l.b16 %v127
  %v526 = vunpack.c.l.b16 %v128
  %v527 = vunpack.c.l.b16 %v129
  %v528 = vunpack.c.l.b16 %v130
  %v529 = vunpack.c.l.b16 %v131
  %v530 = vunpack.c.l.b16 %v132
  %v531 = vunpack.c.l.b16 %v133
  %v532 = vunpack.c.l.b16 %v134
  %v533 = vunpack.c.l.b16 %v135
  %v534 = vunpack.c.l.b16 %v136
  %v535 = vunpack.c.l.b16 %v137
  %v536 = vunpack.c.l.b16 %v138
  %v537 = vunpack.c.l.b16 %v139
  %v538 = vunpack.c.l.b16 %v140
  %v539 = vunpack.c.l.b16 %v141
  %v540 = vunpack.c.l.b16 %v142
  %v541 = vunpack.c.l.b16 %v143
  %v542 = vunpack.c.l.b16 %v144
  %v543 = vunpack.c.l.b16 %v145
  %v544 = vunpack.c.l.b16 %v146
  %v545 = vunpack.c.l.b16 %v147
  %v546 = vunpack.c.l.b16 %v148
  %v547 = vunpack.c.l.b16 %v149
  %v548 = vunpack.c.l.b16 %v150
  %v549 = vunpack.c.l.b16 %v151
  %v550 = vunpack.c.l.b16 %v152
  %v551 = vunpack.c.l.b16 %v153
  %v552 = vunpack.c.l.b16 %v154
  %v553 = vunpack.c.l.b16 %v155
  %v554 = vunpack.c.l.b16 %v156
  %v555 = vunpack.c.l.b16 %v157
  %v556 = vunpack.c.l.b16 %v158
  %v557 = vunpack.c.l.b16 %v159
  %v558 = vunpack.c.l.b16 %v160
  %v559 = vunpack.c.l.b16 %v161
  %v560 = vunpack.c.l.b16 %v162
  %v561 = vunpack.c.l.b16 %v163
  %v562 = vunpack.c.l.b16 %v164
  %v563 = vunpack.c.l.b16 %v165
  %v564 = vpack.c.b16 %v485, %v484
  %v565 = vpack.c.b16 %v487, %v486
  %v566 = vpack.c.b16 %v489, %v488
  %v567 = vpack.c.b16 %v491, %v490
  %v568 = vpack.c.b16 %v493, %v492
  %v569 = vpack.c.b16 %v495, %v494
  %v570 = vpack.c.b16 %v497, %v496
  %v571 = vpack.c.b16 %v499, %v498
  %v572 = vpack.c.b16 %v501, %v500
  %v573 = vpack.c.b16 %v503, %v502
  %v574 = vpack.c.b16 %v505, %v504
  %v575 = vpack.c.b16 %v507, %v506
  %v576 = vpack.c.b16 %v509, %v508
  %v577 = vpack.c.b16 %v511, %v510
  %v578 = vpack.c.b16 %v513, %v512
  %v579 = vpack.c.b16 %v515, %v514
  %v580 = vpack.c.b16 %v517, %v516
  %v581 = vpack.c.b16 %v519, %v518
  %v582 = vpack.c.b16 %v521, %v520
  %v583 = vpack.c.b16 %v523, %v522
  %v584 = vpack.c.b16 %v525, %v524
  %v585 = vpack.c.b16 %v527, %v526
  %v586 = vpack.c.b16 %v529, %v528
  %v587 = vpack.c.b16 %v531, %v530
  %v588 = vpack.c.b16 %v533, %v532
  %v589 = vpack.c.b16 %v535, %v534
  %v590 = vpack.c.b16 %v537, %v536
  %v591 = vpack.c.b16 %v539, %v538
  %v592 = vpack.c.b16 %v541, %v540
  %v593 = vpack.c.b16 %v543, %v542
  %v594 = vpack.c.b16 %v545, %v544
  %v595 = vpack.c.b16 %v547, %v546
  %v596 = vpack.c.b16 %v549, %v548
  %v597 = vpack.c.b16 %v551, %v550
  %v598 = vpack.c.b16 %v553, %v552
  %v599 = vpack.c.b16 %v555, %v554
  %v600 = vpack.c.b16 %v557, %v556
  %v601 = vpack.c.b16 %v559, %v558
  %v602 = vpack.c.b16 %v561, %v560
  %v603 = vpack.c.b16 %v563, %v562
  %644 = vmatpush.bf16.msra.mxu0 %v571
  %645 = vmatpush.bf16.msra.mxu0 %v570
  %646 = vmatpush.bf16.msra.mxu0 %v569
  %647 = vmatpush.bf16.msra.mxu0 %v568
  %648 = vmatpush.bf16.msra.mxu0 %v567
  %649 = vmatpush.bf16.msra.mxu0 %v566
  %650 = vmatpush.bf16.msra.mxu0 %v565
  %651 = vmatpush.bf16.msra.mxu0 %v564
  %652 = vmatmul.bf16.gmra.mxu0 %v314
  %v653 = vpop.f32.mrf.mxu0
  %v654 = vadd.f32 %v168, %v653
  %v655 = vpop.f32.mrf.mxu0
  %v656 = vadd.f32 %v168, %v655
  %657 = vmatmul.bf16.gmra.mxu0 %v319
  %v658 = vpop.f32.mrf.mxu0
  %v659 = vadd.f32 %v168, %v658
  %v660 = vpop.f32.mrf.mxu0
  %v661 = vadd.f32 %v168, %v660
  %662 = vmatmul.bf16.gmra.mxu0 %v324
  %v663 = vpop.f32.mrf.mxu0
  %v664 = vpop.f32.mrf.mxu0
  %v665 = vadd.f32 %v168, %v664
  %666 = vmatmul.bf16.gmra.mxu0 %v329
  %v667 = vpop.f32.mrf.mxu0
  %v668 = vadd.f32 %v168, %v667
  %v669 = vpop.f32.mrf.mxu0
  %v670 = vadd.f32 %v168, %v669
  %671 = vmatmul.bf16.gmra.mxu0 %v334
  %v672 = vpop.f32.mrf.mxu0
  %v673 = vadd.f32 %v168, %v672
  %v674 = vpop.f32.mrf.mxu0
  %v675 = vadd.f32 %v168, %v674
  %676 = vmatmul.bf16.gmra.mxu0 %v339
  %v677 = vpop.f32.mrf.mxu0
  %v678 = vadd.f32 %v168, %v677
  %v679 = vpop.f32.mrf.mxu0
  %v680 = vadd.f32 %v168, %v679
  %681 = vmatmul.bf16.gmra.mxu0 %v344
  %v682 = vpop.f32.mrf.mxu0
  %v683 = vadd.f32 %v168, %v682
  %v684 = vpop.f32.mrf.mxu0
  %685 = vmatmul.bf16.gmra.mxu0 %v349
  %v686 = vpop.f32.mrf.mxu0
  %v687 = vadd.f32 %v168, %v686
  %v688 = vpop.f32.mrf.mxu0
  %v689 = vadd.f32 %v168, %v688
  %690 = vmatmul.bf16.gmra.mxu0 %v354
  %v691 = vpop.f32.mrf.mxu0
  %v692 = vadd.f32 %v168, %v691
  %v693 = vpop.f32.mrf.mxu0
  %v694 = vadd.f32 %v168, %v693
  %695 = vdwg.mxu0
  %696 = vmatpush.bf16.msra.mxu0 %v579
  %697 = vmatpush.bf16.msra.mxu0 %v578
  %698 = vmatpush.bf16.msra.mxu0 %v577
  %699 = vmatpush.bf16.msra.mxu0 %v576
  %700 = vmatpush.bf16.msra.mxu0 %v575
  %701 = vmatpush.bf16.msra.mxu0 %v574
  %702 = vmatpush.bf16.msra.mxu0 %v573
  %703 = vmatpush.bf16.msra.mxu0 %v572
  %704 = vmatmul.bf16.gmra.mxu0 %v315
  %v705 = vpop.f32.mrf.mxu0
  %v706 = vadd.f32 %v654, %v705
  %v707 = vpop.f32.mrf.mxu0
  %v708 = vadd.f32 %v656, %v707
  %709 = vmatmul.bf16.gmra.mxu0 %v320
  %v710 = vpop.f32.mrf.mxu0
  %v711 = vadd.f32 %v659, %v710
  %v712 = vpop.f32.mrf.mxu0
  %v713 = vadd.f32 %v661, %v712
  %714 = vmatmul.bf16.gmra.mxu0 %v325
  %v715 = vpop.f32.mrf.mxu0
  %v716 = vpop.f32.mrf.mxu0
  %v717 = vadd.f32 %v665, %v716
  %718 = vmatmul.bf16.gmra.mxu0 %v330
  %v719 = vpop.f32.mrf.mxu0
  %v720 = vadd.f32 %v668, %v719
  %v721 = vpop.f32.mrf.mxu0
  %v722 = vadd.f32 %v670, %v721
  %723 = vmatmul.bf16.gmra.mxu0 %v335
  %v724 = vpop.f32.mrf.mxu0
  %v725 = vadd.f32 %v673, %v724
  %v726 = vpop.f32.mrf.mxu0
  %v727 = vadd.f32 %v675, %v726
  %728 = vmatmul.bf16.gmra.mxu0 %v340
  %v729 = vpop.f32.mrf.mxu0
  %v730 = vadd.f32 %v678, %v729
  %v731 = vpop.f32.mrf.mxu0
  %v732 = vadd.f32 %v680, %v731
  %733 = vmatmul.bf16.gmra.mxu0 %v345
  %v734 = vpop.f32.mrf.mxu0
  %v735 = vadd.f32 %v683, %v734
  %v736 = vpop.f32.mrf.mxu0
  %737 = vmatmul.bf16.gmra.mxu0 %v350
  %v738 = vpop.f32.mrf.mxu0
  %v739 = vadd.f32 %v687, %v738
  %v740 = vpop.f32.mrf.mxu0
  %v741 = vadd.f32 %v689, %v740
  %742 = vmatmul.bf16.gmra.mxu0 %v355
  %v743 = vpop.f32.mrf.mxu0
  %v744 = vadd.f32 %v692, %v743
  %v745 = vpop.f32.mrf.mxu0
  %v746 = vadd.f32 %v694, %v745
  %747 = vdwg.mxu0
  %748 = vmatpush.bf16.msra.mxu0 %v587
  %749 = vmatpush.bf16.msra.mxu0 %v586
  %750 = vmatpush.bf16.msra.mxu0 %v585
  %751 = vmatpush.bf16.msra.mxu0 %v584
  %752 = vmatpush.bf16.msra.mxu0 %v583
  %753 = vmatpush.bf16.msra.mxu0 %v582
  %754 = vmatpush.bf16.msra.mxu0 %v581
  %755 = vmatpush.bf16.msra.mxu0 %v580
  %756 = vmatmul.bf16.gmra.mxu0 %v316
  %v757 = vpop.f32.mrf.mxu0
  %v758 = vadd.f32 %v706, %v757
  %v759 = vpop.f32.mrf.mxu0
  %v760 = vadd.f32 %v708, %v759
  %761 = vmatmul.bf16.gmra.mxu0 %v321
  %v762 = vpop.f32.mrf.mxu0
  %v763 = vadd.f32 %v711, %v762
  %v764 = vpop.f32.mrf.mxu0
  %v765 = vadd.f32 %v713, %v764
  %766 = vmatmul.bf16.gmra.mxu0 %v326
  %v767 = vpop.f32.mrf.mxu0
  %v768 = vpop.f32.mrf.mxu0
  %v769 = vadd.f32 %v717, %v768
  %770 = vmatmul.bf16.gmra.mxu0 %v331
  %v771 = vpop.f32.mrf.mxu0
  %v772 = vadd.f32 %v720, %v771
  %v773 = vpop.f32.mrf.mxu0
  %v774 = vadd.f32 %v722, %v773
  %775 = vmatmul.bf16.gmra.mxu0 %v336
  %v776 = vpop.f32.mrf.mxu0
  %v777 = vadd.f32 %v725, %v776
  %v778 = vpop.f32.mrf.mxu0
  %v779 = vadd.f32 %v727, %v778
  %780 = vmatmul.bf16.gmra.mxu0 %v341
  %v781 = vpop.f32.mrf.mxu0
  %v782 = vadd.f32 %v730, %v781
  %v783 = vpop.f32.mrf.mxu0
  %v784 = vadd.f32 %v732, %v783
  %785 = vmatmul.bf16.gmra.mxu0 %v346
  %v786 = vpop.f32.mrf.mxu0
  %v787 = vadd.f32 %v735, %v786
  %v788 = vpop.f32.mrf.mxu0
  %789 = vmatmul.bf16.gmra.mxu0 %v351
  %v790 = vpop.f32.mrf.mxu0
  %v791 = vadd.f32 %v739, %v790
  %v792 = vpop.f32.mrf.mxu0
  %v793 = vadd.f32 %v741, %v792
  %794 = vmatmul.bf16.gmra.mxu0 %v356
  %v795 = vpop.f32.mrf.mxu0
  %v796 = vadd.f32 %v744, %v795
  %v797 = vpop.f32.mrf.mxu0
  %v798 = vadd.f32 %v746, %v797
  %799 = vdwg.mxu0
  %800 = vmatpush.bf16.msra.mxu0 %v595
  %801 = vmatpush.bf16.msra.mxu0 %v594
  %802 = vmatpush.bf16.msra.mxu0 %v593
  %803 = vmatpush.bf16.msra.mxu0 %v592
  %804 = vmatpush.bf16.msra.mxu0 %v591
  %805 = vmatpush.bf16.msra.mxu0 %v590
  %806 = vmatpush.bf16.msra.mxu0 %v589
  %807 = vmatpush.bf16.msra.mxu0 %v588
  %808 = vmatmul.bf16.gmra.mxu0 %v317
  %v809 = vpop.f32.mrf.mxu0
  %v810 = vadd.f32 %v758, %v809
  %v811 = vpop.f32.mrf.mxu0
  %v812 = vadd.f32 %v760, %v811
  %813 = vmatmul.bf16.gmra.mxu0 %v322
  %v814 = vpop.f32.mrf.mxu0
  %v815 = vadd.f32 %v763, %v814
  %v816 = vpop.f32.mrf.mxu0
  %v817 = vadd.f32 %v765, %v816
  %818 = vmatmul.bf16.gmra.mxu0 %v327
  %v819 = vpop.f32.mrf.mxu0
  %v820 = vpop.f32.mrf.mxu0
  %v821 = vadd.f32 %v769, %v820
  %822 = vmatmul.bf16.gmra.mxu0 %v332
  %v823 = vpop.f32.mrf.mxu0
  %v824 = vadd.f32 %v772, %v823
  %v825 = vpop.f32.mrf.mxu0
  %v826 = vadd.f32 %v774, %v825
  %827 = vmatmul.bf16.gmra.mxu0 %v337
  %v828 = vpop.f32.mrf.mxu0
  %v829 = vadd.f32 %v777, %v828
  %v830 = vpop.f32.mrf.mxu0
  %v831 = vadd.f32 %v779, %v830
  %832 = vmatmul.bf16.gmra.mxu0 %v342
  %v833 = vpop.f32.mrf.mxu0
  %v834 = vadd.f32 %v782, %v833
  %v835 = vpop.f32.mrf.mxu0
  %v836 = vadd.f32 %v784, %v835
  %837 = vmatmul.bf16.gmra.mxu0 %v347
  %v838 = vpop.f32.mrf.mxu0
  %v839 = vadd.f32 %v787, %v838
  %v840 = vpop.f32.mrf.mxu0
  %841 = vmatmul.bf16.gmra.mxu0 %v352
  %v842 = vpop.f32.mrf.mxu0
  %v843 = vadd.f32 %v791, %v842
  %v844 = vpop.f32.mrf.mxu0
  %v845 = vadd.f32 %v793, %v844
  %846 = vmatmul.bf16.gmra.mxu0 %v357
  %v847 = vpop.f32.mrf.mxu0
  %v848 = vadd.f32 %v796, %v847
  %v849 = vpop.f32.mrf.mxu0
  %v850 = vadd.f32 %v798, %v849
  %851 = vdwg.mxu0
  %852 = vmatpush.bf16.msra.mxu0 %v603
  %853 = vmatpush.bf16.msra.mxu0 %v602
  %854 = vmatpush.bf16.msra.mxu0 %v601
  %855 = vmatpush.bf16.msra.mxu0 %v600
  %856 = vmatpush.bf16.msra.mxu0 %v599
  %857 = vmatpush.bf16.msra.mxu0 %v598
  %858 = vmatpush.bf16.msra.mxu0 %v597
  %859 = vmatpush.bf16.msra.mxu0 %v596
  %860 = vmatmul.bf16.gmra.mxu0 %v318
  %v861 = vpop.f32.mrf.mxu0
  %v862 = vadd.f32 %v810, %v861
  %v863 = vpop.f32.mrf.mxu0
  %v864 = vadd.f32 %v812, %v863
  %865 = vmatmul.bf16.gmra.mxu0 %v323
  %v866 = vpop.f32.mrf.mxu0
  %v867 = vadd.f32 %v815, %v866
  %v868 = vpop.f32.mrf.mxu0
  %v869 = vadd.f32 %v817, %v868
  %870 = vmatmul.bf16.gmra.mxu0 %v328
  %v871 = vpop.f32.mrf.mxu0
  %v872 = vpop.f32.mrf.mxu0
  %v873 = vadd.f32 %v821, %v872
  %874 = vmatmul.bf16.gmra.mxu0 %v333
  %v875 = vpop.f32.mrf.mxu0
  %v876 = vadd.f32 %v824, %v875
  %v877 = vpop.f32.mrf.mxu0
  %v878 = vadd.f32 %v826, %v877
  %879 = vmatmul.bf16.gmra.mxu0 %v338
  %v880 = vpop.f32.mrf.mxu0
  %v881 = vadd.f32 %v829, %v880
  %v882 = vpop.f32.mrf.mxu0
  %v883 = vadd.f32 %v831, %v882
  %884 = vmatmul.bf16.gmra.mxu0 %v343
  %v885 = vpop.f32.mrf.mxu0
  %v886 = vadd.f32 %v834, %v885
  %v887 = vpop.f32.mrf.mxu0
  %v888 = vadd.f32 %v836, %v887
  %889 = vmatmul.bf16.gmra.mxu0 %v348
  %v890 = vpop.f32.mrf.mxu0
  %v891 = vadd.f32 %v839, %v890
  %v892 = vpop.f32.mrf.mxu0
  %893 = vmatmul.bf16.gmra.mxu0 %v353
  %v894 = vpop.f32.mrf.mxu0
  %v895 = vadd.f32 %v843, %v894
  %v896 = vpop.f32.mrf.mxu0
  %v897 = vadd.f32 %v845, %v896
  %898 = vmatmul.bf16.gmra.mxu0 %v358
  %v899 = vpop.f32.mrf.mxu0
  %v900 = vadd.f32 %v848, %v899
  %v901 = vpop.f32.mrf.mxu0
  %v902 = vadd.f32 %v850, %v901
  %903 = vdwg.mxu0
  %v904 = vmax.f32 %v862, 0.0
  %v905 = vmax.f32 %v864, 0.0
  %v906 = vmax.f32 %v867, 0.0
  %v907 = vmax.f32 %v869, 0.0
  %v908 = vmax.f32 %v873, 0.0
  %v909 = vmax.f32 %v876, 0.0
  %v910 = vmax.f32 %v878, 0.0
  %v911 = vmax.f32 %v881, 0.0
  %v912 = vmax.f32 %v883, 0.0
  %v913 = vmax.f32 %v886, 0.0
  %v914 = vmax.f32 %v888, 0.0
  %v915 = vmax.f32 %v891, 0.0
  %v916 = vmax.f32 %v895, 0.0
  %v917 = vmax.f32 %v897, 0.0
  %v918 = vmax.f32 %v900, 0.0
  %v919 = vmax.f32 %v902, 0.0
  %v920 = vmax.f32 %v904, %v912
  %v921 = vmax.f32 %v905, %v913
  %v922 = vmax.f32 %v906, %v914
  %v923 = vmax.f32 %v907, %v915
  %v924 = vmax.f32 %v908, %v916
  %v925 = vmax.f32 %v909, %v917
  %v926 = vmax.f32 %v910, %v918
  %v927 = vmax.f32 %v911, %v919
  %v928 = vpack.c.bf16 %v920, %v920
  %v929 = vpack.c.bf16 %v921, %v921
  %v930 = vpack.c.bf16 %v922, %v922
  %v931 = vpack.c.bf16 %v923, %v923
  %v932 = vpack.c.bf16 %v924, %v924
  %v933 = vpack.c.bf16 %v925, %v925
  %v934 = vpack.c.bf16 %v926, %v926
  %v935 = vpack.c.bf16 %v927, %v927
  %v939 = vunpack.c.l.b16 %v928
  %v940 = vunpack.c.l.b16 %v929
  %v941 = vunpack.c.l.b16 %v930
  %v942 = vpack.c.b16 %v940, %v939
  %v943 = vpack.c.b16 %v941, %v941
  %v948 = vunpack.c.l.b16 %v932
  %v949 = vunpack.c.l.b16 %v933
  %v950 = vunpack.c.l.b16 %v934
  %v951 = vpack.c.b16 %v949, %v948
  %v952 = vpack.c.b16 %v950, %v950
  %v955 = vunpack.c.l.b16 %v931
  %v956 = vpack.c.b16 %v941, %v940
  %v957 = vpack.c.b16 %v955, %v955
  %v960 = vunpack.c.l.b16 %v935
  %v961 = vpack.c.b16 %v950, %v949
  %v962 = vpack.c.b16 %v960, %v960
  %vm963 = vcmask 1043456
  %v964 = vrot.slane %v951, 4
  %v965 = vrot.slane %v956, 4
  %v966 = vrot.slane %v961, 4
  %v967 = vrot.slane %v952, 4
  %v968 = vsel %vm963, %v964, %v967
  %v969 = vrot.slane %v957, 4
  %v970 = vsel %vm963, %v965, %v969
  %v971 = vrot.slane %v962, 4
  %v972 = vsel %vm963, %v966, %v971
  %vm976 = vcmask 1043456
  %v979 = vsel %vm976, %v943, %v964
  %v983 = vsel %vm976, %v952, %v965
  %v987 = vsel %vm976, %v957, %v966
  %v989 = vld [vmem:[%s3] sm:$0xf]
  %v990 = vld [vmem:[%s3 + $0x4] sm:$0xf]
  %v991 = vld [vmem:[%s3 + $0x8] sm:$0xf]
  %v992 = vld [vmem:[%s3 + $0xc] sm:$0xf]
  %v993 = vld [vmem:[%s3 + $0x10] sm:$0xf]
  %v994 = vld [vmem:[%s3 + $0x14] sm:$0xf]
  %v995 = vld [vmem:[%s3 + $0x18] sm:$0xf]
  %v996 = vld [vmem:[%s3 + $0x1c] sm:$0xf]
  %v997 = vld [vmem:[%s3 + $0x20] sm:$0xf]
  %v998 = vld [vmem:[%s3 + $0x24] sm:$0xf]
  %v999 = vld [vmem:[%s3 + $0x28] sm:$0xf]
  %v1000 = vld [vmem:[%s3 + $0x2c] sm:$0xf]
  %v1001 = vld [vmem:[%s3 + $0x30] sm:$0xf]
  %v1002 = vld [vmem:[%s3 + $0x34] sm:$0xf]
  %v1003 = vld [vmem:[%s3 + $0x38] sm:$0xf]
  %v1004 = vld [vmem:[%s3 + $0x3c] sm:$0xf]
  %v1005 = vld [vmem:[%s3 + $0x40] sm:$0xf]
  %v1006 = vld [vmem:[%s3 + $0x44] sm:$0xf]
  %v1007 = vld [vmem:[%s3 + $0x48] sm:$0xf]
  %v1008 = vld [vmem:[%s3 + $0x4c] sm:$0xf]
  %v1009 = vld [vmem:[%s3 + $0x50] sm:$0xf]
  %v1010 = vld [vmem:[%s3 + $0x54] sm:$0xf]
  %v1011 = vld [vmem:[%s3 + $0x58] sm:$0xf]
  %v1012 = vld [vmem:[%s3 + $0x5c] sm:$0xf]
  %v1013 = vld [vmem:[%s3 + $0x60] sm:$0xf]
  %v1014 = vld [vmem:[%s3 + $0x64] sm:$0xf]
  %v1015 = vld [vmem:[%s3 + $0x68] sm:$0xf]
  %v1016 = vld [vmem:[%s3 + $0x6c] sm:$0xf]
  %v1017 = vld [vmem:[%s3 + $0x70] sm:$0xf]
  %v1018 = vld [vmem:[%s3 + $0x74] sm:$0xf]
  %v1019 = vld [vmem:[%s3 + $0x78] sm:$0xf]
  %v1020 = vld [vmem:[%s3 + $0x7c] sm:$0xf]
  %v1021 = vld [vmem:[%s3 + $0x80] sm:$0xf]
  %v1022 = vld [vmem:[%s3 + $0x84] sm:$0xf]
  %v1023 = vld [vmem:[%s3 + $0x88] sm:$0xf]
  %v1024 = vld [vmem:[%s3 + $0x8c] sm:$0xf]
  %v1025 = vld [vmem:[%s3 + $0x90] sm:$0xf]
  %v1026 = vld [vmem:[%s3 + $0x94] sm:$0xf]
  %v1027 = vld [vmem:[%s3 + $0x98] sm:$0xf]
  %v1028 = vld [vmem:[%s3 + $0x9c] sm:$0xf]
  %v1029 = vld [vmem:[%s3 + $0xa0] sm:$0xf]
  %v1030 = vld [vmem:[%s3 + $0xa4] sm:$0xf]
  %v1031 = vld [vmem:[%s3 + $0xa8] sm:$0xf]
  %v1032 = vld [vmem:[%s3 + $0xac] sm:$0xf]
  %v1033 = vld [vmem:[%s3 + $0xb0] sm:$0xf]
  %v1034 = vld [vmem:[%s3 + $0xb4] sm:$0xf]
  %v1035 = vld [vmem:[%s3 + $0xb8] sm:$0xf]
  %v1036 = vld [vmem:[%s3 + $0xbc] sm:$0xf]
  %v1085 = vunpack.c.l.b16 %v989
  %v1086 = vunpack.c.l.b16 %v990
  %v1087 = vunpack.c.l.b16 %v991
  %v1088 = vunpack.c.l.b16 %v992
  %v1089 = vunpack.c.l.b16 %v993
  %v1090 = vunpack.c.l.b16 %v994
  %v1091 = vunpack.c.l.b16 %v995
  %v1092 = vunpack.c.l.b16 %v996
  %v1093 = vunpack.c.l.b16 %v997
  %v1094 = vunpack.c.l.b16 %v998
  %v1095 = vunpack.c.l.b16 %v999
  %v1096 = vunpack.c.l.b16 %v1000
  %v1097 = vunpack.c.l.b16 %v1001
  %v1098 = vunpack.c.l.b16 %v1002
  %v1099 = vunpack.c.l.b16 %v1003
  %v1100 = vunpack.c.l.b16 %v1004
  %v1101 = vunpack.c.l.b16 %v1005
  %v1102 = vunpack.c.l.b16 %v1006
  %v1103 = vunpack.c.l.b16 %v1007
  %v1104 = vunpack.c.l.b16 %v1008
  %v1105 = vunpack.c.l.b16 %v1009
  %v1106 = vunpack.c.l.b16 %v1010
  %v1107 = vunpack.c.l.b16 %v1011
  %v1108 = vunpack.c.l.b16 %v1012
  %v1109 = vunpack.c.l.b16 %v1013
  %v1110 = vunpack.c.l.b16 %v1014
  %v1111 = vunpack.c.l.b16 %v1015
  %v1112 = vunpack.c.l.b16 %v1016
  %v1113 = vunpack.c.l.b16 %v1017
  %v1114 = vunpack.c.l.b16 %v1018
  %v1115 = vunpack.c.l.b16 %v1019
  %v1116 = vunpack.c.l.b16 %v1020
  %v1117 = vunpack.c.l.b16 %v1021
  %v1118 = vunpack.c.l.b16 %v1022
  %v1119 = vunpack.c.l.b16 %v1023
  %v1120 = vunpack.c.l.b16 %v1024
  %v1121 = vunpack.c.l.b16 %v1025
  %v1122 = vunpack.c.l.b16 %v1026
  %v1123 = vunpack.c.l.b16 %v1027
  %v1124 = vunpack.c.l.b16 %v1028
  %v1125 = vunpack.c.l.b16 %v1029
  %v1126 = vunpack.c.l.b16 %v1030
  %v1127 = vunpack.c.l.b16 %v1031
  %v1128 = vunpack.c.l.b16 %v1032
  %v1129 = vunpack.c.l.b16 %v1033
  %v1130 = vunpack.c.l.b16 %v1034
  %v1131 = vunpack.c.l.b16 %v1035
  %v1132 = vunpack.c.l.b16 %v1036
  %v1133 = vpack.c.b16 %v1086, %v1085
  %v1134 = vpack.c.b16 %v1088, %v1087
  %v1135 = vpack.c.b16 %v1090, %v1089
  %v1136 = vpack.c.b16 %v1092, %v1091
  %v1137 = vpack.c.b16 %v1094, %v1093
  %v1138 = vpack.c.b16 %v1096, %v1095
  %v1139 = vpack.c.b16 %v1098, %v1097
  %v1140 = vpack.c.b16 %v1100, %v1099
  %v1141 = vpack.c.b16 %v1102, %v1101
  %v1142 = vpack.c.b16 %v1104, %v1103
  %v1143 = vpack.c.b16 %v1106, %v1105
  %v1144 = vpack.c.b16 %v1108, %v1107
  %v1145 = vpack.c.b16 %v1110, %v1109
  %v1146 = vpack.c.b16 %v1112, %v1111
  %v1147 = vpack.c.b16 %v1114, %v1113
  %v1148 = vpack.c.b16 %v1116, %v1115
  %v1149 = vpack.c.b16 %v1118, %v1117
  %v1150 = vpack.c.b16 %v1120, %v1119
  %v1151 = vpack.c.b16 %v1122, %v1121
  %v1152 = vpack.c.b16 %v1124, %v1123
  %v1153 = vpack.c.b16 %v1126, %v1125
  %v1154 = vpack.c.b16 %v1128, %v1127
  %v1155 = vpack.c.b16 %v1130, %v1129
  %v1156 = vpack.c.b16 %v1132, %v1131
  %1181 = vmatpush.bf16.msra.mxu0 %v1140
  %1182 = vmatpush.bf16.msra.mxu0 %v1139
  %1183 = vmatpush.bf16.msra.mxu0 %v1138
  %1184 = vmatpush.bf16.msra.mxu0 %v1137
  %1185 = vmatpush.bf16.msra.mxu0 %v1136
  %1186 = vmatpush.bf16.msra.mxu0 %v1135
  %1187 = vmatpush.bf16.msra.mxu0 %v1134
  %1188 = vmatpush.bf16.msra.mxu0 %v1133
  %1189 = vmatmul.bf16.gmra.mxu0 %v942
  %v1190 = vpop.f32.mrf.mxu0
  %v1191 = vadd.f32 0.0, %v1190
  %v1192 = vpop.f32.mrf.mxu0
  %v1193 = vadd.f32 0.0, %v1192
  %1194 = vmatmul.bf16.gmra.mxu0 %v979
  %v1195 = vpop.f32.mrf.mxu0
  %v1196 = vadd.f32 0.0, %v1195
  %v1197 = vpop.f32.mrf.mxu0
  %v1198 = vadd.f32 0.0, %v1197
  %1199 = vmatmul.bf16.gmra.mxu0 %v968
  %v1200 = vpop.f32.mrf.mxu0
  %v1201 = vadd.f32 0.0, %v1200
  %v1202 = vpop.f32.mrf.mxu0
  %v1203 = vadd.f32 0.0, %v1202
  %1204 = vdwg.mxu0
  %1205 = vmatpush.bf16.msra.mxu0 %v1148
  %1206 = vmatpush.bf16.msra.mxu0 %v1147
  %1207 = vmatpush.bf16.msra.mxu0 %v1146
  %1208 = vmatpush.bf16.msra.mxu0 %v1145
  %1209 = vmatpush.bf16.msra.mxu0 %v1144
  %1210 = vmatpush.bf16.msra.mxu0 %v1143
  %1211 = vmatpush.bf16.msra.mxu0 %v1142
  %1212 = vmatpush.bf16.msra.mxu0 %v1141
  %1213 = vmatmul.bf16.gmra.mxu0 %v951
  %v1214 = vpop.f32.mrf.mxu0
  %v1215 = vadd.f32 %v1191, %v1214
  %v1216 = vpop.f32.mrf.mxu0
  %v1217 = vadd.f32 %v1193, %v1216
  %1218 = vmatmul.bf16.gmra.mxu0 %v983
  %v1219 = vpop.f32.mrf.mxu0
  %v1220 = vadd.f32 %v1196, %v1219
  %v1221 = vpop.f32.mrf.mxu0
  %v1222 = vadd.f32 %v1198, %v1221
  %1223 = vmatmul.bf16.gmra.mxu0 %v970
  %v1224 = vpop.f32.mrf.mxu0
  %v1225 = vadd.f32 %v1201, %v1224
  %v1226 = vpop.f32.mrf.mxu0
  %v1227 = vadd.f32 %v1203, %v1226
  %1228 = vdwg.mxu0
  %1229 = vmatpush.bf16.msra.mxu0 %v1156
  %1230 = vmatpush.bf16.msra.mxu0 %v1155
  %1231 = vmatpush.bf16.msra.mxu0 %v1154
  %1232 = vmatpush.bf16.msra.mxu0 %v1153
  %1233 = vmatpush.bf16.msra.mxu0 %v1152
  %1234 = vmatpush.bf16.msra.mxu0 %v1151
  %1235 = vmatpush.bf16.msra.mxu0 %v1150
  %1236 = vmatpush.bf16.msra.mxu0 %v1149
  %1237 = vmatmul.bf16.gmra.mxu0 %v956
  %v1238 = vpop.f32.mrf.mxu0
  %v1239 = vadd.f32 %v1215, %v1238
  %v1240 = vpop.f32.mrf.mxu0
  %v1241 = vadd.f32 %v1217, %v1240
  %1242 = vmatmul.bf16.gmra.mxu0 %v987
  %v1243 = vpop.f32.mrf.mxu0
  %v1244 = vadd.f32 %v1220, %v1243
  %v1245 = vpop.f32.mrf.mxu0
  %v1246 = vadd.f32 %v1222, %v1245
  %1247 = vmatmul.bf16.gmra.mxu0 %v972
  %v1248 = vpop.f32.mrf.mxu0
  %v1249 = vadd.f32 %v1225, %v1248
  %v1250 = vpop.f32.mrf.mxu0
  %v1251 = vadd.f32 %v1227, %v1250
  %1252 = vdwg.mxu0
  %v1253 = vmax.f32 %v1239, %v1246
  %v1254 = vmax.f32 %v1241, %v1249
  %v1255 = vmax.f32 %v1244, %v1251
  %v1256 = vld [vmem:[%s4] sm:$0x1]
  %v1258 = vperm.slane %v1256, 0
  %v1260 = vadd.f32 %v1253, %v1258
  %v1261 = vadd.f32 %v1254, %v1258
  %v1262 = vadd.f32 %v1255, %v1258
  %v1263 = vmax.f32 %v1260, 0.0
  %v1264 = vmax.f32 %v1261, 0.0
  %v1265 = vmax.f32 %v1262, 0.0
  %v1266 = vpack.c.bf16 %v1263, %v1263
  %v1267 = vpack.c.bf16 %v1264, %v1264
  %v1268 = vpack.c.bf16 %v1265, %v1265
  %v1269 = vld [vmem:[%s5] sm:$0xff]
  %v1270 = vld [vmem:[%s5 + $0x8] sm:$0xff]
  %v1271 = vld [vmem:[%s5 + $0x10] sm:$0xff]
  %v1272 = vld [vmem:[%s5 + $0x18] sm:$0xff]
  %v1273 = vld [vmem:[%s5 + $0x20] sm:$0xff]
  %v1274 = vld [vmem:[%s5 + $0x28] sm:$0xff]
  %v1275 = vld [vmem:[%s5 + $0x30] sm:$0xff]
  %v1276 = vld [vmem:[%s5 + $0x38] sm:$0xff]
  %v1277 = vld [vmem:[%s5 + $0x40] sm:$0xff]
  %v1278 = vld [vmem:[%s5 + $0x48] sm:$0xff]
  %v1279 = vld [vmem:[%s5 + $0x50] sm:$0xff]
  %v1280 = vld [vmem:[%s5 + $0x58] sm:$0xff]
  %v1281 = vld [vmem:[%s5 + $0x60] sm:$0xff]
  %v1282 = vld [vmem:[%s5 + $0x68] sm:$0xff]
  %v1283 = vld [vmem:[%s5 + $0x70] sm:$0xff]
  %v1284 = vld [vmem:[%s5 + $0x78] sm:$0xff]
  %v1285 = vld [vmem:[%s5 + $0x80] sm:$0xff]
  %v1286 = vld [vmem:[%s5 + $0x88] sm:$0xff]
  %v1287 = vld [vmem:[%s5 + $0x90] sm:$0xff]
  %v1288 = vld [vmem:[%s5 + $0x98] sm:$0xff]
  %v1289 = vld [vmem:[%s5 + $0xa0] sm:$0xff]
  %v1290 = vld [vmem:[%s5 + $0xa8] sm:$0xff]
  %v1291 = vld [vmem:[%s5 + $0xb0] sm:$0xff]
  %v1292 = vld [vmem:[%s5 + $0xb8] sm:$0xff]
  %v1293 = vld [vmem:[%s5 + $0xc0] sm:$0xff]
  %v1294 = vld [vmem:[%s5 + $0xc8] sm:$0xff]
  %v1295 = vld [vmem:[%s5 + $0xd0] sm:$0xff]
  %v1296 = vld [vmem:[%s5 + $0xd8] sm:$0xff]
  %v1297 = vld [vmem:[%s5 + $0xe0] sm:$0xff]
  %v1298 = vld [vmem:[%s5 + $0xe8] sm:$0xff]
  %v1299 = vld [vmem:[%s5 + $0xf0] sm:$0xff]
  %v1300 = vld [vmem:[%s5 + $0xf8] sm:$0xff]
  %v1301 = vld [vmem:[%s5 + $0x100] sm:$0xff]
  %v1302 = vld [vmem:[%s5 + $0x108] sm:$0xff]
  %v1303 = vld [vmem:[%s5 + $0x110] sm:$0xff]
  %v1304 = vld [vmem:[%s5 + $0x118] sm:$0xff]
  %v1305 = vld [vmem:[%s5 + $0x120] sm:$0xff]
  %v1306 = vld [vmem:[%s5 + $0x128] sm:$0xff]
  %v1307 = vld [vmem:[%s5 + $0x130] sm:$0xff]
  %v1308 = vld [vmem:[%s5 + $0x138] sm:$0xff]
  %v1309 = vld [vmem:[%s5 + $0x140] sm:$0xff]
  %v1310 = vld [vmem:[%s5 + $0x148] sm:$0xff]
  %v1311 = vld [vmem:[%s5 + $0x150] sm:$0xff]
  %v1312 = vld [vmem:[%s5 + $0x158] sm:$0xff]
  %v1313 = vld [vmem:[%s5 + $0x160] sm:$0xff]
  %v1314 = vld [vmem:[%s5 + $0x168] sm:$0xff]
  %v1315 = vld [vmem:[%s5 + $0x170] sm:$0xff]
  %v1316 = vld [vmem:[%s5 + $0x178] sm:$0xff]
  %v1317 = vld [vmem:[%s5 + $0x180] sm:$0xff]
  %v1318 = vld [vmem:[%s5 + $0x188] sm:$0xff]
  %v1319 = vld [vmem:[%s5 + $0x190] sm:$0xff]
  %v1320 = vld [vmem:[%s5 + $0x198] sm:$0xff]
  %v1321 = vld [vmem:[%s5 + $0x1a0] sm:$0xff]
  %v1322 = vld [vmem:[%s5 + $0x1a8] sm:$0xff]
  %v1323 = vld [vmem:[%s5 + $0x1b0] sm:$0xff]
  %v1324 = vld [vmem:[%s5 + $0x1b8] sm:$0xff]
  %v1325 = vld [vmem:[%s5 + $0x1c0] sm:$0xff]
  %v1326 = vld [vmem:[%s5 + $0x1c8] sm:$0xff]
  %v1327 = vld [vmem:[%s5 + $0x1d0] sm:$0xff]
  %v1328 = vld [vmem:[%s5 + $0x1d8] sm:$0xff]
  %v1329 = vld [vmem:[%s5 + $0x1e0] sm:$0xff]
  %v1330 = vld [vmem:[%s5 + $0x1e8] sm:$0xff]
  %v1331 = vld [vmem:[%s5 + $0x1f0] sm:$0xff]
  %v1332 = vld [vmem:[%s5 + $0x1f8] sm:$0xff]
  %v1333 = vld [vmem:[%s5 + $0x200] sm:$0xff]
  %v1334 = vld [vmem:[%s5 + $0x208] sm:$0xff]
  %v1335 = vld [vmem:[%s5 + $0x210] sm:$0xff]
  %v1336 = vld [vmem:[%s5 + $0x218] sm:$0xff]
  %v1337 = vld [vmem:[%s5 + $0x220] sm:$0xff]
  %v1338 = vld [vmem:[%s5 + $0x228] sm:$0xff]
  %v1339 = vld [vmem:[%s5 + $0x230] sm:$0xff]
  %v1340 = vld [vmem:[%s5 + $0x238] sm:$0xff]
  %v1341 = vld [vmem:[%s5 + $0x240] sm:$0xff]
  %v1342 = vld [vmem:[%s5 + $0x248] sm:$0xff]
  %v1343 = vld [vmem:[%s5 + $0x250] sm:$0xff]
  %v1344 = vld [vmem:[%s5 + $0x258] sm:$0xff]
  %v1345 = vld [vmem:[%s5 + $0x260] sm:$0xff]
  %v1346 = vld [vmem:[%s5 + $0x268] sm:$0xff]
  %v1347 = vld [vmem:[%s5 + $0x270] sm:$0xff]
  %v1348 = vld [vmem:[%s5 + $0x278] sm:$0xff]
  %v1349 = vld [vmem:[%s5 + $0x280] sm:$0xff]
  %v1350 = vld [vmem:[%s5 + $0x288] sm:$0xff]
  %v1351 = vld [vmem:[%s5 + $0x290] sm:$0xff]
  %v1352 = vld [vmem:[%s5 + $0x298] sm:$0xff]
  %v1353 = vld [vmem:[%s5 + $0x2a0] sm:$0xff]
  %v1354 = vld [vmem:[%s5 + $0x2a8] sm:$0xff]
  %v1355 = vld [vmem:[%s5 + $0x2b0] sm:$0xff]
  %v1356 = vld [vmem:[%s5 + $0x2b8] sm:$0xff]
  %v1357 = vld [vmem:[%s5 + $0x2c0] sm:$0xff]
  %v1358 = vld [vmem:[%s5 + $0x2c8] sm:$0xff]
  %v1359 = vld [vmem:[%s5 + $0x2d0] sm:$0xff]
  %v1360 = vld [vmem:[%s5 + $0x2d8] sm:$0xff]
  %v1361 = vld [vmem:[%s5 + $0x2e0] sm:$0xff]
  %v1362 = vld [vmem:[%s5 + $0x2e8] sm:$0xff]
  %v1363 = vld [vmem:[%s5 + $0x2f0] sm:$0xff]
  %v1364 = vld [vmem:[%s5 + $0x2f8] sm:$0xff]
  %v1365 = vld [vmem:[%s5 + $0x300] sm:$0xff]
  %v1366 = vld [vmem:[%s5 + $0x308] sm:$0xff]
  %v1367 = vld [vmem:[%s5 + $0x310] sm:$0xff]
  %v1368 = vld [vmem:[%s5 + $0x318] sm:$0xff]
  %v1369 = vld [vmem:[%s5 + $0x320] sm:$0xff]
  %v1370 = vld [vmem:[%s5 + $0x328] sm:$0xff]
  %v1371 = vld [vmem:[%s5 + $0x330] sm:$0xff]
  %v1372 = vld [vmem:[%s5 + $0x338] sm:$0xff]
  %v1373 = vld [vmem:[%s5 + $0x340] sm:$0xff]
  %v1374 = vld [vmem:[%s5 + $0x348] sm:$0xff]
  %v1375 = vld [vmem:[%s5 + $0x350] sm:$0xff]
  %v1376 = vld [vmem:[%s5 + $0x358] sm:$0xff]
  %v1377 = vld [vmem:[%s5 + $0x360] sm:$0xff]
  %v1378 = vld [vmem:[%s5 + $0x368] sm:$0xff]
  %v1379 = vld [vmem:[%s5 + $0x370] sm:$0xff]
  %v1380 = vld [vmem:[%s5 + $0x378] sm:$0xff]
  %v1381 = vld [vmem:[%s5 + $0x380] sm:$0xff]
  %v1382 = vld [vmem:[%s5 + $0x388] sm:$0xff]
  %v1383 = vld [vmem:[%s5 + $0x390] sm:$0xff]
  %v1384 = vld [vmem:[%s5 + $0x398] sm:$0xff]
  %v1385 = vld [vmem:[%s5 + $0x3a0] sm:$0xff]
  %v1386 = vld [vmem:[%s5 + $0x3a8] sm:$0xff]
  %v1387 = vld [vmem:[%s5 + $0x3b0] sm:$0xff]
  %v1388 = vld [vmem:[%s5 + $0x3b8] sm:$0xff]
  %v1389 = vld [vmem:[%s5 + $0x3c0] sm:$0xff]
  %v1390 = vld [vmem:[%s5 + $0x3c8] sm:$0xff]
  %v1391 = vld [vmem:[%s5 + $0x3d0] sm:$0xff]
  %v1392 = vld [vmem:[%s5 + $0x3d8] sm:$0xff]
  %v1393 = vld [vmem:[%s5 + $0x3e0] sm:$0xff]
  %v1394 = vld [vmem:[%s5 + $0x3e8] sm:$0xff]
  %v1395 = vld [vmem:[%s5 + $0x3f0] sm:$0xff]
  %v1396 = vld [vmem:[%s5 + $0x3f8] sm:$0xff]
  %v1397 = vld [vmem:[%s5 + $0x400] sm:$0xff]
  %v1398 = vld [vmem:[%s5 + $0x408] sm:$0xff]
  %v1399 = vld [vmem:[%s5 + $0x410] sm:$0xff]
  %v1400 = vld [vmem:[%s5 + $0x418] sm:$0xff]
  %v1401 = vld [vmem:[%s5 + $0x420] sm:$0xff]
  %v1402 = vld [vmem:[%s5 + $0x428] sm:$0xff]
  %v1403 = vld [vmem:[%s5 + $0x430] sm:$0xff]
  %v1404 = vld [vmem:[%s5 + $0x438] sm:$0xff]
  %v1405 = vld [vmem:[%s5 + $0x440] sm:$0xff]
  %v1406 = vld [vmem:[%s5 + $0x448] sm:$0xff]
  %v1407 = vld [vmem:[%s5 + $0x450] sm:$0xff]
  %v1408 = vld [vmem:[%s5 + $0x458] sm:$0xff]
  %v1409 = vld [vmem:[%s5 + $0x460] sm:$0xff]
  %v1410 = vld [vmem:[%s5 + $0x468] sm:$0xff]
  %v1411 = vld [vmem:[%s5 + $0x470] sm:$0xff]
  %v1412 = vld [vmem:[%s5 + $0x478] sm:$0xff]
  %v1413 = vld [vmem:[%s5 + $0x480] sm:$0xff]
  %v1414 = vld [vmem:[%s5 + $0x488] sm:$0xff]
  %v1415 = vld [vmem:[%s5 + $0x490] sm:$0xff]
  %v1416 = vld [vmem:[%s5 + $0x498] sm:$0xff]
  %v1417 = vld [vmem:[%s5 + $0x4a0] sm:$0xff]
  %v1418 = vld [vmem:[%s5 + $0x4a8] sm:$0xff]
  %v1419 = vld [vmem:[%s5 + $0x4b0] sm:$0xff]
  %v1420 = vld [vmem:[%s5 + $0x4b8] sm:$0xff]
  %v1421 = vld [vmem:[%s5 + $0x4c0] sm:$0xff]
  %v1422 = vld [vmem:[%s5 + $0x4c8] sm:$0xff]
  %v1423 = vld [vmem:[%s5 + $0x4d0] sm:$0xff]
  %v1424 = vld [vmem:[%s5 + $0x4d8] sm:$0xff]
  %v1425 = vld [vmem:[%s5 + $0x4e0] sm:$0xff]
  %v1426 = vld [vmem:[%s5 + $0x4e8] sm:$0xff]
  %v1427 = vld [vmem:[%s5 + $0x4f0] sm:$0xff]
  %v1428 = vld [vmem:[%s5 + $0x4f8] sm:$0xff]
  %v1429 = vld [vmem:[%s5 + $0x500] sm:$0xff]
  %v1430 = vld [vmem:[%s5 + $0x508] sm:$0xff]
  %v1431 = vld [vmem:[%s5 + $0x510] sm:$0xff]
  %v1432 = vld [vmem:[%s5 + $0x518] sm:$0xff]
  %v1433 = vld [vmem:[%s5 + $0x520] sm:$0xff]
  %v1434 = vld [vmem:[%s5 + $0x528] sm:$0xff]
  %v1435 = vld [vmem:[%s5 + $0x530] sm:$0xff]
  %v1436 = vld [vmem:[%s5 + $0x538] sm:$0xff]
  %v1437 = vld [vmem:[%s5 + $0x540] sm:$0xff]
  %v1438 = vld [vmem:[%s5 + $0x548] sm:$0xff]
  %v1439 = vld [vmem:[%s5 + $0x550] sm:$0xff]
  %v1440 = vld [vmem:[%s5 + $0x558] sm:$0xff]
  %v1441 = vld [vmem:[%s5 + $0x560] sm:$0xff]
  %v1442 = vld [vmem:[%s5 + $0x568] sm:$0xff]
  %v1443 = vld [vmem:[%s5 + $0x570] sm:$0xff]
  %v1444 = vld [vmem:[%s5 + $0x578] sm:$0xff]
  %v1445 = vld [vmem:[%s5 + $0x580] sm:$0xff]
  %v1446 = vld [vmem:[%s5 + $0x588] sm:$0xff]
  %v1447 = vld [vmem:[%s5 + $0x590] sm:$0xff]
  %v1448 = vld [vmem:[%s5 + $0x598] sm:$0xff]
  %v1449 = vld [vmem:[%s5 + $0x5a0] sm:$0xff]
  %v1450 = vld [vmem:[%s5 + $0x5a8] sm:$0xff]
  %v1451 = vld [vmem:[%s5 + $0x5b0] sm:$0xff]
  %v1452 = vld [vmem:[%s5 + $0x5b8] sm:$0xff]
  %v1453 = vld [vmem:[%s5 + $0x5c0] sm:$0xff]
  %v1454 = vld [vmem:[%s5 + $0x5c8] sm:$0xff]
  %v1455 = vld [vmem:[%s5 + $0x5d0] sm:$0xff]
  %v1456 = vld [vmem:[%s5 + $0x5d8] sm:$0xff]
  %v1457 = vld [vmem:[%s5 + $0x5e0] sm:$0xff]
  %v1458 = vld [vmem:[%s5 + $0x5e8] sm:$0xff]
  %v1459 = vld [vmem:[%s5 + $0x5f0] sm:$0xff]
  %v1460 = vld [vmem:[%s5 + $0x5f8] sm:$0xff]
  %v1461 = vld [vmem:[%s5 + $0x600] sm:$0xff]
  %v1462 = vld [vmem:[%s5 + $0x608] sm:$0xff]
  %v1463 = vld [vmem:[%s5 + $0x610] sm:$0xff]
  %v1464 = vld [vmem:[%s5 + $0x618] sm:$0xff]
  %v1465 = vld [vmem:[%s5 + $0x620] sm:$0xff]
  %v1466 = vld [vmem:[%s5 + $0x628] sm:$0xff]
  %v1467 = vld [vmem:[%s5 + $0x630] sm:$0xff]
  %v1468 = vld [vmem:[%s5 + $0x638] sm:$0xff]
  %v1469 = vld [vmem:[%s5 + $0x640] sm:$0xff]
  %v1470 = vld [vmem:[%s5 + $0x648] sm:$0xff]
  %v1471 = vld [vmem:[%s5 + $0x650] sm:$0xff]
  %v1472 = vld [vmem:[%s5 + $0x658] sm:$0xff]
  %v1473 = vld [vmem:[%s5 + $0x660] sm:$0xff]
  %v1474 = vld [vmem:[%s5 + $0x668] sm:$0xff]
  %v1475 = vld [vmem:[%s5 + $0x670] sm:$0xff]
  %v1476 = vld [vmem:[%s5 + $0x678] sm:$0xff]
  %v1477 = vld [vmem:[%s5 + $0x680] sm:$0xff]
  %v1478 = vld [vmem:[%s5 + $0x688] sm:$0xff]
  %v1479 = vld [vmem:[%s5 + $0x690] sm:$0xff]
  %v1480 = vld [vmem:[%s5 + $0x698] sm:$0xff]
  %v1481 = vld [vmem:[%s5 + $0x6a0] sm:$0xff]
  %v1482 = vld [vmem:[%s5 + $0x6a8] sm:$0xff]
  %v1483 = vld [vmem:[%s5 + $0x6b0] sm:$0xff]
  %v1484 = vld [vmem:[%s5 + $0x6b8] sm:$0xff]
  %v1485 = vld [vmem:[%s5 + $0x6c0] sm:$0xff]
  %v1486 = vld [vmem:[%s5 + $0x6c8] sm:$0xff]
  %v1487 = vld [vmem:[%s5 + $0x6d0] sm:$0xff]
  %v1488 = vld [vmem:[%s5 + $0x6d8] sm:$0xff]
  %v1489 = vld [vmem:[%s5 + $0x6e0] sm:$0xff]
  %v1490 = vld [vmem:[%s5 + $0x6e8] sm:$0xff]
  %v1491 = vld [vmem:[%s5 + $0x6f0] sm:$0xff]
  %v1492 = vld [vmem:[%s5 + $0x6f8] sm:$0xff]
  %v1493 = vld [vmem:[%s5 + $0x700] sm:$0xff]
  %v1494 = vld [vmem:[%s5 + $0x708] sm:$0xff]
  %v1495 = vld [vmem:[%s5 + $0x710] sm:$0xff]
  %v1496 = vld [vmem:[%s5 + $0x718] sm:$0xff]
  %v1497 = vld [vmem:[%s5 + $0x720] sm:$0xff]
  %v1498 = vld [vmem:[%s5 + $0x728] sm:$0xff]
  %v1499 = vld [vmem:[%s5 + $0x730] sm:$0xff]
  %v1500 = vld [vmem:[%s5 + $0x738] sm:$0xff]
  %v1501 = vld [vmem:[%s5 + $0x740] sm:$0xff]
  %v1502 = vld [vmem:[%s5 + $0x748] sm:$0xff]
  %v1503 = vld [vmem:[%s5 + $0x750] sm:$0xff]
  %v1504 = vld [vmem:[%s5 + $0x758] sm:$0xff]
  %v1505 = vld [vmem:[%s5 + $0x760] sm:$0xff]
  %v1506 = vld [vmem:[%s5 + $0x768] sm:$0xff]
  %v1507 = vld [vmem:[%s5 + $0x770] sm:$0xff]
  %v1508 = vld [vmem:[%s5 + $0x778] sm:$0xff]
  %v1509 = vld [vmem:[%s5 + $0x780] sm:$0xff]
  %v1510 = vld [vmem:[%s5 + $0x788] sm:$0xff]
  %v1511 = vld [vmem:[%s5 + $0x790] sm:$0xff]
  %v1512 = vld [vmem:[%s5 + $0x798] sm:$0xff]
  %v1513 = vld [vmem:[%s5 + $0x7a0] sm:$0xff]
  %v1514 = vld [vmem:[%s5 + $0x7a8] sm:$0xff]
  %v1515 = vld [vmem:[%s5 + $0x7b0] sm:$0xff]
  %v1516 = vld [vmem:[%s5 + $0x7b8] sm:$0xff]
  %v1517 = vld [vmem:[%s5 + $0x7c0] sm:$0xff]
  %v1518 = vld [vmem:[%s5 + $0x7c8] sm:$0xff]
  %v1519 = vld [vmem:[%s5 + $0x7d0] sm:$0xff]
  %v1520 = vld [vmem:[%s5 + $0x7d8] sm:$0xff]
  %v1521 = vld [vmem:[%s5 + $0x7e0] sm:$0xff]
  %v1522 = vld [vmem:[%s5 + $0x7e8] sm:$0xff]
  %v1523 = vld [vmem:[%s5 + $0x7f0] sm:$0xff]
  %v1524 = vld [vmem:[%s5 + $0x7f8] sm:$0xff]
  %v1525 = vld [vmem:[%s5 + $0x800] sm:$0xff]
  %v1526 = vld [vmem:[%s5 + $0x808] sm:$0xff]
  %v1527 = vld [vmem:[%s5 + $0x810] sm:$0xff]
  %v1528 = vld [vmem:[%s5 + $0x818] sm:$0xff]
  %v1529 = vld [vmem:[%s5 + $0x820] sm:$0xff]
  %v1530 = vld [vmem:[%s5 + $0x828] sm:$0xff]
  %v1531 = vld [vmem:[%s5 + $0x830] sm:$0xff]
  %v1532 = vld [vmem:[%s5 + $0x838] sm:$0xff]
  %v1533 = vld [vmem:[%s5 + $0x840] sm:$0xff]
  %v1534 = vld [vmem:[%s5 + $0x848] sm:$0xff]
  %v1535 = vld [vmem:[%s5 + $0x850] sm:$0xff]
  %v1536 = vld [vmem:[%s5 + $0x858] sm:$0xff]
  %v1537 = vld [vmem:[%s5 + $0x860] sm:$0xff]
  %v1538 = vld [vmem:[%s5 + $0x868] sm:$0xff]
  %v1539 = vld [vmem:[%s5 + $0x870] sm:$0xff]
  %v1540 = vld [vmem:[%s5 + $0x878] sm:$0xff]
  %v1541 = vld [vmem:[%s5 + $0x880] sm:$0xff]
  %v1542 = vld [vmem:[%s5 + $0x888] sm:$0xff]
  %v1543 = vld [vmem:[%s5 + $0x890] sm:$0xff]
  %v1544 = vld [vmem:[%s5 + $0x898] sm:$0xff]
  %v1545 = vld [vmem:[%s5 + $0x8a0] sm:$0xff]
  %v1546 = vld [vmem:[%s5 + $0x8a8] sm:$0xff]
  %v1547 = vld [vmem:[%s5 + $0x8b0] sm:$0xff]
  %v1548 = vld [vmem:[%s5 + $0x8b8] sm:$0xff]
  %v1549 = vld [vmem:[%s5 + $0x8c0] sm:$0xff]
  %v1550 = vld [vmem:[%s5 + $0x8c8] sm:$0xff]
  %v1551 = vld [vmem:[%s5 + $0x8d0] sm:$0xff]
  %v1552 = vld [vmem:[%s5 + $0x8d8] sm:$0xff]
  %v1553 = vld [vmem:[%s5 + $0x8e0] sm:$0xff]
  %v1554 = vld [vmem:[%s5 + $0x8e8] sm:$0xff]
  %v1555 = vld [vmem:[%s5 + $0x8f0] sm:$0xff]
  %v1556 = vld [vmem:[%s5 + $0x8f8] sm:$0xff]
  %v1557 = vld [vmem:[%s6] sm:$0xff]
  %v1558 = vld [vmem:[%s6 + $0x8] sm:$0xf]
  %v1561 = vperm.slane %v1557, 0
  %v1562 = vperm.slane %v1557, 1
  %v1563 = vperm.slane %v1557, 2
  %v1564 = vperm.slane %v1557, 3
  %v1565 = vperm.slane %v1557, 4
  %v1566 = vperm.slane %v1557, 5
  %v1567 = vperm.slane %v1557, 6
  %v1568 = vperm.slane %v1557, 7
  %v1569 = vperm.slane %v1558, 0
  %v1570 = vperm.slane %v1558, 1
  %v1571 = vperm.slane %v1558, 2
  %v1572 = vperm.slane %v1558, 3
  %v1873 = vunpack.c.l.b16 %v1269
  %v1874 = vunpack.c.h.b16 %v1269
  %v1875 = vunpack.c.l.b16 %v1270
  %v1876 = vunpack.c.h.b16 %v1270
  %v1877 = vunpack.c.l.b16 %v1271
  %v1878 = vunpack.c.h.b16 %v1271
  %v1879 = vunpack.c.l.b16 %v1272
  %v1880 = vunpack.c.h.b16 %v1272
  %v1881 = vunpack.c.l.b16 %v1273
  %v1882 = vunpack.c.h.b16 %v1273
  %v1883 = vunpack.c.l.b16 %v1274
  %v1884 = vunpack.c.h.b16 %v1274
  %v1885 = vunpack.c.l.b16 %v1275
  %v1886 = vunpack.c.h.b16 %v1275
  %v1887 = vunpack.c.l.b16 %v1276
  %v1888 = vunpack.c.h.b16 %v1276
  %v1889 = vunpack.c.l.b16 %v1277
  %v1890 = vunpack.c.h.b16 %v1277
  %v1891 = vunpack.c.l.b16 %v1278
  %v1892 = vunpack.c.h.b16 %v1278
  %v1893 = vunpack.c.l.b16 %v1279
  %v1894 = vunpack.c.h.b16 %v1279
  %v1895 = vunpack.c.l.b16 %v1280
  %v1896 = vunpack.c.h.b16 %v1280
  %v1897 = vunpack.c.l.b16 %v1281
  %v1898 = vunpack.c.h.b16 %v1281
  %v1899 = vunpack.c.l.b16 %v1282
  %v1900 = vunpack.c.h.b16 %v1282
  %v1901 = vunpack.c.l.b16 %v1283
  %v1902 = vunpack.c.h.b16 %v1283
  %v1903 = vunpack.c.l.b16 %v1284
  %v1904 = vunpack.c.h.b16 %v1284
  %v1905 = vunpack.c.l.b16 %v1285
  %v1906 = vunpack.c.h.b16 %v1285
  %v1907 = vunpack.c.l.b16 %v1286
  %v1908 = vunpack.c.h.b16 %v1286
  %v1909 = vunpack.c.l.b16 %v1287
  %v1910 = vunpack.c.h.b16 %v1287
  %v1911 = vunpack.c.l.b16 %v1288
  %v1912 = vunpack.c.h.b16 %v1288
  %v1913 = vunpack.c.l.b16 %v1289
  %v1914 = vunpack.c.h.b16 %v1289
  %v1915 = vunpack.c.l.b16 %v1290
  %v1916 = vunpack.c.h.b16 %v1290
  %v1917 = vunpack.c.l.b16 %v1291
  %v1918 = vunpack.c.h.b16 %v1291
  %v1919 = vunpack.c.l.b16 %v1292
  %v1920 = vunpack.c.h.b16 %v1292
  %v1921 = vunpack.c.l.b16 %v1293
  %v1922 = vunpack.c.h.b16 %v1293
  %v1923 = vunpack.c.l.b16 %v1294
  %v1924 = vunpack.c.h.b16 %v1294
  %v1925 = vunpack.c.l.b16 %v1295
  %v1926 = vunpack.c.h.b16 %v1295
  %v1927 = vunpack.c.l.b16 %v1296
  %v1928 = vunpack.c.h.b16 %v1296
  %v1929 = vunpack.c.l.b16 %v1297
  %v1930 = vunpack.c.h.b16 %v1297
  %v1931 = vunpack.c.l.b16 %v1298
  %v1932 = vunpack.c.h.b16 %v1298
  %v1933 = vunpack.c.l.b16 %v1299
  %v1934 = vunpack.c.h.b16 %v1299
  %v1935 = vunpack.c.l.b16 %v1300
  %v1936 = vunpack.c.h.b16 %v1300
  %v1937 = vunpack.c.l.b16 %v1301
  %v1938 = vunpack.c.h.b16 %v1301
  %v1939 = vunpack.c.l.b16 %v1302
  %v1940 = vunpack.c.h.b16 %v1302
  %v1941 = vunpack.c.l.b16 %v1303
  %v1942 = vunpack.c.h.b16 %v1303
  %v1943 = vunpack.c.l.b16 %v1304
  %v1944 = vunpack.c.h.b16 %v1304
  %v1945 = vunpack.c.l.b16 %v1305
  %v1946 = vunpack.c.h.b16 %v1305
  %v1947 = vunpack.c.l.b16 %v1306
  %v1948 = vunpack.c.h.b16 %v1306
  %v1949 = vunpack.c.l.b16 %v1307
  %v1950 = vunpack.c.h.b16 %v1307
  %v1951 = vunpack.c.l.b16 %v1308
  %v1952 = vunpack.c.h.b16 %v1308
  %v1953 = vunpack.c.l.b16 %v1309
  %v1954 = vunpack.c.h.b16 %v1309
  %v1955 = vunpack.c.l.b16 %v1310
  %v1956 = vunpack.c.h.b16 %v1310
  %v1957 = vunpack.c.l.b16 %v1311
  %v1958 = vunpack.c.h.b16 %v1311
  %v1959 = vunpack.c.l.b16 %v1312
  %v1960 = vunpack.c.h.b16 %v1312
  %v1961 = vunpack.c.l.b16 %v1313
  %v1962 = vunpack.c.h.b16 %v1313
  %v1963 = vunpack.c.l.b16 %v1314
  %v1964 = vunpack.c.h.b16 %v1314
  %v1965 = vunpack.c.l.b16 %v1315
  %v1966 = vunpack.c.h.b16 %v1315
  %v1967 = vunpack.c.l.b16 %v1316
  %v1968 = vunpack.c.h.b16 %v1316
  %v1969 = vunpack.c.l.b16 %v1317
  %v1970 = vunpack.c.h.b16 %v1317
  %v1971 = vunpack.c.l.b16 %v1318
  %v1972 = vunpack.c.h.b16 %v1318
  %v1973 = vunpack.c.l.b16 %v1319
  %v1974 = vunpack.c.h.b16 %v1319
  %v1975 = vunpack.c.l.b16 %v1320
  %v1976 = vunpack.c.h.b16 %v1320
  %v1977 = vunpack.c.l.b16 %v1321
  %v1978 = vunpack.c.h.b16 %v1321
  %v1979 = vunpack.c.l.b16 %v1322
  %v1980 = vunpack.c.h.b16 %v1322
  %v1981 = vunpack.c.l.b16 %v1323
  %v1982 = vunpack.c.h.b16 %v1323
  %v1983 = vunpack.c.l.b16 %v1324
  %v1984 = vunpack.c.h.b16 %v1324
  %v1985 = vunpack.c.l.b16 %v1325
  %v1986 = vunpack.c.h.b16 %v1325
  %v1987 = vunpack.c.l.b16 %v1326
  %v1988 = vunpack.c.h.b16 %v1326
  %v1989 = vunpack.c.l.b16 %v1327
  %v1990 = vunpack.c.h.b16 %v1327
  %v1991 = vunpack.c.l.b16 %v1328
  %v1992 = vunpack.c.h.b16 %v1328
  %v1993 = vunpack.c.l.b16 %v1329
  %v1994 = vunpack.c.h.b16 %v1329
  %v1995 = vunpack.c.l.b16 %v1330
  %v1996 = vunpack.c.h.b16 %v1330
  %v1997 = vunpack.c.l.b16 %v1331
  %v1998 = vunpack.c.h.b16 %v1331
  %v1999 = vunpack.c.l.b16 %v1332
  %v2000 = vunpack.c.h.b16 %v1332
  %v2001 = vunpack.c.l.b16 %v1333
  %v2002 = vunpack.c.h.b16 %v1333
  %v2003 = vunpack.c.l.b16 %v1334
  %v2004 = vunpack.c.h.b16 %v1334
  %v2005 = vunpack.c.l.b16 %v1335
  %v2006 = vunpack.c.h.b16 %v1335
  %v2007 = vunpack.c.l.b16 %v1336
  %v2008 = vunpack.c.h.b16 %v1336
  %v2009 = vunpack.c.l.b16 %v1337
  %v2010 = vunpack.c.h.b16 %v1337
  %v2011 = vunpack.c.l.b16 %v1338
  %v2012 = vunpack.c.h.b16 %v1338
  %v2013 = vunpack.c.l.b16 %v1339
  %v2014 = vunpack.c.h.b16 %v1339
  %v2015 = vunpack.c.l.b16 %v1340
  %v2016 = vunpack.c.h.b16 %v1340
  %v2017 = vunpack.c.l.b16 %v1341
  %v2018 = vunpack.c.h.b16 %v1341
  %v2019 = vunpack.c.l.b16 %v1342
  %v2020 = vunpack.c.h.b16 %v1342
  %v2021 = vunpack.c.l.b16 %v1343
  %v2022 = vunpack.c.h.b16 %v1343
  %v2023 = vunpack.c.l.b16 %v1344
  %v2024 = vunpack.c.h.b16 %v1344
  %v2025 = vunpack.c.l.b16 %v1345
  %v2026 = vunpack.c.h.b16 %v1345
  %v2027 = vunpack.c.l.b16 %v1346
  %v2028 = vunpack.c.h.b16 %v1346
  %v2029 = vunpack.c.l.b16 %v1347
  %v2030 = vunpack.c.h.b16 %v1347
  %v2031 = vunpack.c.l.b16 %v1348
  %v2032 = vunpack.c.h.b16 %v1348
  %v2033 = vunpack.c.l.b16 %v1349
  %v2034 = vunpack.c.h.b16 %v1349
  %v2035 = vunpack.c.l.b16 %v1350
  %v2036 = vunpack.c.h.b16 %v1350
  %v2037 = vunpack.c.l.b16 %v1351
  %v2038 = vunpack.c.h.b16 %v1351
  %v2039 = vunpack.c.l.b16 %v1352
  %v2040 = vunpack.c.h.b16 %v1352
  %v2041 = vunpack.c.l.b16 %v1353
  %v2042 = vunpack.c.h.b16 %v1353
  %v2043 = vunpack.c.l.b16 %v1354
  %v2044 = vunpack.c.h.b16 %v1354
  %v2045 = vunpack.c.l.b16 %v1355
  %v2046 = vunpack.c.h.b16 %v1355
  %v2047 = vunpack.c.l.b16 %v1356
  %v2048 = vunpack.c.h.b16 %v1356
  %v2049 = vunpack.c.l.b16 %v1357
  %v2050 = vunpack.c.h.b16 %v1357
  %v2051 = vunpack.c.l.b16 %v1358
  %v2052 = vunpack.c.h.b16 %v1358
  %v2053 = vunpack.c.l.b16 %v1359
  %v2054 = vunpack.c.h.b16 %v1359
  %v2055 = vunpack.c.l.b16 %v1360
  %v2056 = vunpack.c.h.b16 %v1360
  %v2057 = vunpack.c.l.b16 %v1361
  %v2058 = vunpack.c.h.b16 %v1361
  %v2059 = vunpack.c.l.b16 %v1362
  %v2060 = vunpack.c.h.b16 %v1362
  %v2061 = vunpack.c.l.b16 %v1363
  %v2062 = vunpack.c.h.b16 %v1363
  %v2063 = vunpack.c.l.b16 %v1364
  %v2064 = vunpack.c.h.b16 %v1364
  %v2065 = vunpack.c.l.b16 %v1365
  %v2066 = vunpack.c.h.b16 %v1365
  %v2067 = vunpack.c.l.b16 %v1366
  %v2068 = vunpack.c.h.b16 %v1366
  %v2069 = vunpack.c.l.b16 %v1367
  %v2070 = vunpack.c.h.b16 %v1367
  %v2071 = vunpack.c.l.b16 %v1368
  %v2072 = vunpack.c.h.b16 %v1368
  %v2073 = vunpack.c.l.b16 %v1369
  %v2074 = vunpack.c.h.b16 %v1369
  %v2075 = vunpack.c.l.b16 %v1370
  %v2076 = vunpack.c.h.b16 %v1370
  %v2077 = vunpack.c.l.b16 %v1371
  %v2078 = vunpack.c.h.b16 %v1371
  %v2079 = vunpack.c.l.b16 %v1372
  %v2080 = vunpack.c.h.b16 %v1372
  %v2081 = vunpack.c.l.b16 %v1373
  %v2082 = vunpack.c.h.b16 %v1373
  %v2083 = vunpack.c.l.b16 %v1374
  %v2084 = vunpack.c.h.b16 %v1374
  %v2085 = vunpack.c.l.b16 %v1375
  %v2086 = vunpack.c.h.b16 %v1375
  %v2087 = vunpack.c.l.b16 %v1376
  %v2088 = vunpack.c.h.b16 %v1376
  %v2089 = vunpack.c.l.b16 %v1377
  %v2090 = vunpack.c.h.b16 %v1377
  %v2091 = vunpack.c.l.b16 %v1378
  %v2092 = vunpack.c.h.b16 %v1378
  %v2093 = vunpack.c.l.b16 %v1379
  %v2094 = vunpack.c.h.b16 %v1379
  %v2095 = vunpack.c.l.b16 %v1380
  %v2096 = vunpack.c.h.b16 %v1380
  %v2097 = vunpack.c.l.b16 %v1381
  %v2098 = vunpack.c.h.b16 %v1381
  %v2099 = vunpack.c.l.b16 %v1382
  %v2100 = vunpack.c.h.b16 %v1382
  %v2101 = vunpack.c.l.b16 %v1383
  %v2102 = vunpack.c.h.b16 %v1383
  %v2103 = vunpack.c.l.b16 %v1384
  %v2104 = vunpack.c.h.b16 %v1384
  %v2105 = vunpack.c.l.b16 %v1385
  %v2106 = vunpack.c.h.b16 %v1385
  %v2107 = vunpack.c.l.b16 %v1386
  %v2108 = vunpack.c.h.b16 %v1386
  %v2109 = vunpack.c.l.b16 %v1387
  %v2110 = vunpack.c.h.b16 %v1387
  %v2111 = vunpack.c.l.b16 %v1388
  %v2112 = vunpack.c.h.b16 %v1388
  %v2113 = vunpack.c.l.b16 %v1389
  %v2114 = vunpack.c.h.b16 %v1389
  %v2115 = vunpack.c.l.b16 %v1390
  %v2116 = vunpack.c.h.b16 %v1390
  %v2117 = vunpack.c.l.b16 %v1391
  %v2118 = vunpack.c.h.b16 %v1391
  %v2119 = vunpack.c.l.b16 %v1392
  %v2120 = vunpack.c.h.b16 %v1392
  %v2121 = vunpack.c.l.b16 %v1393
  %v2122 = vunpack.c.h.b16 %v1393
  %v2123 = vunpack.c.l.b16 %v1394
  %v2124 = vunpack.c.h.b16 %v1394
  %v2125 = vunpack.c.l.b16 %v1395
  %v2126 = vunpack.c.h.b16 %v1395
  %v2127 = vunpack.c.l.b16 %v1396
  %v2128 = vunpack.c.h.b16 %v1396
  %v2129 = vunpack.c.l.b16 %v1397
  %v2130 = vunpack.c.h.b16 %v1397
  %v2131 = vunpack.c.l.b16 %v1398
  %v2132 = vunpack.c.h.b16 %v1398
  %v2133 = vunpack.c.l.b16 %v1399
  %v2134 = vunpack.c.h.b16 %v1399
  %v2135 = vunpack.c.l.b16 %v1400
  %v2136 = vunpack.c.h.b16 %v1400
  %v2137 = vunpack.c.l.b16 %v1401
  %v2138 = vunpack.c.h.b16 %v1401
  %v2139 = vunpack.c.l.b16 %v1402
  %v2140 = vunpack.c.h.b16 %v1402
  %v2141 = vunpack.c.l.b16 %v1403
  %v2142 = vunpack.c.h.b16 %v1403
  %v2143 = vunpack.c.l.b16 %v1404
  %v2144 = vunpack.c.h.b16 %v1404
  %v2145 = vunpack.c.l.b16 %v1405
  %v2146 = vunpack.c.h.b16 %v1405
  %v2147 = vunpack.c.l.b16 %v1406
  %v2148 = vunpack.c.h.b16 %v1406
  %v2149 = vunpack.c.l.b16 %v1407
  %v2150 = vunpack.c.h.b16 %v1407
  %v2151 = vunpack.c.l.b16 %v1408
  %v2152 = vunpack.c.h.b16 %v1408
  %v2153 = vunpack.c.l.b16 %v1409
  %v2154 = vunpack.c.h.b16 %v1409
  %v2155 = vunpack.c.l.b16 %v1410
  %v2156 = vunpack.c.h.b16 %v1410
  %v2157 = vunpack.c.l.b16 %v1411
  %v2158 = vunpack.c.h.b16 %v1411
  %v2159 = vunpack.c.l.b16 %v1412
  %v2160 = vunpack.c.h.b16 %v1412
  %v2161 = vunpack.c.l.b16 %v1413
  %v2162 = vunpack.c.h.b16 %v1413
  %v2163 = vunpack.c.l.b16 %v1414
  %v2164 = vunpack.c.h.b16 %v1414
  %v2165 = vunpack.c.l.b16 %v1415
  %v2166 = vunpack.c.h.b16 %v1415
  %v2167 = vunpack.c.l.b16 %v1416
  %v2168 = vunpack.c.h.b16 %v1416
  %v2169 = vunpack.c.l.b16 %v1417
  %v2170 = vunpack.c.h.b16 %v1417
  %v2171 = vunpack.c.l.b16 %v1418
  %v2172 = vunpack.c.h.b16 %v1418
  %v2173 = vunpack.c.l.b16 %v1419
  %v2174 = vunpack.c.h.b16 %v1419
  %v2175 = vunpack.c.l.b16 %v1420
  %v2176 = vunpack.c.h.b16 %v1420
  %v2177 = vunpack.c.l.b16 %v1421
  %v2178 = vunpack.c.h.b16 %v1421
  %v2179 = vunpack.c.l.b16 %v1422
  %v2180 = vunpack.c.h.b16 %v1422
  %v2181 = vunpack.c.l.b16 %v1423
  %v2182 = vunpack.c.h.b16 %v1423
  %v2183 = vunpack.c.l.b16 %v1424
  %v2184 = vunpack.c.h.b16 %v1424
  %v2185 = vunpack.c.l.b16 %v1425
  %v2186 = vunpack.c.h.b16 %v1425
  %v2187 = vunpack.c.l.b16 %v1426
  %v2188 = vunpack.c.h.b16 %v1426
  %v2189 = vunpack.c.l.b16 %v1427
  %v2190 = vunpack.c.h.b16 %v1427
  %v2191 = vunpack.c.l.b16 %v1428
  %v2192 = vunpack.c.h.b16 %v1428
  %v2193 = vunpack.c.l.b16 %v1429
  %v2194 = vunpack.c.h.b16 %v1429
  %v2195 = vunpack.c.l.b16 %v1430
  %v2196 = vunpack.c.h.b16 %v1430
  %v2197 = vunpack.c.l.b16 %v1431
  %v2198 = vunpack.c.h.b16 %v1431
  %v2199 = vunpack.c.l.b16 %v1432
  %v2200 = vunpack.c.h.b16 %v1432
  %v2201 = vunpack.c.l.b16 %v1433
  %v2202 = vunpack.c.h.b16 %v1433
  %v2203 = vunpack.c.l.b16 %v1434
  %v2204 = vunpack.c.h.b16 %v1434
  %v2205 = vunpack.c.l.b16 %v1435
  %v2206 = vunpack.c.h.b16 %v1435
  %v2207 = vunpack.c.l.b16 %v1436
  %v2208 = vunpack.c.h.b16 %v1436
  %v2209 = vunpack.c.l.b16 %v1437
  %v2210 = vunpack.c.h.b16 %v1437
  %v2211 = vunpack.c.l.b16 %v1438
  %v2212 = vunpack.c.h.b16 %v1438
  %v2213 = vunpack.c.l.b16 %v1439
  %v2214 = vunpack.c.h.b16 %v1439
  %v2215 = vunpack.c.l.b16 %v1440
  %v2216 = vunpack.c.h.b16 %v1440
  %v2217 = vunpack.c.l.b16 %v1441
  %v2218 = vunpack.c.h.b16 %v1441
  %v2219 = vunpack.c.l.b16 %v1442
  %v2220 = vunpack.c.h.b16 %v1442
  %v2221 = vunpack.c.l.b16 %v1443
  %v2222 = vunpack.c.h.b16 %v1443
  %v2223 = vunpack.c.l.b16 %v1444
  %v2224 = vunpack.c.h.b16 %v1444
  %v2225 = vunpack.c.l.b16 %v1445
  %v2226 = vunpack.c.h.b16 %v1445
  %v2227 = vunpack.c.l.b16 %v1446
  %v2228 = vunpack.c.h.b16 %v1446
  %v2229 = vunpack.c.l.b16 %v1447
  %v2230 = vunpack.c.h.b16 %v1447
  %v2231 = vunpack.c.l.b16 %v1448
  %v2232 = vunpack.c.h.b16 %v1448
  %v2233 = vunpack.c.l.b16 %v1449
  %v2234 = vunpack.c.h.b16 %v1449
  %v2235 = vunpack.c.l.b16 %v1450
  %v2236 = vunpack.c.h.b16 %v1450
  %v2237 = vunpack.c.l.b16 %v1451
  %v2238 = vunpack.c.h.b16 %v1451
  %v2239 = vunpack.c.l.b16 %v1452
  %v2240 = vunpack.c.h.b16 %v1452
  %v2241 = vunpack.c.l.b16 %v1453
  %v2242 = vunpack.c.h.b16 %v1453
  %v2243 = vunpack.c.l.b16 %v1454
  %v2244 = vunpack.c.h.b16 %v1454
  %v2245 = vunpack.c.l.b16 %v1455
  %v2246 = vunpack.c.h.b16 %v1455
  %v2247 = vunpack.c.l.b16 %v1456
  %v2248 = vunpack.c.h.b16 %v1456
  %v2249 = vunpack.c.l.b16 %v1457
  %v2250 = vunpack.c.h.b16 %v1457
  %v2251 = vunpack.c.l.b16 %v1458
  %v2252 = vunpack.c.h.b16 %v1458
  %v2253 = vunpack.c.l.b16 %v1459
  %v2254 = vunpack.c.h.b16 %v1459
  %v2255 = vunpack.c.l.b16 %v1460
  %v2256 = vunpack.c.h.b16 %v1460
  %v2257 = vunpack.c.l.b16 %v1461
  %v2258 = vunpack.c.h.b16 %v1461
  %v2259 = vunpack.c.l.b16 %v1462
  %v2260 = vunpack.c.h.b16 %v1462
  %v2261 = vunpack.c.l.b16 %v1463
  %v2262 = vunpack.c.h.b16 %v1463
  %v2263 = vunpack.c.l.b16 %v1464
  %v2264 = vunpack.c.h.b16 %v1464
  %v2265 = vunpack.c.l.b16 %v1465
  %v2266 = vunpack.c.h.b16 %v1465
  %v2267 = vunpack.c.l.b16 %v1466
  %v2268 = vunpack.c.h.b16 %v1466
  %v2269 = vunpack.c.l.b16 %v1467
  %v2270 = vunpack.c.h.b16 %v1467
  %v2271 = vunpack.c.l.b16 %v1468
  %v2272 = vunpack.c.h.b16 %v1468
  %v2273 = vunpack.c.l.b16 %v1469
  %v2274 = vunpack.c.h.b16 %v1469
  %v2275 = vunpack.c.l.b16 %v1470
  %v2276 = vunpack.c.h.b16 %v1470
  %v2277 = vunpack.c.l.b16 %v1471
  %v2278 = vunpack.c.h.b16 %v1471
  %v2279 = vunpack.c.l.b16 %v1472
  %v2280 = vunpack.c.h.b16 %v1472
  %v2281 = vunpack.c.l.b16 %v1473
  %v2282 = vunpack.c.h.b16 %v1473
  %v2283 = vunpack.c.l.b16 %v1474
  %v2284 = vunpack.c.h.b16 %v1474
  %v2285 = vunpack.c.l.b16 %v1475
  %v2286 = vunpack.c.h.b16 %v1475
  %v2287 = vunpack.c.l.b16 %v1476
  %v2288 = vunpack.c.h.b16 %v1476
  %v2289 = vunpack.c.l.b16 %v1477
  %v2290 = vunpack.c.h.b16 %v1477
  %v2291 = vunpack.c.l.b16 %v1478
  %v2292 = vunpack.c.h.b16 %v1478
  %v2293 = vunpack.c.l.b16 %v1479
  %v2294 = vunpack.c.h.b16 %v1479
  %v2295 = vunpack.c.l.b16 %v1480
  %v2296 = vunpack.c.h.b16 %v1480
  %v2297 = vunpack.c.l.b16 %v1481
  %v2298 = vunpack.c.h.b16 %v1481
  %v2299 = vunpack.c.l.b16 %v1482
  %v2300 = vunpack.c.h.b16 %v1482
  %v2301 = vunpack.c.l.b16 %v1483
  %v2302 = vunpack.c.h.b16 %v1483
  %v2303 = vunpack.c.l.b16 %v1484
  %v2304 = vunpack.c.h.b16 %v1484
  %v2305 = vunpack.c.l.b16 %v1485
  %v2306 = vunpack.c.h.b16 %v1485
  %v2307 = vunpack.c.l.b16 %v1486
  %v2308 = vunpack.c.h.b16 %v1486
  %v2309 = vunpack.c.l.b16 %v1487
  %v2310 = vunpack.c.h.b16 %v1487
  %v2311 = vunpack.c.l.b16 %v1488
  %v2312 = vunpack.c.h.b16 %v1488
  %v2313 = vunpack.c.l.b16 %v1489
  %v2314 = vunpack.c.h.b16 %v1489
  %v2315 = vunpack.c.l.b16 %v1490
  %v2316 = vunpack.c.h.b16 %v1490
  %v2317 = vunpack.c.l.b16 %v1491
  %v2318 = vunpack.c.h.b16 %v1491
  %v2319 = vunpack.c.l.b16 %v1492
  %v2320 = vunpack.c.h.b16 %v1492
  %v2321 = vunpack.c.l.b16 %v1493
  %v2322 = vunpack.c.h.b16 %v1493
  %v2323 = vunpack.c.l.b16 %v1494
  %v2324 = vunpack.c.h.b16 %v1494
  %v2325 = vunpack.c.l.b16 %v1495
  %v2326 = vunpack.c.h.b16 %v1495
  %v2327 = vunpack.c.l.b16 %v1496
  %v2328 = vunpack.c.h.b16 %v1496
  %v2329 = vunpack.c.l.b16 %v1497
  %v2330 = vunpack.c.h.b16 %v1497
  %v2331 = vunpack.c.l.b16 %v1498
  %v2332 = vunpack.c.h.b16 %v1498
  %v2333 = vunpack.c.l.b16 %v1499
  %v2334 = vunpack.c.h.b16 %v1499
  %v2335 = vunpack.c.l.b16 %v1500
  %v2336 = vunpack.c.h.b16 %v1500
  %v2337 = vunpack.c.l.b16 %v1501
  %v2338 = vunpack.c.h.b16 %v1501
  %v2339 = vunpack.c.l.b16 %v1502
  %v2340 = vunpack.c.h.b16 %v1502
  %v2341 = vunpack.c.l.b16 %v1503
  %v2342 = vunpack.c.h.b16 %v1503
  %v2343 = vunpack.c.l.b16 %v1504
  %v2344 = vunpack.c.h.b16 %v1504
  %v2345 = vunpack.c.l.b16 %v1505
  %v2346 = vunpack.c.h.b16 %v1505
  %v2347 = vunpack.c.l.b16 %v1506
  %v2348 = vunpack.c.h.b16 %v1506
  %v2349 = vunpack.c.l.b16 %v1507
  %v2350 = vunpack.c.h.b16 %v1507
  %v2351 = vunpack.c.l.b16 %v1508
  %v2352 = vunpack.c.h.b16 %v1508
  %v2353 = vunpack.c.l.b16 %v1509
  %v2354 = vunpack.c.h.b16 %v1509
  %v2355 = vunpack.c.l.b16 %v1510
  %v2356 = vunpack.c.h.b16 %v1510
  %v2357 = vunpack.c.l.b16 %v1511
  %v2358 = vunpack.c.h.b16 %v1511
  %v2359 = vunpack.c.l.b16 %v1512
  %v2360 = vunpack.c.h.b16 %v1512
  %v2361 = vunpack.c.l.b16 %v1513
  %v2362 = vunpack.c.h.b16 %v1513
  %v2363 = vunpack.c.l.b16 %v1514
  %v2364 = vunpack.c.h.b16 %v1514
  %v2365 = vunpack.c.l.b16 %v1515
  %v2366 = vunpack.c.h.b16 %v1515
  %v2367 = vunpack.c.l.b16 %v1516
  %v2368 = vunpack.c.h.b16 %v1516
  %v2369 = vunpack.c.l.b16 %v1517
  %v2370 = vunpack.c.h.b16 %v1517
  %v2371 = vunpack.c.l.b16 %v1518
  %v2372 = vunpack.c.h.b16 %v1518
  %v2373 = vunpack.c.l.b16 %v1519
  %v2374 = vunpack.c.h.b16 %v1519
  %v2375 = vunpack.c.l.b16 %v1520
  %v2376 = vunpack.c.h.b16 %v1520
  %v2377 = vunpack.c.l.b16 %v1521
  %v2378 = vunpack.c.h.b16 %v1521
  %v2379 = vunpack.c.l.b16 %v1522
  %v2380 = vunpack.c.h.b16 %v1522
  %v2381 = vunpack.c.l.b16 %v1523
  %v2382 = vunpack.c.h.b16 %v1523
  %v2383 = vunpack.c.l.b16 %v1524
  %v2384 = vunpack.c.h.b16 %v1524
  %v2385 = vunpack.c.l.b16 %v1525
  %v2386 = vunpack.c.h.b16 %v1525
  %v2387 = vunpack.c.l.b16 %v1526
  %v2388 = vunpack.c.h.b16 %v1526
  %v2389 = vunpack.c.l.b16 %v1527
  %v2390 = vunpack.c.h.b16 %v1527
  %v2391 = vunpack.c.l.b16 %v1528
  %v2392 = vunpack.c.h.b16 %v1528
  %v2393 = vunpack.c.l.b16 %v1529
  %v2394 = vunpack.c.h.b16 %v1529
  %v2395 = vunpack.c.l.b16 %v1530
  %v2396 = vunpack.c.h.b16 %v1530
  %v2397 = vunpack.c.l.b16 %v1531
  %v2398 = vunpack.c.h.b16 %v1531
  %v2399 = vunpack.c.l.b16 %v1532
  %v2400 = vunpack.c.h.b16 %v1532
  %v2401 = vunpack.c.l.b16 %v1533
  %v2402 = vunpack.c.h.b16 %v1533
  %v2403 = vunpack.c.l.b16 %v1534
  %v2404 = vunpack.c.h.b16 %v1534
  %v2405 = vunpack.c.l.b16 %v1535
  %v2406 = vunpack.c.h.b16 %v1535
  %v2407 = vunpack.c.l.b16 %v1536
  %v2408 = vunpack.c.h.b16 %v1536
  %v2409 = vunpack.c.l.b16 %v1537
  %v2410 = vunpack.c.h.b16 %v1537
  %v2411 = vunpack.c.l.b16 %v1538
  %v2412 = vunpack.c.h.b16 %v1538
  %v2413 = vunpack.c.l.b16 %v1539
  %v2414 = vunpack.c.h.b16 %v1539
  %v2415 = vunpack.c.l.b16 %v1540
  %v2416 = vunpack.c.h.b16 %v1540
  %v2417 = vunpack.c.l.b16 %v1541
  %v2418 = vunpack.c.h.b16 %v1541
  %v2419 = vunpack.c.l.b16 %v1542
  %v2420 = vunpack.c.h.b16 %v1542
  %v2421 = vunpack.c.l.b16 %v1543
  %v2422 = vunpack.c.h.b16 %v1543
  %v2423 = vunpack.c.l.b16 %v1544
  %v2424 = vunpack.c.h.b16 %v1544
  %v2425 = vunpack.c.l.b16 %v1545
  %v2426 = vunpack.c.h.b16 %v1545
  %v2427 = vunpack.c.l.b16 %v1546
  %v2428 = vunpack.c.h.b16 %v1546
  %v2429 = vunpack.c.l.b16 %v1547
  %v2430 = vunpack.c.h.b16 %v1547
  %v2431 = vunpack.c.l.b16 %v1548
  %v2432 = vunpack.c.h.b16 %v1548
  %v2433 = vunpack.c.l.b16 %v1549
  %v2434 = vunpack.c.h.b16 %v1549
  %v2435 = vunpack.c.l.b16 %v1550
  %v2436 = vunpack.c.h.b16 %v1550
  %v2437 = vunpack.c.l.b16 %v1551
  %v2438 = vunpack.c.h.b16 %v1551
  %v2439 = vunpack.c.l.b16 %v1552
  %v2440 = vunpack.c.h.b16 %v1552
  %v2441 = vunpack.c.l.b16 %v1553
  %v2442 = vunpack.c.h.b16 %v1553
  %v2443 = vunpack.c.l.b16 %v1554
  %v2444 = vunpack.c.h.b16 %v1554
  %v2445 = vunpack.c.l.b16 %v1555
  %v2446 = vunpack.c.h.b16 %v1555
  %v2447 = vunpack.c.l.b16 %v1556
  %v2448 = vunpack.c.h.b16 %v1556
  %v2449 = vpack.c.b16 %v1885, %v1873
  %v2450 = vpack.c.b16 %v1886, %v1874
  %v2451 = vpack.c.b16 %v1887, %v1875
  %v2452 = vpack.c.b16 %v1888, %v1876
  %v2453 = vpack.c.b16 %v1889, %v1877
  %v2454 = vpack.c.b16 %v1890, %v1878
  %v2455 = vpack.c.b16 %v1891, %v1879
  %v2456 = vpack.c.b16 %v1892, %v1880
  %v2457 = vpack.c.b16 %v1893, %v1881
  %v2458 = vpack.c.b16 %v1894, %v1882
  %v2459 = vpack.c.b16 %v1895, %v1883
  %v2460 = vpack.c.b16 %v1896, %v1884
  %v2461 = vpack.c.b16 %v1909, %v1897
  %v2462 = vpack.c.b16 %v1910, %v1898
  %v2463 = vpack.c.b16 %v1911, %v1899
  %v2464 = vpack.c.b16 %v1912, %v1900
  %v2465 = vpack.c.b16 %v1913, %v1901
  %v2466 = vpack.c.b16 %v1914, %v1902
  %v2467 = vpack.c.b16 %v1915, %v1903
  %v2468 = vpack.c.b16 %v1916, %v1904
  %v2469 = vpack.c.b16 %v1917, %v1905
  %v2470 = vpack.c.b16 %v1918, %v1906
  %v2471 = vpack.c.b16 %v1919, %v1907
  %v2472 = vpack.c.b16 %v1920, %v1908
  %v2473 = vpack.c.b16 %v1933, %v1921
  %v2474 = vpack.c.b16 %v1934, %v1922
  %v2475 = vpack.c.b16 %v1935, %v1923
  %v2476 = vpack.c.b16 %v1936, %v1924
  %v2477 = vpack.c.b16 %v1937, %v1925
  %v2478 = vpack.c.b16 %v1938, %v1926
  %v2479 = vpack.c.b16 %v1939, %v1927
  %v2480 = vpack.c.b16 %v1940, %v1928
  %v2481 = vpack.c.b16 %v1941, %v1929
  %v2482 = vpack.c.b16 %v1942, %v1930
  %v2483 = vpack.c.b16 %v1943, %v1931
  %v2484 = vpack.c.b16 %v1944, %v1932
  %v2485 = vpack.c.b16 %v1957, %v1945
  %v2486 = vpack.c.b16 %v1958, %v1946
  %v2487 = vpack.c.b16 %v1959, %v1947
  %v2488 = vpack.c.b16 %v1960, %v1948
  %v2489 = vpack.c.b16 %v1961, %v1949
  %v2490 = vpack.c.b16 %v1962, %v1950
  %v2491 = vpack.c.b16 %v1963, %v1951
  %v2492 = vpack.c.b16 %v1964, %v1952
  %v2493 = vpack.c.b16 %v1965, %v1953
  %v2494 = vpack.c.b16 %v1966, %v1954
  %v2495 = vpack.c.b16 %v1967, %v1955
  %v2496 = vpack.c.b16 %v1968, %v1956
  %v2497 = vpack.c.b16 %v1981, %v1969
  %v2498 = vpack.c.b16 %v1982, %v1970
  %v2499 = vpack.c.b16 %v1983, %v1971
  %v2500 = vpack.c.b16 %v1984, %v1972
  %v2501 = vpack.c.b16 %v1985, %v1973
  %v2502 = vpack.c.b16 %v1986, %v1974
  %v2503 = vpack.c.b16 %v1987, %v1975
  %v2504 = vpack.c.b16 %v1988, %v1976
  %v2505 = vpack.c.b16 %v1989, %v1977
  %v2506 = vpack.c.b16 %v1990, %v1978
  %v2507 = vpack.c.b16 %v1991, %v1979
  %v2508 = vpack.c.b16 %v1992, %v1980
  %v2509 = vpack.c.b16 %v2005, %v1993
  %v2510 = vpack.c.b16 %v2006, %v1994
  %v2511 = vpack.c.b16 %v2007, %v1995
  %v2512 = vpack.c.b16 %v2008, %v1996
  %v2513 = vpack.c.b16 %v2009, %v1997
  %v2514 = vpack.c.b16 %v2010, %v1998
  %v2515 = vpack.c.b16 %v2011, %v1999
  %v2516 = vpack.c.b16 %v2012, %v2000
  %v2517 = vpack.c.b16 %v2013, %v2001
  %v2518 = vpack.c.b16 %v2014, %v2002
  %v2519 = vpack.c.b16 %v2015, %v2003
  %v2520 = vpack.c.b16 %v2016, %v2004
  %v2521 = vpack.c.b16 %v2029, %v2017
  %v2522 = vpack.c.b16 %v2030, %v2018
  %v2523 = vpack.c.b16 %v2031, %v2019
  %v2524 = vpack.c.b16 %v2032, %v2020
  %v2525 = vpack.c.b16 %v2033, %v2021
  %v2526 = vpack.c.b16 %v2034, %v2022
  %v2527 = vpack.c.b16 %v2035, %v2023
  %v2528 = vpack.c.b16 %v2036, %v2024
  %v2529 = vpack.c.b16 %v2037, %v2025
  %v2530 = vpack.c.b16 %v2038, %v2026
  %v2531 = vpack.c.b16 %v2039, %v2027
  %v2532 = vpack.c.b16 %v2040, %v2028
  %v2533 = vpack.c.b16 %v2053, %v2041
  %v2534 = vpack.c.b16 %v2054, %v2042
  %v2535 = vpack.c.b16 %v2055, %v2043
  %v2536 = vpack.c.b16 %v2056, %v2044
  %v2537 = vpack.c.b16 %v2057, %v2045
  %v2538 = vpack.c.b16 %v2058, %v2046
  %v2539 = vpack.c.b16 %v2059, %v2047
  %v2540 = vpack.c.b16 %v2060, %v2048
  %v2541 = vpack.c.b16 %v2061, %v2049
  %v2542 = vpack.c.b16 %v2062, %v2050
  %v2543 = vpack.c.b16 %v2063, %v2051
  %v2544 = vpack.c.b16 %v2064, %v2052
  %v2545 = vpack.c.b16 %v2077, %v2065
  %v2546 = vpack.c.b16 %v2078, %v2066
  %v2547 = vpack.c.b16 %v2079, %v2067
  %v2548 = vpack.c.b16 %v2080, %v2068
  %v2549 = vpack.c.b16 %v2081, %v2069
  %v2550 = vpack.c.b16 %v2082, %v2070
  %v2551 = vpack.c.b16 %v2083, %v2071
  %v2552 = vpack.c.b16 %v2084, %v2072
  %v2553 = vpack.c.b16 %v2085, %v2073
  %v2554 = vpack.c.b16 %v2086, %v2074
  %v2555 = vpack.c.b16 %v2087, %v2075
  %v2556 = vpack.c.b16 %v2088, %v2076
  %v2557 = vpack.c.b16 %v2101, %v2089
  %v2558 = vpack.c.b16 %v2102, %v2090
  %v2559 = vpack.c.b16 %v2103, %v2091
  %v2560 = vpack.c.b16 %v2104, %v2092
  %v2561 = vpack.c.b16 %v2105, %v2093
  %v2562 = vpack.c.b16 %v2106, %v2094
  %v2563 = vpack.c.b16 %v2107, %v2095
  %v2564 = vpack.c.b16 %v2108, %v2096
  %v2565 = vpack.c.b16 %v2109, %v2097
  %v2566 = vpack.c.b16 %v2110, %v2098
  %v2567 = vpack.c.b16 %v2111, %v2099
  %v2568 = vpack.c.b16 %v2112, %v2100
  %v2569 = vpack.c.b16 %v2125, %v2113
  %v2570 = vpack.c.b16 %v2126, %v2114
  %v2571 = vpack.c.b16 %v2127, %v2115
  %v2572 = vpack.c.b16 %v2128, %v2116
  %v2573 = vpack.c.b16 %v2129, %v2117
  %v2574 = vpack.c.b16 %v2130, %v2118
  %v2575 = vpack.c.b16 %v2131, %v2119
  %v2576 = vpack.c.b16 %v2132, %v2120
  %v2577 = vpack.c.b16 %v2133, %v2121
  %v2578 = vpack.c.b16 %v2134, %v2122
  %v2579 = vpack.c.b16 %v2135, %v2123
  %v2580 = vpack.c.b16 %v2136, %v2124
  %v2581 = vpack.c.b16 %v2149, %v2137
  %v2582 = vpack.c.b16 %v2150, %v2138
  %v2583 = vpack.c.b16 %v2151, %v2139
  %v2584 = vpack.c.b16 %v2152, %v2140
  %v2585 = vpack.c.b16 %v2153, %v2141
  %v2586 = vpack.c.b16 %v2154, %v2142
  %v2587 = vpack.c.b16 %v2155, %v2143
  %v2588 = vpack.c.b16 %v2156, %v2144
  %v2589 = vpack.c.b16 %v2157, %v2145
  %v2590 = vpack.c.b16 %v2158, %v2146
  %v2591 = vpack.c.b16 %v2159, %v2147
  %v2592 = vpack.c.b16 %v2160, %v2148
  %v2593 = vpack.c.b16 %v2173, %v2161
  %v2594 = vpack.c.b16 %v2174, %v2162
  %v2595 = vpack.c.b16 %v2175, %v2163
  %v2596 = vpack.c.b16 %v2176, %v2164
  %v2597 = vpack.c.b16 %v2177, %v2165
  %v2598 = vpack.c.b16 %v2178, %v2166
  %v2599 = vpack.c.b16 %v2179, %v2167
  %v2600 = vpack.c.b16 %v2180, %v2168
  %v2601 = vpack.c.b16 %v2181, %v2169
  %v2602 = vpack.c.b16 %v2182, %v2170
  %v2603 = vpack.c.b16 %v2183, %v2171
  %v2604 = vpack.c.b16 %v2184, %v2172
  %v2605 = vpack.c.b16 %v2197, %v2185
  %v2606 = vpack.c.b16 %v2198, %v2186
  %v2607 = vpack.c.b16 %v2199, %v2187
  %v2608 = vpack.c.b16 %v2200, %v2188
  %v2609 = vpack.c.b16 %v2201, %v2189
  %v2610 = vpack.c.b16 %v2202, %v2190
  %v2611 = vpack.c.b16 %v2203, %v2191
  %v2612 = vpack.c.b16 %v2204, %v2192
  %v2613 = vpack.c.b16 %v2205, %v2193
  %v2614 = vpack.c.b16 %v2206, %v2194
  %v2615 = vpack.c.b16 %v2207, %v2195
  %v2616 = vpack.c.b16 %v2208, %v2196
  %v2617 = vpack.c.b16 %v2221, %v2209
  %v2618 = vpack.c.b16 %v2222, %v2210
  %v2619 = vpack.c.b16 %v2223, %v2211
  %v2620 = vpack.c.b16 %v2224, %v2212
  %v2621 = vpack.c.b16 %v2225, %v2213
  %v2622 = vpack.c.b16 %v2226, %v2214
  %v2623 = vpack.c.b16 %v2227, %v2215
  %v2624 = vpack.c.b16 %v2228, %v2216
  %v2625 = vpack.c.b16 %v2229, %v2217
  %v2626 = vpack.c.b16 %v2230, %v2218
  %v2627 = vpack.c.b16 %v2231, %v2219
  %v2628 = vpack.c.b16 %v2232, %v2220
  %v2629 = vpack.c.b16 %v2245, %v2233
  %v2630 = vpack.c.b16 %v2246, %v2234
  %v2631 = vpack.c.b16 %v2247, %v2235
  %v2632 = vpack.c.b16 %v2248, %v2236
  %v2633 = vpack.c.b16 %v2249, %v2237
  %v2634 = vpack.c.b16 %v2250, %v2238
  %v2635 = vpack.c.b16 %v2251, %v2239
  %v2636 = vpack.c.b16 %v2252, %v2240
  %v2637 = vpack.c.b16 %v2253, %v2241
  %v2638 = vpack.c.b16 %v2254, %v2242
  %v2639 = vpack.c.b16 %v2255, %v2243
  %v2640 = vpack.c.b16 %v2256, %v2244
  %v2641 = vpack.c.b16 %v2269, %v2257
  %v2642 = vpack.c.b16 %v2270, %v2258
  %v2643 = vpack.c.b16 %v2271, %v2259
  %v2644 = vpack.c.b16 %v2272, %v2260
  %v2645 = vpack.c.b16 %v2273, %v2261
  %v2646 = vpack.c.b16 %v2274, %v2262
  %v2647 = vpack.c.b16 %v2275, %v2263
  %v2648 = vpack.c.b16 %v2276, %v2264
  %v2649 = vpack.c.b16 %v2277, %v2265
  %v2650 = vpack.c.b16 %v2278, %v2266
  %v2651 = vpack.c.b16 %v2279, %v2267
  %v2652 = vpack.c.b16 %v2280, %v2268
  %v2653 = vpack.c.b16 %v2293, %v2281
  %v2654 = vpack.c.b16 %v2294, %v2282
  %v2655 = vpack.c.b16 %v2295, %v2283
  %v2656 = vpack.c.b16 %v2296, %v2284
  %v2657 = vpack.c.b16 %v2297, %v2285
  %v2658 = vpack.c.b16 %v2298, %v2286
  %v2659 = vpack.c.b16 %v2299, %v2287
  %v2660 = vpack.c.b16 %v2300, %v2288
  %v2661 = vpack.c.b16 %v2301, %v2289
  %v2662 = vpack.c.b16 %v2302, %v2290
  %v2663 = vpack.c.b16 %v2303, %v2291
  %v2664 = vpack.c.b16 %v2304, %v2292
  %v2665 = vpack.c.b16 %v2317, %v2305
  %v2666 = vpack.c.b16 %v2318, %v2306
  %v2667 = vpack.c.b16 %v2319, %v2307
  %v2668 = vpack.c.b16 %v2320, %v2308
  %v2669 = vpack.c.b16 %v2321, %v2309
  %v2670 = vpack.c.b16 %v2322, %v2310
  %v2671 = vpack.c.b16 %v2323, %v2311
  %v2672 = vpack.c.b16 %v2324, %v2312
  %v2673 = vpack.c.b16 %v2325, %v2313
  %v2674 = vpack.c.b16 %v2326, %v2314
  %v2675 = vpack.c.b16 %v2327, %v2315
  %v2676 = vpack.c.b16 %v2328, %v2316
  %v2677 = vpack.c.b16 %v2341, %v2329
  %v2678 = vpack.c.b16 %v2342, %v2330
  %v2679 = vpack.c.b16 %v2343, %v2331
  %v2680 = vpack.c.b16 %v2344, %v2332
  %v2681 = vpack.c.b16 %v2345, %v2333
  %v2682 = vpack.c.b16 %v2346, %v2334
  %v2683 = vpack.c.b16 %v2347, %v2335
  %v2684 = vpack.c.b16 %v2348, %v2336
  %v2685 = vpack.c.b16 %v2349, %v2337
  %v2686 = vpack.c.b16 %v2350, %v2338
  %v2687 = vpack.c.b16 %v2351, %v2339
  %v2688 = vpack.c.b16 %v2352, %v2340
  %v2689 = vpack.c.b16 %v2365, %v2353
  %v2690 = vpack.c.b16 %v2366, %v2354
  %v2691 = vpack.c.b16 %v2367, %v2355
  %v2692 = vpack.c.b16 %v2368, %v2356
  %v2693 = vpack.c.b16 %v2369, %v2357
  %v2694 = vpack.c.b16 %v2370, %v2358
  %v2695 = vpack.c.b16 %v2371, %v2359
  %v2696 = vpack.c.b16 %v2372, %v2360
  %v2697 = vpack.c.b16 %v2373, %v2361
  %v2698 = vpack.c.b16 %v2374, %v2362
  %v2699 = vpack.c.b16 %v2375, %v2363
  %v2700 = vpack.c.b16 %v2376, %v2364
  %v2701 = vpack.c.b16 %v2389, %v2377
  %v2702 = vpack.c.b16 %v2390, %v2378
  %v2703 = vpack.c.b16 %v2391, %v2379
  %v2704 = vpack.c.b16 %v2392, %v2380
  %v2705 = vpack.c.b16 %v2393, %v2381
  %v2706 = vpack.c.b16 %v2394, %v2382
  %v2707 = vpack.c.b16 %v2395, %v2383
  %v2708 = vpack.c.b16 %v2396, %v2384
  %v2709 = vpack.c.b16 %v2397, %v2385
  %v2710 = vpack.c.b16 %v2398, %v2386
  %v2711 = vpack.c.b16 %v2399, %v2387
  %v2712 = vpack.c.b16 %v2400, %v2388
  %v2713 = vpack.c.b16 %v2413, %v2401
  %v2714 = vpack.c.b16 %v2414, %v2402
  %v2715 = vpack.c.b16 %v2415, %v2403
  %v2716 = vpack.c.b16 %v2416, %v2404
  %v2717 = vpack.c.b16 %v2417, %v2405
  %v2718 = vpack.c.b16 %v2418, %v2406
  %v2719 = vpack.c.b16 %v2419, %v2407
  %v2720 = vpack.c.b16 %v2420, %v2408
  %v2721 = vpack.c.b16 %v2421, %v2409
  %v2722 = vpack.c.b16 %v2422, %v2410
  %v2723 = vpack.c.b16 %v2423, %v2411
  %v2724 = vpack.c.b16 %v2424, %v2412
  %v2725 = vpack.c.b16 %v2437, %v2425
  %v2726 = vpack.c.b16 %v2438, %v2426
  %v2727 = vpack.c.b16 %v2439, %v2427
  %v2728 = vpack.c.b16 %v2440, %v2428
  %v2729 = vpack.c.b16 %v2441, %v2429
  %v2730 = vpack.c.b16 %v2442, %v2430
  %v2731 = vpack.c.b16 %v2443, %v2431
  %v2732 = vpack.c.b16 %v2444, %v2432
  %v2733 = vpack.c.b16 %v2445, %v2433
  %v2734 = vpack.c.b16 %v2446, %v2434
  %v2735 = vpack.c.b16 %v2447, %v2435
  %v2736 = vpack.c.b16 %v2448, %v2436
  %3025 = vmatpush.bf16.msra.mxu0 %v2533
  %3026 = vmatpush.bf16.msra.mxu0 %v2521
  %3027 = vmatpush.bf16.msra.mxu0 %v2509
  %3028 = vmatpush.bf16.msra.mxu0 %v2497
  %3029 = vmatpush.bf16.msra.mxu0 %v2485
  %3030 = vmatpush.bf16.msra.mxu0 %v2473
  %3031 = vmatpush.bf16.msra.mxu0 %v2461
  %3032 = vmatpush.bf16.msra.mxu0 %v2449
  %3033 = vmatmul.bf16.gmra.mxu0 %v1266
  %v3034 = vpop.f32.mrf.mxu0
  %v3035 = vadd.f32 %v1561, %v3034
  %v3036 = vpop.f32.mrf.mxu0
  %3037 = vdwg.mxu0
  %3038 = vmatpush.bf16.msra.mxu0 %v2629
  %3039 = vmatpush.bf16.msra.mxu0 %v2617
  %3040 = vmatpush.bf16.msra.mxu0 %v2605
  %3041 = vmatpush.bf16.msra.mxu0 %v2593
  %3042 = vmatpush.bf16.msra.mxu0 %v2581
  %3043 = vmatpush.bf16.msra.mxu0 %v2569
  %3044 = vmatpush.bf16.msra.mxu0 %v2557
  %3045 = vmatpush.bf16.msra.mxu0 %v2545
  %3046 = vmatmul.bf16.gmra.mxu0 %v1267
  %v3047 = vpop.f32.mrf.mxu0
  %v3048 = vadd.f32 %v3035, %v3047
  %v3049 = vpop.f32.mrf.mxu0
  %3050 = vdwg.mxu0
  %3051 = vmatpush.bf16.msra.mxu0 %v2725
  %3052 = vmatpush.bf16.msra.mxu0 %v2713
  %3053 = vmatpush.bf16.msra.mxu0 %v2701
  %3054 = vmatpush.bf16.msra.mxu0 %v2689
  %3055 = vmatpush.bf16.msra.mxu0 %v2677
  %3056 = vmatpush.bf16.msra.mxu0 %v2665
  %3057 = vmatpush.bf16.msra.mxu0 %v2653
  %3058 = vmatpush.bf16.msra.mxu0 %v2641
  %3059 = vmatmul.bf16.gmra.mxu0 %v1268
  %v3060 = vpop.f32.mrf.mxu0
  %v3061 = vadd.f32 %v3048, %v3060
  %v3062 = vpop.f32.mrf.mxu0
  %3063 = vdwg.mxu0
  %3064 = vmatpush.bf16.msra.mxu0 %v2534
  %3065 = vmatpush.bf16.msra.mxu0 %v2522
  %3066 = vmatpush.bf16.msra.mxu0 %v2510
  %3067 = vmatpush.bf16.msra.mxu0 %v2498
  %3068 = vmatpush.bf16.msra.mxu0 %v2486
  %3069 = vmatpush.bf16.msra.mxu0 %v2474
  %3070 = vmatpush.bf16.msra.mxu0 %v2462
  %3071 = vmatpush.bf16.msra.mxu0 %v2450
  %3072 = vmatmul.bf16.gmra.mxu0 %v1266
  %v3073 = vpop.f32.mrf.mxu0
  %v3074 = vadd.f32 %v1562, %v3073
  %v3075 = vpop.f32.mrf.mxu0
  %3076 = vdwg.mxu0
  %3077 = vmatpush.bf16.msra.mxu0 %v2630
  %3078 = vmatpush.bf16.msra.mxu0 %v2618
  %3079 = vmatpush.bf16.msra.mxu0 %v2606
  %3080 = vmatpush.bf16.msra.mxu0 %v2594
  %3081 = vmatpush.bf16.msra.mxu0 %v2582
  %3082 = vmatpush.bf16.msra.mxu0 %v2570
  %3083 = vmatpush.bf16.msra.mxu0 %v2558
  %3084 = vmatpush.bf16.msra.mxu0 %v2546
  %3085 = vmatmul.bf16.gmra.mxu0 %v1267
  %v3086 = vpop.f32.mrf.mxu0
  %v3087 = vadd.f32 %v3074, %v3086
  %v3088 = vpop.f32.mrf.mxu0
  %3089 = vdwg.mxu0
  %3090 = vmatpush.bf16.msra.mxu0 %v2726
  %3091 = vmatpush.bf16.msra.mxu0 %v2714
  %3092 = vmatpush.bf16.msra.mxu0 %v2702
  %3093 = vmatpush.bf16.msra.mxu0 %v2690
  %3094 = vmatpush.bf16.msra.mxu0 %v2678
  %3095 = vmatpush.bf16.msra.mxu0 %v2666
  %3096 = vmatpush.bf16.msra.mxu0 %v2654
  %3097 = vmatpush.bf16.msra.mxu0 %v2642
  %3098 = vmatmul.bf16.gmra.mxu0 %v1268
  %v3099 = vpop.f32.mrf.mxu0
  %v3100 = vadd.f32 %v3087, %v3099
  %v3101 = vpop.f32.mrf.mxu0
  %3102 = vdwg.mxu0
  %3103 = vmatpush.bf16.msra.mxu0 %v2535
  %3104 = vmatpush.bf16.msra.mxu0 %v2523
  %3105 = vmatpush.bf16.msra.mxu0 %v2511
  %3106 = vmatpush.bf16.msra.mxu0 %v2499
  %3107 = vmatpush.bf16.msra.mxu0 %v2487
  %3108 = vmatpush.bf16.msra.mxu0 %v2475
  %3109 = vmatpush.bf16.msra.mxu0 %v2463
  %3110 = vmatpush.bf16.msra.mxu0 %v2451
  %3111 = vmatmul.bf16.gmra.mxu0 %v1266
  %v3112 = vpop.f32.mrf.mxu0
  %v3113 = vadd.f32 %v1563, %v3112
  %v3114 = vpop.f32.mrf.mxu0
  %3115 = vdwg.mxu0
  %3116 = vmatpush.bf16.msra.mxu0 %v2631
  %3117 = vmatpush.bf16.msra.mxu0 %v2619
  %3118 = vmatpush.bf16.msra.mxu0 %v2607
  %3119 = vmatpush.bf16.msra.mxu0 %v2595
  %3120 = vmatpush.bf16.msra.mxu0 %v2583
  %3121 = vmatpush.bf16.msra.mxu0 %v2571
  %3122 = vmatpush.bf16.msra.mxu0 %v2559
  %3123 = vmatpush.bf16.msra.mxu0 %v2547
  %3124 = vmatmul.bf16.gmra.mxu0 %v1267
  %v3125 = vpop.f32.mrf.mxu0
  %v3126 = vadd.f32 %v3113, %v3125
  %v3127 = vpop.f32.mrf.mxu0
  %3128 = vdwg.mxu0
  %3129 = vmatpush.bf16.msra.mxu0 %v2727
  %3130 = vmatpush.bf16.msra.mxu0 %v2715
  %3131 = vmatpush.bf16.msra.mxu0 %v2703
  %3132 = vmatpush.bf16.msra.mxu0 %v2691
  %3133 = vmatpush.bf16.msra.mxu0 %v2679
  %3134 = vmatpush.bf16.msra.mxu0 %v2667
  %3135 = vmatpush.bf16.msra.mxu0 %v2655
  %3136 = vmatpush.bf16.msra.mxu0 %v2643
  %3137 = vmatmul.bf16.gmra.mxu0 %v1268
  %v3138 = vpop.f32.mrf.mxu0
  %v3139 = vadd.f32 %v3126, %v3138
  %v3140 = vpop.f32.mrf.mxu0
  %3141 = vdwg.mxu0
  %3142 = vmatpush.bf16.msra.mxu0 %v2536
  %3143 = vmatpush.bf16.msra.mxu0 %v2524
  %3144 = vmatpush.bf16.msra.mxu0 %v2512
  %3145 = vmatpush.bf16.msra.mxu0 %v2500
  %3146 = vmatpush.bf16.msra.mxu0 %v2488
  %3147 = vmatpush.bf16.msra.mxu0 %v2476
  %3148 = vmatpush.bf16.msra.mxu0 %v2464
  %3149 = vmatpush.bf16.msra.mxu0 %v2452
  %3150 = vmatmul.bf16.gmra.mxu0 %v1266
  %v3151 = vpop.f32.mrf.mxu0
  %v3152 = vadd.f32 %v1564, %v3151
  %v3153 = vpop.f32.mrf.mxu0
  %3154 = vdwg.mxu0
  %3155 = vmatpush.bf16.msra.mxu0 %v2632
  %3156 = vmatpush.bf16.msra.mxu0 %v2620
  %3157 = vmatpush.bf16.msra.mxu0 %v2608
  %3158 = vmatpush.bf16.msra.mxu0 %v2596
  %3159 = vmatpush.bf16.msra.mxu0 %v2584
  %3160 = vmatpush.bf16.msra.mxu0 %v2572
  %3161 = vmatpush.bf16.msra.mxu0 %v2560
  %3162 = vmatpush.bf16.msra.mxu0 %v2548
  %3163 = vmatmul.bf16.gmra.mxu0 %v1267
  %v3164 = vpop.f32.mrf.mxu0
  %v3165 = vadd.f32 %v3152, %v3164
  %v3166 = vpop.f32.mrf.mxu0
  %3167 = vdwg.mxu0
  %3168 = vmatpush.bf16.msra.mxu0 %v2728
  %3169 = vmatpush.bf16.msra.mxu0 %v2716
  %3170 = vmatpush.bf16.msra.mxu0 %v2704
  %3171 = vmatpush.bf16.msra.mxu0 %v2692
  %3172 = vmatpush.bf16.msra.mxu0 %v2680
  %3173 = vmatpush.bf16.msra.mxu0 %v2668
  %3174 = vmatpush.bf16.msra.mxu0 %v2656
  %3175 = vmatpush.bf16.msra.mxu0 %v2644
  %3176 = vmatmul.bf16.gmra.mxu0 %v1268
  %v3177 = vpop.f32.mrf.mxu0
  %v3178 = vadd.f32 %v3165, %v3177
  %v3179 = vpop.f32.mrf.mxu0
  %3180 = vdwg.mxu0
  %3181 = vmatpush.bf16.msra.mxu0 %v2537
  %3182 = vmatpush.bf16.msra.mxu0 %v2525
  %3183 = vmatpush.bf16.msra.mxu0 %v2513
  %3184 = vmatpush.bf16.msra.mxu0 %v2501
  %3185 = vmatpush.bf16.msra.mxu0 %v2489
  %3186 = vmatpush.bf16.msra.mxu0 %v2477
  %3187 = vmatpush.bf16.msra.mxu0 %v2465
  %3188 = vmatpush.bf16.msra.mxu0 %v2453
  %3189 = vmatmul.bf16.gmra.mxu0 %v1266
  %v3190 = vpop.f32.mrf.mxu0
  %v3191 = vadd.f32 %v1565, %v3190
  %v3192 = vpop.f32.mrf.mxu0
  %3193 = vdwg.mxu0
  %3194 = vmatpush.bf16.msra.mxu0 %v2633
  %3195 = vmatpush.bf16.msra.mxu0 %v2621
  %3196 = vmatpush.bf16.msra.mxu0 %v2609
  %3197 = vmatpush.bf16.msra.mxu0 %v2597
  %3198 = vmatpush.bf16.msra.mxu0 %v2585
  %3199 = vmatpush.bf16.msra.mxu0 %v2573
  %3200 = vmatpush.bf16.msra.mxu0 %v2561
  %3201 = vmatpush.bf16.msra.mxu0 %v2549
  %3202 = vmatmul.bf16.gmra.mxu0 %v1267
  %v3203 = vpop.f32.mrf.mxu0
  %v3204 = vadd.f32 %v3191, %v3203
  %v3205 = vpop.f32.mrf.mxu0
  %3206 = vdwg.mxu0
  %3207 = vmatpush.bf16.msra.mxu0 %v2729
  %3208 = vmatpush.bf16.msra.mxu0 %v2717
  %3209 = vmatpush.bf16.msra.mxu0 %v2705
  %3210 = vmatpush.bf16.msra.mxu0 %v2693
  %3211 = vmatpush.bf16.msra.mxu0 %v2681
  %3212 = vmatpush.bf16.msra.mxu0 %v2669
  %3213 = vmatpush.bf16.msra.mxu0 %v2657
  %3214 = vmatpush.bf16.msra.mxu0 %v2645
  %3215 = vmatmul.bf16.gmra.mxu0 %v1268
  %v3216 = vpop.f32.mrf.mxu0
  %v3217 = vadd.f32 %v3204, %v3216
  %v3218 = vpop.f32.mrf.mxu0
  %3219 = vdwg.mxu0
  %3220 = vmatpush.bf16.msra.mxu0 %v2538
  %3221 = vmatpush.bf16.msra.mxu0 %v2526
  %3222 = vmatpush.bf16.msra.mxu0 %v2514
  %3223 = vmatpush.bf16.msra.mxu0 %v2502
  %3224 = vmatpush.bf16.msra.mxu0 %v2490
  %3225 = vmatpush.bf16.msra.mxu0 %v2478
  %3226 = vmatpush.bf16.msra.mxu0 %v2466
  %3227 = vmatpush.bf16.msra.mxu0 %v2454
  %3228 = vmatmul.bf16.gmra.mxu0 %v1266
  %v3229 = vpop.f32.mrf.mxu0
  %v3230 = vadd.f32 %v1566, %v3229
  %v3231 = vpop.f32.mrf.mxu0
  %3232 = vdwg.mxu0
  %3233 = vmatpush.bf16.msra.mxu0 %v2634
  %3234 = vmatpush.bf16.msra.mxu0 %v2622
  %3235 = vmatpush.bf16.msra.mxu0 %v2610
  %3236 = vmatpush.bf16.msra.mxu0 %v2598
  %3237 = vmatpush.bf16.msra.mxu0 %v2586
  %3238 = vmatpush.bf16.msra.mxu0 %v2574
  %3239 = vmatpush.bf16.msra.mxu0 %v2562
  %3240 = vmatpush.bf16.msra.mxu0 %v2550
  %3241 = vmatmul.bf16.gmra.mxu0 %v1267
  %v3242 = vpop.f32.mrf.mxu0
  %v3243 = vadd.f32 %v3230, %v3242
  %v3244 = vpop.f32.mrf.mxu0
  %3245 = vdwg.mxu0
  %3246 = vmatpush.bf16.msra.mxu0 %v2730
  %3247 = vmatpush.bf16.msra.mxu0 %v2718
  %3248 = vmatpush.bf16.msra.mxu0 %v2706
  %3249 = vmatpush.bf16.msra.mxu0 %v2694
  %3250 = vmatpush.bf16.msra.mxu0 %v2682
  %3251 = vmatpush.bf16.msra.mxu0 %v2670
  %3252 = vmatpush.bf16.msra.mxu0 %v2658
  %3253 = vmatpush.bf16.msra.mxu0 %v2646
  %3254 = vmatmul.bf16.gmra.mxu0 %v1268
  %v3255 = vpop.f32.mrf.mxu0
  %v3256 = vadd.f32 %v3243, %v3255
  %v3257 = vpop.f32.mrf.mxu0
  %3258 = vdwg.mxu0
  %3259 = vmatpush.bf16.msra.mxu0 %v2539
  %3260 = vmatpush.bf16.msra.mxu0 %v2527
  %3261 = vmatpush.bf16.msra.mxu0 %v2515
  %3262 = vmatpush.bf16.msra.mxu0 %v2503
  %3263 = vmatpush.bf16.msra.mxu0 %v2491
  %3264 = vmatpush.bf16.msra.mxu0 %v2479
  %3265 = vmatpush.bf16.msra.mxu0 %v2467
  %3266 = vmatpush.bf16.msra.mxu0 %v2455
  %3267 = vmatmul.bf16.gmra.mxu0 %v1266
  %v3268 = vpop.f32.mrf.mxu0
  %v3269 = vadd.f32 %v1567, %v3268
  %v3270 = vpop.f32.mrf.mxu0
  %3271 = vdwg.mxu0
  %3272 = vmatpush.bf16.msra.mxu0 %v2635
  %3273 = vmatpush.bf16.msra.mxu0 %v2623
  %3274 = vmatpush.bf16.msra.mxu0 %v2611
  %3275 = vmatpush.bf16.msra.mxu0 %v2599
  %3276 = vmatpush.bf16.msra.mxu0 %v2587
  %3277 = vmatpush.bf16.msra.mxu0 %v2575
  %3278 = vmatpush.bf16.msra.mxu0 %v2563
  %3279 = vmatpush.bf16.msra.mxu0 %v2551
  %3280 = vmatmul.bf16.gmra.mxu0 %v1267
  %v3281 = vpop.f32.mrf.mxu0
  %v3282 = vadd.f32 %v3269, %v3281
  %v3283 = vpop.f32.mrf.mxu0
  %3284 = vdwg.mxu0
  %3285 = vmatpush.bf16.msra.mxu0 %v2731
  %3286 = vmatpush.bf16.msra.mxu0 %v2719
  %3287 = vmatpush.bf16.msra.mxu0 %v2707
  %3288 = vmatpush.bf16.msra.mxu0 %v2695
  %3289 = vmatpush.bf16.msra.mxu0 %v2683
  %3290 = vmatpush.bf16.msra.mxu0 %v2671
  %3291 = vmatpush.bf16.msra.mxu0 %v2659
  %3292 = vmatpush.bf16.msra.mxu0 %v2647
  %3293 = vmatmul.bf16.gmra.mxu0 %v1268
  %v3294 = vpop.f32.mrf.mxu0
  %v3295 = vadd.f32 %v3282, %v3294
  %v3296 = vpop.f32.mrf.mxu0
  %3297 = vdwg.mxu0
  %3298 = vmatpush.bf16.msra.mxu0 %v2540
  %3299 = vmatpush.bf16.msra.mxu0 %v2528
  %3300 = vmatpush.bf16.msra.mxu0 %v2516
  %3301 = vmatpush.bf16.msra.mxu0 %v2504
  %3302 = vmatpush.bf16.msra.mxu0 %v2492
  %3303 = vmatpush.bf16.msra.mxu0 %v2480
  %3304 = vmatpush.bf16.msra.mxu0 %v2468
  %3305 = vmatpush.bf16.msra.mxu0 %v2456
  %3306 = vmatmul.bf16.gmra.mxu0 %v1266
  %v3307 = vpop.f32.mrf.mxu0
  %v3308 = vadd.f32 %v1568, %v3307
  %v3309 = vpop.f32.mrf.mxu0
  %3310 = vdwg.mxu0
  %3311 = vmatpush.bf16.msra.mxu0 %v2636
  %3312 = vmatpush.bf16.msra.mxu0 %v2624
  %3313 = vmatpush.bf16.msra.mxu0 %v2612
  %3314 = vmatpush.bf16.msra.mxu0 %v2600
  %3315 = vmatpush.bf16.msra.mxu0 %v2588
  %3316 = vmatpush.bf16.msra.mxu0 %v2576
  %3317 = vmatpush.bf16.msra.mxu0 %v2564
  %3318 = vmatpush.bf16.msra.mxu0 %v2552
  %3319 = vmatmul.bf16.gmra.mxu0 %v1267
  %v3320 = vpop.f32.mrf.mxu0
  %v3321 = vadd.f32 %v3308, %v3320
  %v3322 = vpop.f32.mrf.mxu0
  %3323 = vdwg.mxu0
  %3324 = vmatpush.bf16.msra.mxu0 %v2732
  %3325 = vmatpush.bf16.msra.mxu0 %v2720
  %3326 = vmatpush.bf16.msra.mxu0 %v2708
  %3327 = vmatpush.bf16.msra.mxu0 %v2696
  %3328 = vmatpush.bf16.msra.mxu0 %v2684
  %3329 = vmatpush.bf16.msra.mxu0 %v2672
  %3330 = vmatpush.bf16.msra.mxu0 %v2660
  %3331 = vmatpush.bf16.msra.mxu0 %v2648
  %3332 = vmatmul.bf16.gmra.mxu0 %v1268
  %v3333 = vpop.f32.mrf.mxu0
  %v3334 = vadd.f32 %v3321, %v3333
  %v3335 = vpop.f32.mrf.mxu0
  %3336 = vdwg.mxu0
  %3337 = vmatpush.bf16.msra.mxu0 %v2541
  %3338 = vmatpush.bf16.msra.mxu0 %v2529
  %3339 = vmatpush.bf16.msra.mxu0 %v2517
  %3340 = vmatpush.bf16.msra.mxu0 %v2505
  %3341 = vmatpush.bf16.msra.mxu0 %v2493
  %3342 = vmatpush.bf16.msra.mxu0 %v2481
  %3343 = vmatpush.bf16.msra.mxu0 %v2469
  %3344 = vmatpush.bf16.msra.mxu0 %v2457
  %3345 = vmatmul.bf16.gmra.mxu0 %v1266
  %v3346 = vpop.f32.mrf.mxu0
  %v3347 = vadd.f32 %v1569, %v3346
  %v3348 = vpop.f32.mrf.mxu0
  %3349 = vdwg.mxu0
  %3350 = vmatpush.bf16.msra.mxu0 %v2637
  %3351 = vmatpush.bf16.msra.mxu0 %v2625
  %3352 = vmatpush.bf16.msra.mxu0 %v2613
  %3353 = vmatpush.bf16.msra.mxu0 %v2601
  %3354 = vmatpush.bf16.msra.mxu0 %v2589
  %3355 = vmatpush.bf16.msra.mxu0 %v2577
  %3356 = vmatpush.bf16.msra.mxu0 %v2565
  %3357 = vmatpush.bf16.msra.mxu0 %v2553
  %3358 = vmatmul.bf16.gmra.mxu0 %v1267
  %v3359 = vpop.f32.mrf.mxu0
  %v3360 = vadd.f32 %v3347, %v3359
  %v3361 = vpop.f32.mrf.mxu0
  %3362 = vdwg.mxu0
  %3363 = vmatpush.bf16.msra.mxu0 %v2733
  %3364 = vmatpush.bf16.msra.mxu0 %v2721
  %3365 = vmatpush.bf16.msra.mxu0 %v2709
  %3366 = vmatpush.bf16.msra.mxu0 %v2697
  %3367 = vmatpush.bf16.msra.mxu0 %v2685
  %3368 = vmatpush.bf16.msra.mxu0 %v2673
  %3369 = vmatpush.bf16.msra.mxu0 %v2661
  %3370 = vmatpush.bf16.msra.mxu0 %v2649
  %3371 = vmatmul.bf16.gmra.mxu0 %v1268
  %v3372 = vpop.f32.mrf.mxu0
  %v3373 = vadd.f32 %v3360, %v3372
  %v3374 = vpop.f32.mrf.mxu0
  %3375 = vdwg.mxu0
  %3376 = vmatpush.bf16.msra.mxu0 %v2542
  %3377 = vmatpush.bf16.msra.mxu0 %v2530
  %3378 = vmatpush.bf16.msra.mxu0 %v2518
  %3379 = vmatpush.bf16.msra.mxu0 %v2506
  %3380 = vmatpush.bf16.msra.mxu0 %v2494
  %3381 = vmatpush.bf16.msra.mxu0 %v2482
  %3382 = vmatpush.bf16.msra.mxu0 %v2470
  %3383 = vmatpush.bf16.msra.mxu0 %v2458
  %3384 = vmatmul.bf16.gmra.mxu0 %v1266
  %v3385 = vpop.f32.mrf.mxu0
  %v3386 = vadd.f32 %v1570, %v3385
  %v3387 = vpop.f32.mrf.mxu0
  %3388 = vdwg.mxu0
  %3389 = vmatpush.bf16.msra.mxu0 %v2638
  %3390 = vmatpush.bf16.msra.mxu0 %v2626
  %3391 = vmatpush.bf16.msra.mxu0 %v2614
  %3392 = vmatpush.bf16.msra.mxu0 %v2602
  %3393 = vmatpush.bf16.msra.mxu0 %v2590
  %3394 = vmatpush.bf16.msra.mxu0 %v2578
  %3395 = vmatpush.bf16.msra.mxu0 %v2566
  %3396 = vmatpush.bf16.msra.mxu0 %v2554
  %3397 = vmatmul.bf16.gmra.mxu0 %v1267
  %v3398 = vpop.f32.mrf.mxu0
  %v3399 = vadd.f32 %v3386, %v3398
  %v3400 = vpop.f32.mrf.mxu0
  %3401 = vdwg.mxu0
  %3402 = vmatpush.bf16.msra.mxu0 %v2734
  %3403 = vmatpush.bf16.msra.mxu0 %v2722
  %3404 = vmatpush.bf16.msra.mxu0 %v2710
  %3405 = vmatpush.bf16.msra.mxu0 %v2698
  %3406 = vmatpush.bf16.msra.mxu0 %v2686
  %3407 = vmatpush.bf16.msra.mxu0 %v2674
  %3408 = vmatpush.bf16.msra.mxu0 %v2662
  %3409 = vmatpush.bf16.msra.mxu0 %v2650
  %3410 = vmatmul.bf16.gmra.mxu0 %v1268
  %v3411 = vpop.f32.mrf.mxu0
  %v3412 = vadd.f32 %v3399, %v3411
  %v3413 = vpop.f32.mrf.mxu0
  %3414 = vdwg.mxu0
  %3415 = vmatpush.bf16.msra.mxu0 %v2543
  %3416 = vmatpush.bf16.msra.mxu0 %v2531
  %3417 = vmatpush.bf16.msra.mxu0 %v2519
  %3418 = vmatpush.bf16.msra.mxu0 %v2507
  %3419 = vmatpush.bf16.msra.mxu0 %v2495
  %3420 = vmatpush.bf16.msra.mxu0 %v2483
  %3421 = vmatpush.bf16.msra.mxu0 %v2471
  %3422 = vmatpush.bf16.msra.mxu0 %v2459
  %3423 = vmatmul.bf16.gmra.mxu0 %v1266
  %v3424 = vpop.f32.mrf.mxu0
  %v3425 = vadd.f32 %v1571, %v3424
  %v3426 = vpop.f32.mrf.mxu0
  %3427 = vdwg.mxu0
  %3428 = vmatpush.bf16.msra.mxu0 %v2639
  %3429 = vmatpush.bf16.msra.mxu0 %v2627
  %3430 = vmatpush.bf16.msra.mxu0 %v2615
  %3431 = vmatpush.bf16.msra.mxu0 %v2603
  %3432 = vmatpush.bf16.msra.mxu0 %v2591
  %3433 = vmatpush.bf16.msra.mxu0 %v2579
  %3434 = vmatpush.bf16.msra.mxu0 %v2567
  %3435 = vmatpush.bf16.msra.mxu0 %v2555
  %3436 = vmatmul.bf16.gmra.mxu0 %v1267
  %v3437 = vpop.f32.mrf.mxu0
  %v3438 = vadd.f32 %v3425, %v3437
  %v3439 = vpop.f32.mrf.mxu0
  %3440 = vdwg.mxu0
  %3441 = vmatpush.bf16.msra.mxu0 %v2735
  %3442 = vmatpush.bf16.msra.mxu0 %v2723
  %3443 = vmatpush.bf16.msra.mxu0 %v2711
  %3444 = vmatpush.bf16.msra.mxu0 %v2699
  %3445 = vmatpush.bf16.msra.mxu0 %v2687
  %3446 = vmatpush.bf16.msra.mxu0 %v2675
  %3447 = vmatpush.bf16.msra.mxu0 %v2663
  %3448 = vmatpush.bf16.msra.mxu0 %v2651
  %3449 = vmatmul.bf16.gmra.mxu0 %v1268
  %v3450 = vpop.f32.mrf.mxu0
  %v3451 = vadd.f32 %v3438, %v3450
  %v3452 = vpop.f32.mrf.mxu0
  %3453 = vdwg.mxu0
  %3454 = vmatpush.bf16.msra.mxu0 %v2544
  %3455 = vmatpush.bf16.msra.mxu0 %v2532
  %3456 = vmatpush.bf16.msra.mxu0 %v2520
  %3457 = vmatpush.bf16.msra.mxu0 %v2508
  %3458 = vmatpush.bf16.msra.mxu0 %v2496
  %3459 = vmatpush.bf16.msra.mxu0 %v2484
  %3460 = vmatpush.bf16.msra.mxu0 %v2472
  %3461 = vmatpush.bf16.msra.mxu0 %v2460
  %3462 = vmatmul.bf16.gmra.mxu0 %v1266
  %v3463 = vpop.f32.mrf.mxu0
  %v3464 = vadd.f32 %v1572, %v3463
  %v3465 = vpop.f32.mrf.mxu0
  %3466 = vdwg.mxu0
  %3467 = vmatpush.bf16.msra.mxu0 %v2640
  %3468 = vmatpush.bf16.msra.mxu0 %v2628
  %3469 = vmatpush.bf16.msra.mxu0 %v2616
  %3470 = vmatpush.bf16.msra.mxu0 %v2604
  %3471 = vmatpush.bf16.msra.mxu0 %v2592
  %3472 = vmatpush.bf16.msra.mxu0 %v2580
  %3473 = vmatpush.bf16.msra.mxu0 %v2568
  %3474 = vmatpush.bf16.msra.mxu0 %v2556
  %3475 = vmatmul.bf16.gmra.mxu0 %v1267
  %v3476 = vpop.f32.mrf.mxu0
  %v3477 = vadd.f32 %v3464, %v3476
  %v3478 = vpop.f32.mrf.mxu0
  %3479 = vdwg.mxu0
  %3480 = vmatpush.bf16.msra.mxu0 %v2736
  %3481 = vmatpush.bf16.msra.mxu0 %v2724
  %3482 = vmatpush.bf16.msra.mxu0 %v2712
  %3483 = vmatpush.bf16.msra.mxu0 %v2700
  %3484 = vmatpush.bf16.msra.mxu0 %v2688
  %3485 = vmatpush.bf16.msra.mxu0 %v2676
  %3486 = vmatpush.bf16.msra.mxu0 %v2664
  %3487 = vmatpush.bf16.msra.mxu0 %v2652
  %3488 = vmatmul.bf16.gmra.mxu0 %v1268
  %v3489 = vpop.f32.mrf.mxu0
  %v3490 = vadd.f32 %v3477, %v3489
  %v3491 = vpop.f32.mrf.mxu0
  %3492 = vdwg.mxu0
  %v3493 = vmax.f32 %v3061, 0.0
  %v3494 = vmax.f32 %v3100, 0.0
  %v3495 = vmax.f32 %v3139, 0.0
  %v3496 = vmax.f32 %v3178, 0.0
  %v3497 = vmax.f32 %v3217, 0.0
  %v3498 = vmax.f32 %v3256, 0.0
  %v3499 = vmax.f32 %v3295, 0.0
  %v3500 = vmax.f32 %v3334, 0.0
  %v3501 = vmax.f32 %v3373, 0.0
  %v3502 = vmax.f32 %v3412, 0.0
  %v3503 = vmax.f32 %v3451, 0.0
  %v3504 = vmax.f32 %v3490, 0.0
  %v3505 = vpack.c.bf16 %v3493, %v3493
  %v3506 = vpack.c.bf16 %v3494, %v3494
  %v3507 = vpack.c.bf16 %v3495, %v3495
  %v3508 = vpack.c.bf16 %v3496, %v3496
  %v3509 = vpack.c.bf16 %v3497, %v3497
  %v3510 = vpack.c.bf16 %v3498, %v3498
  %v3511 = vpack.c.bf16 %v3499, %v3499
  %v3512 = vpack.c.bf16 %v3500, %v3500
  %v3513 = vpack.c.bf16 %v3501, %v3501
  %v3514 = vpack.c.bf16 %v3502, %v3502
  %v3515 = vpack.c.bf16 %v3503, %v3503
  %v3516 = vpack.c.bf16 %v3504, %v3504
  %v3517 = vld [vmem:[%s7] sm:$0xff]
  %v3518 = vld [vmem:[%s7 + $0x8] sm:$0xf]
  %v3519 = vld [vmem:[%s7 + $0xc] sm:$0xff]
  %v3520 = vld [vmem:[%s7 + $0x14] sm:$0xf]
  %v3521 = vld [vmem:[%s7 + $0x18] sm:$0xff]
  %v3522 = vld [vmem:[%s7 + $0x20] sm:$0xf]
  %v3523 = vld [vmem:[%s7 + $0x24] sm:$0xff]
  %v3524 = vld [vmem:[%s7 + $0x2c] sm:$0xf]
  %v3525 = vld [vmem:[%s7 + $0x30] sm:$0xff]
  %v3526 = vld [vmem:[%s7 + $0x38] sm:$0xf]
  %v3527 = vld [vmem:[%s7 + $0x3c] sm:$0xff]
  %v3528 = vld [vmem:[%s7 + $0x44] sm:$0xf]
  %v3529 = vld [vmem:[%s7 + $0x48] sm:$0xff]
  %v3530 = vld [vmem:[%s7 + $0x50] sm:$0xf]
  %v3531 = vld [vmem:[%s7 + $0x54] sm:$0xff]
  %v3532 = vld [vmem:[%s7 + $0x5c] sm:$0xf]
  %v3533 = vld [vmem:[%s7 + $0x60] sm:$0xff]
  %v3534 = vld [vmem:[%s7 + $0x68] sm:$0xf]
  %v3535 = vld [vmem:[%s7 + $0x6c] sm:$0xff]
  %v3536 = vld [vmem:[%s7 + $0x74] sm:$0xf]
  %v3537 = vld [vmem:[%s7 + $0x78] sm:$0xff]
  %v3538 = vld [vmem:[%s7 + $0x80] sm:$0xf]
  %v3539 = vld [vmem:[%s7 + $0x84] sm:$0xff]
  %v3540 = vld [vmem:[%s7 + $0x8c] sm:$0xf]
  %v3541 = vld [vmem:[%s7 + $0x90] sm:$0xff]
  %v3542 = vld [vmem:[%s7 + $0x98] sm:$0xf]
  %v3543 = vld [vmem:[%s7 + $0x9c] sm:$0xff]
  %v3544 = vld [vmem:[%s7 + $0xa4] sm:$0xf]
  %v3545 = vld [vmem:[%s7 + $0xa8] sm:$0xff]
  %v3546 = vld [vmem:[%s7 + $0xb0] sm:$0xf]
  %v3547 = vld [vmem:[%s7 + $0xb4] sm:$0xff]
  %v3548 = vld [vmem:[%s7 + $0xbc] sm:$0xf]
  %v3549 = vld [vmem:[%s7 + $0xc0] sm:$0xff]
  %v3550 = vld [vmem:[%s7 + $0xc8] sm:$0xf]
  %v3551 = vld [vmem:[%s7 + $0xcc] sm:$0xff]
  %v3552 = vld [vmem:[%s7 + $0xd4] sm:$0xf]
  %v3553 = vld [vmem:[%s7 + $0xd8] sm:$0xff]
  %v3554 = vld [vmem:[%s7 + $0xe0] sm:$0xf]
  %v3555 = vld [vmem:[%s7 + $0xe4] sm:$0xff]
  %v3556 = vld [vmem:[%s7 + $0xec] sm:$0xf]
  %v3557 = vld [vmem:[%s7 + $0xf0] sm:$0xff]
  %v3558 = vld [vmem:[%s7 + $0xf8] sm:$0xf]
  %v3559 = vld [vmem:[%s7 + $0xfc] sm:$0xff]
  %v3560 = vld [vmem:[%s7 + $0x104] sm:$0xf]
  %v3561 = vld [vmem:[%s7 + $0x108] sm:$0xff]
  %v3562 = vld [vmem:[%s7 + $0x110] sm:$0xf]
  %v3563 = vld [vmem:[%s7 + $0x114] sm:$0xff]
  %v3564 = vld [vmem:[%s7 + $0x11c] sm:$0xf]
  %v3565 = vld [vmem:[%s7 + $0x120] sm:$0xff]
  %v3566 = vld [vmem:[%s7 + $0x128] sm:$0xf]
  %v3567 = vld [vmem:[%s7 + $0x12c] sm:$0xff]
  %v3568 = vld [vmem:[%s7 + $0x134] sm:$0xf]
  %v3569 = vld [vmem:[%s7 + $0x138] sm:$0xff]
  %v3570 = vld [vmem:[%s7 + $0x140] sm:$0xf]
  %v3571 = vld [vmem:[%s7 + $0x144] sm:$0xff]
  %v3572 = vld [vmem:[%s7 + $0x14c] sm:$0xf]
  %v3573 = vld [vmem:[%s7 + $0x150] sm:$0xff]
  %v3574 = vld [vmem:[%s7 + $0x158] sm:$0xf]
  %v3575 = vld [vmem:[%s7 + $0x15c] sm:$0xff]
  %v3576 = vld [vmem:[%s7 + $0x164] sm:$0xf]
  %v3577 = vld [vmem:[%s7 + $0x168] sm:$0xff]
  %v3578 = vld [vmem:[%s7 + $0x170] sm:$0xf]
  %v3579 = vld [vmem:[%s7 + $0x174] sm:$0xff]
  %v3580 = vld [vmem:[%s7 + $0x17c] sm:$0xf]
  %v3581 = vld [vmem:[%s7 + $0x180] sm:$0xff]
  %v3582 = vld [vmem:[%s7 + $0x188] sm:$0xf]
  %v3583 = vld [vmem:[%s7 + $0x18c] sm:$0xff]
  %v3584 = vld [vmem:[%s7 + $0x194] sm:$0xf]
  %v3585 = vld [vmem:[%s7 + $0x198] sm:$0xff]
  %v3586 = vld [vmem:[%s7 + $0x1a0] sm:$0xf]
  %v3587 = vld [vmem:[%s7 + $0x1a4] sm:$0xff]
  %v3588 = vld [vmem:[%s7 + $0x1ac] sm:$0xf]
  %v3589 = vld [vmem:[%s7 + $0x1b0] sm:$0xff]
  %v3590 = vld [vmem:[%s7 + $0x1b8] sm:$0xf]
  %v3591 = vld [vmem:[%s7 + $0x1bc] sm:$0xff]
  %v3592 = vld [vmem:[%s7 + $0x1c4] sm:$0xf]
  %v3593 = vld [vmem:[%s7 + $0x1c8] sm:$0xff]
  %v3594 = vld [vmem:[%s7 + $0x1d0] sm:$0xf]
  %v3595 = vld [vmem:[%s7 + $0x1d4] sm:$0xff]
  %v3596 = vld [vmem:[%s7 + $0x1dc] sm:$0xf]
  %v3597 = vld [vmem:[%s7 + $0x1e0] sm:$0xff]
  %v3598 = vld [vmem:[%s7 + $0x1e8] sm:$0xf]
  %v3599 = vld [vmem:[%s7 + $0x1ec] sm:$0xff]
  %v3600 = vld [vmem:[%s7 + $0x1f4] sm:$0xf]
  %v3601 = vld [vmem:[%s7 + $0x1f8] sm:$0xff]
  %v3602 = vld [vmem:[%s7 + $0x200] sm:$0xf]
  %v3603 = vld [vmem:[%s7 + $0x204] sm:$0xff]
  %v3604 = vld [vmem:[%s7 + $0x20c] sm:$0xf]
  %v3605 = vld [vmem:[%s7 + $0x210] sm:$0xff]
  %v3606 = vld [vmem:[%s7 + $0x218] sm:$0xf]
  %v3607 = vld [vmem:[%s7 + $0x21c] sm:$0xff]
  %v3608 = vld [vmem:[%s7 + $0x224] sm:$0xf]
  %v3609 = vld [vmem:[%s7 + $0x228] sm:$0xff]
  %v3610 = vld [vmem:[%s7 + $0x230] sm:$0xf]
  %v3611 = vld [vmem:[%s7 + $0x234] sm:$0xff]
  %v3612 = vld [vmem:[%s7 + $0x23c] sm:$0xf]
  %v3613 = vld [vmem:[%s7 + $0x240] sm:$0xff]
  %v3614 = vld [vmem:[%s7 + $0x248] sm:$0xf]
  %v3615 = vld [vmem:[%s7 + $0x24c] sm:$0xff]
  %v3616 = vld [vmem:[%s7 + $0x254] sm:$0xf]
  %v3617 = vld [vmem:[%s7 + $0x258] sm:$0xff]
  %v3618 = vld [vmem:[%s7 + $0x260] sm:$0xf]
  %v3619 = vld [vmem:[%s7 + $0x264] sm:$0xff]
  %v3620 = vld [vmem:[%s7 + $0x26c] sm:$0xf]
  %v3621 = vld [vmem:[%s7 + $0x270] sm:$0xff]
  %v3622 = vld [vmem:[%s7 + $0x278] sm:$0xf]
  %v3623 = vld [vmem:[%s7 + $0x27c] sm:$0xff]
  %v3624 = vld [vmem:[%s7 + $0x284] sm:$0xf]
  %v3625 = vld [vmem:[%s7 + $0x288] sm:$0xff]
  %v3626 = vld [vmem:[%s7 + $0x290] sm:$0xf]
  %v3627 = vld [vmem:[%s7 + $0x294] sm:$0xff]
  %v3628 = vld [vmem:[%s7 + $0x29c] sm:$0xf]
  %v3629 = vld [vmem:[%s7 + $0x2a0] sm:$0xff]
  %v3630 = vld [vmem:[%s7 + $0x2a8] sm:$0xf]
  %v3631 = vld [vmem:[%s7 + $0x2ac] sm:$0xff]
  %v3632 = vld [vmem:[%s7 + $0x2b4] sm:$0xf]
  %v3633 = vld [vmem:[%s7 + $0x2b8] sm:$0xff]
  %v3634 = vld [vmem:[%s7 + $0x2c0] sm:$0xf]
  %v3635 = vld [vmem:[%s7 + $0x2c4] sm:$0xff]
  %v3636 = vld [vmem:[%s7 + $0x2cc] sm:$0xf]
  %v3637 = vld [vmem:[%s7 + $0x2d0] sm:$0xff]
  %v3638 = vld [vmem:[%s7 + $0x2d8] sm:$0xf]
  %v3639 = vld [vmem:[%s7 + $0x2dc] sm:$0xff]
  %v3640 = vld [vmem:[%s7 + $0x2e4] sm:$0xf]
  %v3641 = vld [vmem:[%s7 + $0x2e8] sm:$0xff]
  %v3642 = vld [vmem:[%s7 + $0x2f0] sm:$0xf]
  %v3643 = vld [vmem:[%s7 + $0x2f4] sm:$0xff]
  %v3644 = vld [vmem:[%s7 + $0x2fc] sm:$0xf]
  %v3645 = vld [vmem:[%s7 + $0x300] sm:$0xff]
  %v3646 = vld [vmem:[%s7 + $0x308] sm:$0xf]
  %v3647 = vld [vmem:[%s7 + $0x30c] sm:$0xff]
  %v3648 = vld [vmem:[%s7 + $0x314] sm:$0xf]
  %v3649 = vld [vmem:[%s7 + $0x318] sm:$0xff]
  %v3650 = vld [vmem:[%s7 + $0x320] sm:$0xf]
  %v3651 = vld [vmem:[%s7 + $0x324] sm:$0xff]
  %v3652 = vld [vmem:[%s7 + $0x32c] sm:$0xf]
  %v3653 = vld [vmem:[%s7 + $0x330] sm:$0xff]
  %v3654 = vld [vmem:[%s7 + $0x338] sm:$0xf]
  %v3655 = vld [vmem:[%s7 + $0x33c] sm:$0xff]
  %v3656 = vld [vmem:[%s7 + $0x344] sm:$0xf]
  %v3657 = vld [vmem:[%s7 + $0x348] sm:$0xff]
  %v3658 = vld [vmem:[%s7 + $0x350] sm:$0xf]
  %v3659 = vld [vmem:[%s7 + $0x354] sm:$0xff]
  %v3660 = vld [vmem:[%s7 + $0x35c] sm:$0xf]
  %v3661 = vld [vmem:[%s7 + $0x360] sm:$0xff]
  %v3662 = vld [vmem:[%s7 + $0x368] sm:$0xf]
  %v3663 = vld [vmem:[%s7 + $0x36c] sm:$0xff]
  %v3664 = vld [vmem:[%s7 + $0x374] sm:$0xf]
  %v3665 = vld [vmem:[%s7 + $0x378] sm:$0xff]
  %v3666 = vld [vmem:[%s7 + $0x380] sm:$0xf]
  %v3667 = vld [vmem:[%s7 + $0x384] sm:$0xff]
  %v3668 = vld [vmem:[%s7 + $0x38c] sm:$0xf]
  %v3669 = vld [vmem:[%s7 + $0x390] sm:$0xff]
  %v3670 = vld [vmem:[%s7 + $0x398] sm:$0xf]
  %v3671 = vld [vmem:[%s7 + $0x39c] sm:$0xff]
  %v3672 = vld [vmem:[%s7 + $0x3a4] sm:$0xf]
  %v3673 = vld [vmem:[%s7 + $0x3a8] sm:$0xff]
  %v3674 = vld [vmem:[%s7 + $0x3b0] sm:$0xf]
  %v3675 = vld [vmem:[%s7 + $0x3b4] sm:$0xff]
  %v3676 = vld [vmem:[%s7 + $0x3bc] sm:$0xf]
  %v3677 = vld [vmem:[%s7 + $0x3c0] sm:$0xff]
  %v3678 = vld [vmem:[%s7 + $0x3c8] sm:$0xf]
  %v3679 = vld [vmem:[%s7 + $0x3cc] sm:$0xff]
  %v3680 = vld [vmem:[%s7 + $0x3d4] sm:$0xf]
  %v3681 = vld [vmem:[%s7 + $0x3d8] sm:$0xff]
  %v3682 = vld [vmem:[%s7 + $0x3e0] sm:$0xf]
  %v3683 = vld [vmem:[%s7 + $0x3e4] sm:$0xff]
  %v3684 = vld [vmem:[%s7 + $0x3ec] sm:$0xf]
  %v3685 = vld [vmem:[%s7 + $0x3f0] sm:$0xff]
  %v3686 = vld [vmem:[%s7 + $0x3f8] sm:$0xf]
  %v3687 = vld [vmem:[%s7 + $0x3fc] sm:$0xff]
  %v3688 = vld [vmem:[%s7 + $0x404] sm:$0xf]
  %v3689 = vld [vmem:[%s7 + $0x408] sm:$0xff]
  %v3690 = vld [vmem:[%s7 + $0x410] sm:$0xf]
  %v3691 = vld [vmem:[%s7 + $0x414] sm:$0xff]
  %v3692 = vld [vmem:[%s7 + $0x41c] sm:$0xf]
  %v3693 = vld [vmem:[%s7 + $0x420] sm:$0xff]
  %v3694 = vld [vmem:[%s7 + $0x428] sm:$0xf]
  %v3695 = vld [vmem:[%s7 + $0x42c] sm:$0xff]
  %v3696 = vld [vmem:[%s7 + $0x434] sm:$0xf]
  %v3697 = vld [vmem:[%s7 + $0x438] sm:$0xff]
  %v3698 = vld [vmem:[%s7 + $0x440] sm:$0xf]
  %v3699 = vld [vmem:[%s7 + $0x444] sm:$0xff]
  %v3700 = vld [vmem:[%s7 + $0x44c] sm:$0xf]
  %v3701 = vld [vmem:[%s7 + $0x450] sm:$0xff]
  %v3702 = vld [vmem:[%s7 + $0x458] sm:$0xf]
  %v3703 = vld [vmem:[%s7 + $0x45c] sm:$0xff]
  %v3704 = vld [vmem:[%s7 + $0x464] sm:$0xf]
  %v3705 = vld [vmem:[%s7 + $0x468] sm:$0xff]
  %v3706 = vld [vmem:[%s7 + $0x470] sm:$0xf]
  %v3707 = vld [vmem:[%s7 + $0x474] sm:$0xff]
  %v3708 = vld [vmem:[%s7 + $0x47c] sm:$0xf]
  %v3709 = vld [vmem:[%s7 + $0x480] sm:$0xff]
  %v3710 = vld [vmem:[%s7 + $0x488] sm:$0xf]
  %v3711 = vld [vmem:[%s7 + $0x48c] sm:$0xff]
  %v3712 = vld [vmem:[%s7 + $0x494] sm:$0xf]
  %v3713 = vld [vmem:[%s7 + $0x498] sm:$0xff]
  %v3714 = vld [vmem:[%s7 + $0x4a0] sm:$0xf]
  %v3715 = vld [vmem:[%s7 + $0x4a4] sm:$0xff]
  %v3716 = vld [vmem:[%s7 + $0x4ac] sm:$0xf]
  %v3717 = vld [vmem:[%s7 + $0x4b0] sm:$0xff]
  %v3718 = vld [vmem:[%s7 + $0x4b8] sm:$0xf]
  %v3719 = vld [vmem:[%s7 + $0x4bc] sm:$0xff]
  %v3720 = vld [vmem:[%s7 + $0x4c4] sm:$0xf]
  %v3721 = vld [vmem:[%s7 + $0x4c8] sm:$0xff]
  %v3722 = vld [vmem:[%s7 + $0x4d0] sm:$0xf]
  %v3723 = vld [vmem:[%s7 + $0x4d4] sm:$0xff]
  %v3724 = vld [vmem:[%s7 + $0x4dc] sm:$0xf]
  %v3725 = vld [vmem:[%s7 + $0x4e0] sm:$0xff]
  %v3726 = vld [vmem:[%s7 + $0x4e8] sm:$0xf]
  %v3727 = vld [vmem:[%s7 + $0x4ec] sm:$0xff]
  %v3728 = vld [vmem:[%s7 + $0x4f4] sm:$0xf]
  %v3729 = vld [vmem:[%s7 + $0x4f8] sm:$0xff]
  %v3730 = vld [vmem:[%s7 + $0x500] sm:$0xf]
  %v3731 = vld [vmem:[%s7 + $0x504] sm:$0xff]
  %v3732 = vld [vmem:[%s7 + $0x50c] sm:$0xf]
  %v3733 = vld [vmem:[%s7 + $0x510] sm:$0xff]
  %v3734 = vld [vmem:[%s7 + $0x518] sm:$0xf]
  %v3735 = vld [vmem:[%s7 + $0x51c] sm:$0xff]
  %v3736 = vld [vmem:[%s7 + $0x524] sm:$0xf]
  %v3737 = vld [vmem:[%s7 + $0x528] sm:$0xff]
  %v3738 = vld [vmem:[%s7 + $0x530] sm:$0xf]
  %v3739 = vld [vmem:[%s7 + $0x534] sm:$0xff]
  %v3740 = vld [vmem:[%s7 + $0x53c] sm:$0xf]
  %v3741 = vld [vmem:[%s7 + $0x540] sm:$0xff]
  %v3742 = vld [vmem:[%s7 + $0x548] sm:$0xf]
  %v3743 = vld [vmem:[%s7 + $0x54c] sm:$0xff]
  %v3744 = vld [vmem:[%s7 + $0x554] sm:$0xf]
  %v3745 = vld [vmem:[%s7 + $0x558] sm:$0xff]
  %v3746 = vld [vmem:[%s7 + $0x560] sm:$0xf]
  %v3747 = vld [vmem:[%s7 + $0x564] sm:$0xff]
  %v3748 = vld [vmem:[%s7 + $0x56c] sm:$0xf]
  %v3749 = vld [vmem:[%s7 + $0x570] sm:$0xff]
  %v3750 = vld [vmem:[%s7 + $0x578] sm:$0xf]
  %v3751 = vld [vmem:[%s7 + $0x57c] sm:$0xff]
  %v3752 = vld [vmem:[%s7 + $0x584] sm:$0xf]
  %v3753 = vld [vmem:[%s7 + $0x588] sm:$0xff]
  %v3754 = vld [vmem:[%s7 + $0x590] sm:$0xf]
  %v3755 = vld [vmem:[%s7 + $0x594] sm:$0xff]
  %v3756 = vld [vmem:[%s7 + $0x59c] sm:$0xf]
  %v3757 = vld [vmem:[%s7 + $0x5a0] sm:$0xff]
  %v3758 = vld [vmem:[%s7 + $0x5a8] sm:$0xf]
  %v3759 = vld [vmem:[%s7 + $0x5ac] sm:$0xff]
  %v3760 = vld [vmem:[%s7 + $0x5b4] sm:$0xf]
  %v3761 = vld [vmem:[%s7 + $0x5b8] sm:$0xff]
  %v3762 = vld [vmem:[%s7 + $0x5c0] sm:$0xf]
  %v3763 = vld [vmem:[%s7 + $0x5c4] sm:$0xff]
  %v3764 = vld [vmem:[%s7 + $0x5cc] sm:$0xf]
  %v3765 = vld [vmem:[%s7 + $0x5d0] sm:$0xff]
  %v3766 = vld [vmem:[%s7 + $0x5d8] sm:$0xf]
  %v3767 = vld [vmem:[%s7 + $0x5dc] sm:$0xff]
  %v3768 = vld [vmem:[%s7 + $0x5e4] sm:$0xf]
  %v3769 = vld [vmem:[%s7 + $0x5e8] sm:$0xff]
  %v3770 = vld [vmem:[%s7 + $0x5f0] sm:$0xf]
  %v3771 = vld [vmem:[%s7 + $0x5f4] sm:$0xff]
  %v3772 = vld [vmem:[%s7 + $0x5fc] sm:$0xf]
  %v3773 = vld [vmem:[%s7 + $0x600] sm:$0xff]
  %v3774 = vld [vmem:[%s7 + $0x608] sm:$0xf]
  %v3775 = vld [vmem:[%s7 + $0x60c] sm:$0xff]
  %v3776 = vld [vmem:[%s7 + $0x614] sm:$0xf]
  %v3777 = vld [vmem:[%s7 + $0x618] sm:$0xff]
  %v3778 = vld [vmem:[%s7 + $0x620] sm:$0xf]
  %v3779 = vld [vmem:[%s7 + $0x624] sm:$0xff]
  %v3780 = vld [vmem:[%s7 + $0x62c] sm:$0xf]
  %v3781 = vld [vmem:[%s7 + $0x630] sm:$0xff]
  %v3782 = vld [vmem:[%s7 + $0x638] sm:$0xf]
  %v3783 = vld [vmem:[%s7 + $0x63c] sm:$0xff]
  %v3784 = vld [vmem:[%s7 + $0x644] sm:$0xf]
  %v3785 = vld [vmem:[%s7 + $0x648] sm:$0xff]
  %v3786 = vld [vmem:[%s7 + $0x650] sm:$0xf]
  %v3787 = vld [vmem:[%s7 + $0x654] sm:$0xff]
  %v3788 = vld [vmem:[%s7 + $0x65c] sm:$0xf]
  %v3789 = vld [vmem:[%s7 + $0x660] sm:$0xff]
  %v3790 = vld [vmem:[%s7 + $0x668] sm:$0xf]
  %v3791 = vld [vmem:[%s7 + $0x66c] sm:$0xff]
  %v3792 = vld [vmem:[%s7 + $0x674] sm:$0xf]
  %v3793 = vld [vmem:[%s7 + $0x678] sm:$0xff]
  %v3794 = vld [vmem:[%s7 + $0x680] sm:$0xf]
  %v3795 = vld [vmem:[%s7 + $0x684] sm:$0xff]
  %v3796 = vld [vmem:[%s7 + $0x68c] sm:$0xf]
  %v3797 = vld [vmem:[%s7 + $0x690] sm:$0xff]
  %v3798 = vld [vmem:[%s7 + $0x698] sm:$0xf]
  %v3799 = vld [vmem:[%s7 + $0x69c] sm:$0xff]
  %v3800 = vld [vmem:[%s7 + $0x6a4] sm:$0xf]
  %v3801 = vld [vmem:[%s7 + $0x6a8] sm:$0xff]
  %v3802 = vld [vmem:[%s7 + $0x6b0] sm:$0xf]
  %v3803 = vld [vmem:[%s7 + $0x6b4] sm:$0xff]
  %v3804 = vld [vmem:[%s7 + $0x6bc] sm:$0xf]
  %v3805 = vld [vmem:[%s7 + $0x6c0] sm:$0xff]
  %v3806 = vld [vmem:[%s7 + $0x6c8] sm:$0xf]
  %v3807 = vld [vmem:[%s7 + $0x6cc] sm:$0xff]
  %v3808 = vld [vmem:[%s7 + $0x6d4] sm:$0xf]
  %v3809 = vld [vmem:[%s7 + $0x6d8] sm:$0xff]
  %v3810 = vld [vmem:[%s7 + $0x6e0] sm:$0xf]
  %v3811 = vld [vmem:[%s7 + $0x6e4] sm:$0xff]
  %v3812 = vld [vmem:[%s7 + $0x6ec] sm:$0xf]
  %v3813 = vld [vmem:[%s7 + $0x6f0] sm:$0xff]
  %v3814 = vld [vmem:[%s7 + $0x6f8] sm:$0xf]
  %v3815 = vld [vmem:[%s7 + $0x6fc] sm:$0xff]
  %v3816 = vld [vmem:[%s7 + $0x704] sm:$0xf]
  %v3817 = vld [vmem:[%s7 + $0x708] sm:$0xff]
  %v3818 = vld [vmem:[%s7 + $0x710] sm:$0xf]
  %v3819 = vld [vmem:[%s7 + $0x714] sm:$0xff]
  %v3820 = vld [vmem:[%s7 + $0x71c] sm:$0xf]
  %v3821 = vld [vmem:[%s7 + $0x720] sm:$0xff]
  %v3822 = vld [vmem:[%s7 + $0x728] sm:$0xf]
  %v3823 = vld [vmem:[%s7 + $0x72c] sm:$0xff]
  %v3824 = vld [vmem:[%s7 + $0x734] sm:$0xf]
  %v3825 = vld [vmem:[%s7 + $0x738] sm:$0xff]
  %v3826 = vld [vmem:[%s7 + $0x740] sm:$0xf]
  %v3827 = vld [vmem:[%s7 + $0x744] sm:$0xff]
  %v3828 = vld [vmem:[%s7 + $0x74c] sm:$0xf]
  %v3829 = vld [vmem:[%s7 + $0x750] sm:$0xff]
  %v3830 = vld [vmem:[%s7 + $0x758] sm:$0xf]
  %v3831 = vld [vmem:[%s7 + $0x75c] sm:$0xff]
  %v3832 = vld [vmem:[%s7 + $0x764] sm:$0xf]
  %v3833 = vld [vmem:[%s7 + $0x768] sm:$0xff]
  %v3834 = vld [vmem:[%s7 + $0x770] sm:$0xf]
  %v3835 = vld [vmem:[%s7 + $0x774] sm:$0xff]
  %v3836 = vld [vmem:[%s7 + $0x77c] sm:$0xf]
  %v3837 = vld [vmem:[%s7 + $0x780] sm:$0xff]
  %v3838 = vld [vmem:[%s7 + $0x788] sm:$0xf]
  %v3839 = vld [vmem:[%s7 + $0x78c] sm:$0xff]
  %v3840 = vld [vmem:[%s7 + $0x794] sm:$0xf]
  %v3841 = vld [vmem:[%s7 + $0x798] sm:$0xff]
  %v3842 = vld [vmem:[%s7 + $0x7a0] sm:$0xf]
  %v3843 = vld [vmem:[%s7 + $0x7a4] sm:$0xff]
  %v3844 = vld [vmem:[%s7 + $0x7ac] sm:$0xf]
  %v3845 = vld [vmem:[%s7 + $0x7b0] sm:$0xff]
  %v3846 = vld [vmem:[%s7 + $0x7b8] sm:$0xf]
  %v3847 = vld [vmem:[%s7 + $0x7bc] sm:$0xff]
  %v3848 = vld [vmem:[%s7 + $0x7c4] sm:$0xf]
  %v3849 = vld [vmem:[%s7 + $0x7c8] sm:$0xff]
  %v3850 = vld [vmem:[%s7 + $0x7d0] sm:$0xf]
  %v3851 = vld [vmem:[%s7 + $0x7d4] sm:$0xff]
  %v3852 = vld [vmem:[%s7 + $0x7dc] sm:$0xf]
  %v3853 = vld [vmem:[%s7 + $0x7e0] sm:$0xff]
  %v3854 = vld [vmem:[%s7 + $0x7e8] sm:$0xf]
  %v3855 = vld [vmem:[%s7 + $0x7ec] sm:$0xff]
  %v3856 = vld [vmem:[%s7 + $0x7f4] sm:$0xf]
  %v3857 = vld [vmem:[%s7 + $0x7f8] sm:$0xff]
  %v3858 = vld [vmem:[%s7 + $0x800] sm:$0xf]
  %v3859 = vld [vmem:[%s7 + $0x804] sm:$0xff]
  %v3860 = vld [vmem:[%s7 + $0x80c] sm:$0xf]
  %v3861 = vld [vmem:[%s7 + $0x810] sm:$0xff]
  %v3862 = vld [vmem:[%s7 + $0x818] sm:$0xf]
  %v3863 = vld [vmem:[%s7 + $0x81c] sm:$0xff]
  %v3864 = vld [vmem:[%s7 + $0x824] sm:$0xf]
  %v3865 = vld [vmem:[%s7 + $0x828] sm:$0xff]
  %v3866 = vld [vmem:[%s7 + $0x830] sm:$0xf]
  %v3867 = vld [vmem:[%s7 + $0x834] sm:$0xff]
  %v3868 = vld [vmem:[%s7 + $0x83c] sm:$0xf]
  %v3869 = vld [vmem:[%s7 + $0x840] sm:$0xff]
  %v3870 = vld [vmem:[%s7 + $0x848] sm:$0xf]
  %v3871 = vld [vmem:[%s7 + $0x84c] sm:$0xff]
  %v3872 = vld [vmem:[%s7 + $0x854] sm:$0xf]
  %v3873 = vld [vmem:[%s7 + $0x858] sm:$0xff]
  %v3874 = vld [vmem:[%s7 + $0x860] sm:$0xf]
  %v3875 = vld [vmem:[%s7 + $0x864] sm:$0xff]
  %v3876 = vld [vmem:[%s7 + $0x86c] sm:$0xf]
  %v3877 = vld [vmem:[%s7 + $0x870] sm:$0xff]
  %v3878 = vld [vmem:[%s7 + $0x878] sm:$0xf]
  %v3879 = vld [vmem:[%s7 + $0x87c] sm:$0xff]
  %v3880 = vld [vmem:[%s7 + $0x884] sm:$0xf]
  %v3881 = vld [vmem:[%s7 + $0x888] sm:$0xff]
  %v3882 = vld [vmem:[%s7 + $0x890] sm:$0xf]
  %v3883 = vld [vmem:[%s7 + $0x894] sm:$0xff]
  %v3884 = vld [vmem:[%s7 + $0x89c] sm:$0xf]
  %v3885 = vld [vmem:[%s7 + $0x8a0] sm:$0xff]
  %v3886 = vld [vmem:[%s7 + $0x8a8] sm:$0xf]
  %v3887 = vld [vmem:[%s7 + $0x8ac] sm:$0xff]
  %v3888 = vld [vmem:[%s7 + $0x8b4] sm:$0xf]
  %v3889 = vld [vmem:[%s7 + $0x8b8] sm:$0xff]
  %v3890 = vld [vmem:[%s7 + $0x8c0] sm:$0xf]
  %v3891 = vld [vmem:[%s7 + $0x8c4] sm:$0xff]
  %v3892 = vld [vmem:[%s7 + $0x8cc] sm:$0xf]
  %v3893 = vld [vmem:[%s7 + $0x8d0] sm:$0xff]
  %v3894 = vld [vmem:[%s7 + $0x8d8] sm:$0xf]
  %v3895 = vld [vmem:[%s7 + $0x8dc] sm:$0xff]
  %v3896 = vld [vmem:[%s7 + $0x8e4] sm:$0xf]
  %v3897 = vld [vmem:[%s7 + $0x8e8] sm:$0xff]
  %v3898 = vld [vmem:[%s7 + $0x8f0] sm:$0xf]
  %v3899 = vld [vmem:[%s7 + $0x8f4] sm:$0xff]
  %v3900 = vld [vmem:[%s7 + $0x8fc] sm:$0xf]
  %v3901 = vld [vmem:[%s8] sm:$0x7]
  %v3903 = vperm.slane %v3901, 0
  %v3904 = vperm.slane %v3901, 1
  %v3905 = vperm.slane %v3901, 2
  %v4293 = vunpack.c.l.b16 %v3517
  %v4294 = vunpack.c.h.b16 %v3517
  %v4295 = vunpack.c.l.b16 %v3518
  %v4296 = vunpack.c.l.b16 %v3519
  %v4297 = vunpack.c.h.b16 %v3519
  %v4298 = vunpack.c.l.b16 %v3520
  %v4299 = vunpack.c.l.b16 %v3521
  %v4300 = vunpack.c.h.b16 %v3521
  %v4301 = vunpack.c.l.b16 %v3522
  %v4302 = vunpack.c.l.b16 %v3523
  %v4303 = vunpack.c.h.b16 %v3523
  %v4304 = vunpack.c.l.b16 %v3524
  %v4305 = vunpack.c.l.b16 %v3525
  %v4306 = vunpack.c.h.b16 %v3525
  %v4307 = vunpack.c.l.b16 %v3526
  %v4308 = vunpack.c.l.b16 %v3527
  %v4309 = vunpack.c.h.b16 %v3527
  %v4310 = vunpack.c.l.b16 %v3528
  %v4311 = vunpack.c.l.b16 %v3529
  %v4312 = vunpack.c.h.b16 %v3529
  %v4313 = vunpack.c.l.b16 %v3530
  %v4314 = vunpack.c.l.b16 %v3531
  %v4315 = vunpack.c.h.b16 %v3531
  %v4316 = vunpack.c.l.b16 %v3532
  %v4317 = vunpack.c.l.b16 %v3533
  %v4318 = vunpack.c.h.b16 %v3533
  %v4319 = vunpack.c.l.b16 %v3534
  %v4320 = vunpack.c.l.b16 %v3535
  %v4321 = vunpack.c.h.b16 %v3535
  %v4322 = vunpack.c.l.b16 %v3536
  %v4323 = vunpack.c.l.b16 %v3537
  %v4324 = vunpack.c.h.b16 %v3537
  %v4325 = vunpack.c.l.b16 %v3538
  %v4326 = vunpack.c.l.b16 %v3539
  %v4327 = vunpack.c.h.b16 %v3539
  %v4328 = vunpack.c.l.b16 %v3540
  %v4329 = vunpack.c.l.b16 %v3541
  %v4330 = vunpack.c.h.b16 %v3541
  %v4331 = vunpack.c.l.b16 %v3542
  %v4332 = vunpack.c.l.b16 %v3543
  %v4333 = vunpack.c.h.b16 %v3543
  %v4334 = vunpack.c.l.b16 %v3544
  %v4335 = vunpack.c.l.b16 %v3545
  %v4336 = vunpack.c.h.b16 %v3545
  %v4337 = vunpack.c.l.b16 %v3546
  %v4338 = vunpack.c.l.b16 %v3547
  %v4339 = vunpack.c.h.b16 %v3547
  %v4340 = vunpack.c.l.b16 %v3548
  %v4341 = vunpack.c.l.b16 %v3549
  %v4342 = vunpack.c.h.b16 %v3549
  %v4343 = vunpack.c.l.b16 %v3550
  %v4344 = vunpack.c.l.b16 %v3551
  %v4345 = vunpack.c.h.b16 %v3551
  %v4346 = vunpack.c.l.b16 %v3552
  %v4347 = vunpack.c.l.b16 %v3553
  %v4348 = vunpack.c.h.b16 %v3553
  %v4349 = vunpack.c.l.b16 %v3554
  %v4350 = vunpack.c.l.b16 %v3555
  %v4351 = vunpack.c.h.b16 %v3555
  %v4352 = vunpack.c.l.b16 %v3556
  %v4353 = vunpack.c.l.b16 %v3557
  %v4354 = vunpack.c.h.b16 %v3557
  %v4355 = vunpack.c.l.b16 %v3558
  %v4356 = vunpack.c.l.b16 %v3559
  %v4357 = vunpack.c.h.b16 %v3559
  %v4358 = vunpack.c.l.b16 %v3560
  %v4359 = vunpack.c.l.b16 %v3561
  %v4360 = vunpack.c.h.b16 %v3561
  %v4361 = vunpack.c.l.b16 %v3562
  %v4362 = vunpack.c.l.b16 %v3563
  %v4363 = vunpack.c.h.b16 %v3563
  %v4364 = vunpack.c.l.b16 %v3564
  %v4365 = vunpack.c.l.b16 %v3565
  %v4366 = vunpack.c.h.b16 %v3565
  %v4367 = vunpack.c.l.b16 %v3566
  %v4368 = vunpack.c.l.b16 %v3567
  %v4369 = vunpack.c.h.b16 %v3567
  %v4370 = vunpack.c.l.b16 %v3568
  %v4371 = vunpack.c.l.b16 %v3569
  %v4372 = vunpack.c.h.b16 %v3569
  %v4373 = vunpack.c.l.b16 %v3570
  %v4374 = vunpack.c.l.b16 %v3571
  %v4375 = vunpack.c.h.b16 %v3571
  %v4376 = vunpack.c.l.b16 %v3572
  %v4377 = vunpack.c.l.b16 %v3573
  %v4378 = vunpack.c.h.b16 %v3573
  %v4379 = vunpack.c.l.b16 %v3574
  %v4380 = vunpack.c.l.b16 %v3575
  %v4381 = vunpack.c.h.b16 %v3575
  %v4382 = vunpack.c.l.b16 %v3576
  %v4383 = vunpack.c.l.b16 %v3577
  %v4384 = vunpack.c.h.b16 %v3577
  %v4385 = vunpack.c.l.b16 %v3578
  %v4386 = vunpack.c.l.b16 %v3579
  %v4387 = vunpack.c.h.b16 %v3579
  %v4388 = vunpack.c.l.b16 %v3580
  %v4389 = vunpack.c.l.b16 %v3581
  %v4390 = vunpack.c.h.b16 %v3581
  %v4391 = vunpack.c.l.b16 %v3582
  %v4392 = vunpack.c.l.b16 %v3583
  %v4393 = vunpack.c.h.b16 %v3583
  %v4394 = vunpack.c.l.b16 %v3584
  %v4395 = vunpack.c.l.b16 %v3585
  %v4396 = vunpack.c.h.b16 %v3585
  %v4397 = vunpack.c.l.b16 %v3586
  %v4398 = vunpack.c.l.b16 %v3587
  %v4399 = vunpack.c.h.b16 %v3587
  %v4400 = vunpack.c.l.b16 %v3588
  %v4401 = vunpack.c.l.b16 %v3589
  %v4402 = vunpack.c.h.b16 %v3589
  %v4403 = vunpack.c.l.b16 %v3590
  %v4404 = vunpack.c.l.b16 %v3591
  %v4405 = vunpack.c.h.b16 %v3591
  %v4406 = vunpack.c.l.b16 %v3592
  %v4407 = vunpack.c.l.b16 %v3593
  %v4408 = vunpack.c.h.b16 %v3593
  %v4409 = vunpack.c.l.b16 %v3594
  %v4410 = vunpack.c.l.b16 %v3595
  %v4411 = vunpack.c.h.b16 %v3595
  %v4412 = vunpack.c.l.b16 %v3596
  %v4413 = vunpack.c.l.b16 %v3597
  %v4414 = vunpack.c.h.b16 %v3597
  %v4415 = vunpack.c.l.b16 %v3598
  %v4416 = vunpack.c.l.b16 %v3599
  %v4417 = vunpack.c.h.b16 %v3599
  %v4418 = vunpack.c.l.b16 %v3600
  %v4419 = vunpack.c.l.b16 %v3601
  %v4420 = vunpack.c.h.b16 %v3601
  %v4421 = vunpack.c.l.b16 %v3602
  %v4422 = vunpack.c.l.b16 %v3603
  %v4423 = vunpack.c.h.b16 %v3603
  %v4424 = vunpack.c.l.b16 %v3604
  %v4425 = vunpack.c.l.b16 %v3605
  %v4426 = vunpack.c.h.b16 %v3605
  %v4427 = vunpack.c.l.b16 %v3606
  %v4428 = vunpack.c.l.b16 %v3607
  %v4429 = vunpack.c.h.b16 %v3607
  %v4430 = vunpack.c.l.b16 %v3608
  %v4431 = vunpack.c.l.b16 %v3609
  %v4432 = vunpack.c.h.b16 %v3609
  %v4433 = vunpack.c.l.b16 %v3610
  %v4434 = vunpack.c.l.b16 %v3611
  %v4435 = vunpack.c.h.b16 %v3611
  %v4436 = vunpack.c.l.b16 %v3612
  %v4437 = vunpack.c.l.b16 %v3613
  %v4438 = vunpack.c.h.b16 %v3613
  %v4439 = vunpack.c.l.b16 %v3614
  %v4440 = vunpack.c.l.b16 %v3615
  %v4441 = vunpack.c.h.b16 %v3615
  %v4442 = vunpack.c.l.b16 %v3616
  %v4443 = vunpack.c.l.b16 %v3617
  %v4444 = vunpack.c.h.b16 %v3617
  %v4445 = vunpack.c.l.b16 %v3618
  %v4446 = vunpack.c.l.b16 %v3619
  %v4447 = vunpack.c.h.b16 %v3619
  %v4448 = vunpack.c.l.b16 %v3620
  %v4449 = vunpack.c.l.b16 %v3621
  %v4450 = vunpack.c.h.b16 %v3621
  %v4451 = vunpack.c.l.b16 %v3622
  %v4452 = vunpack.c.l.b16 %v3623
  %v4453 = vunpack.c.h.b16 %v3623
  %v4454 = vunpack.c.l.b16 %v3624
  %v4455 = vunpack.c.l.b16 %v3625
  %v4456 = vunpack.c.h.b16 %v3625
  %v4457 = vunpack.c.l.b16 %v3626
  %v4458 = vunpack.c.l.b16 %v3627
  %v4459 = vunpack.c.h.b16 %v3627
  %v4460 = vunpack.c.l.b16 %v3628
  %v4461 = vunpack.c.l.b16 %v3629
  %v4462 = vunpack.c.h.b16 %v3629
  %v4463 = vunpack.c.l.b16 %v3630
  %v4464 = vunpack.c.l.b16 %v3631
  %v4465 = vunpack.c.h.b16 %v3631
  %v4466 = vunpack.c.l.b16 %v3632
  %v4467 = vunpack.c.l.b16 %v3633
  %v4468 = vunpack.c.h.b16 %v3633
  %v4469 = vunpack.c.l.b16 %v3634
  %v4470 = vunpack.c.l.b16 %v3635
  %v4471 = vunpack.c.h.b16 %v3635
  %v4472 = vunpack.c.l.b16 %v3636
  %v4473 = vunpack.c.l.b16 %v3637
  %v4474 = vunpack.c.h.b16 %v3637
  %v4475 = vunpack.c.l.b16 %v3638
  %v4476 = vunpack.c.l.b16 %v3639
  %v4477 = vunpack.c.h.b16 %v3639
  %v4478 = vunpack.c.l.b16 %v3640
  %v4479 = vunpack.c.l.b16 %v3641
  %v4480 = vunpack.c.h.b16 %v3641
  %v4481 = vunpack.c.l.b16 %v3642
  %v4482 = vunpack.c.l.b16 %v3643
  %v4483 = vunpack.c.h.b16 %v3643
  %v4484 = vunpack.c.l.b16 %v3644
  %v4485 = vunpack.c.l.b16 %v3645
  %v4486 = vunpack.c.h.b16 %v3645
  %v4487 = vunpack.c.l.b16 %v3646
  %v4488 = vunpack.c.l.b16 %v3647
  %v4489 = vunpack.c.h.b16 %v3647
  %v4490 = vunpack.c.l.b16 %v3648
  %v4491 = vunpack.c.l.b16 %v3649
  %v4492 = vunpack.c.h.b16 %v3649
  %v4493 = vunpack.c.l.b16 %v3650
  %v4494 = vunpack.c.l.b16 %v3651
  %v4495 = vunpack.c.h.b16 %v3651
  %v4496 = vunpack.c.l.b16 %v3652
  %v4497 = vunpack.c.l.b16 %v3653
  %v4498 = vunpack.c.h.b16 %v3653
  %v4499 = vunpack.c.l.b16 %v3654
  %v4500 = vunpack.c.l.b16 %v3655
  %v4501 = vunpack.c.h.b16 %v3655
  %v4502 = vunpack.c.l.b16 %v3656
  %v4503 = vunpack.c.l.b16 %v3657
  %v4504 = vunpack.c.h.b16 %v3657
  %v4505 = vunpack.c.l.b16 %v3658
  %v4506 = vunpack.c.l.b16 %v3659
  %v4507 = vunpack.c.h.b16 %v3659
  %v4508 = vunpack.c.l.b16 %v3660
  %v4509 = vunpack.c.l.b16 %v3661
  %v4510 = vunpack.c.h.b16 %v3661
  %v4511 = vunpack.c.l.b16 %v3662
  %v4512 = vunpack.c.l.b16 %v3663
  %v4513 = vunpack.c.h.b16 %v3663
  %v4514 = vunpack.c.l.b16 %v3664
  %v4515 = vunpack.c.l.b16 %v3665
  %v4516 = vunpack.c.h.b16 %v3665
  %v4517 = vunpack.c.l.b16 %v3666
  %v4518 = vunpack.c.l.b16 %v3667
  %v4519 = vunpack.c.h.b16 %v3667
  %v4520 = vunpack.c.l.b16 %v3668
  %v4521 = vunpack.c.l.b16 %v3669
  %v4522 = vunpack.c.h.b16 %v3669
  %v4523 = vunpack.c.l.b16 %v3670
  %v4524 = vunpack.c.l.b16 %v3671
  %v4525 = vunpack.c.h.b16 %v3671
  %v4526 = vunpack.c.l.b16 %v3672
  %v4527 = vunpack.c.l.b16 %v3673
  %v4528 = vunpack.c.h.b16 %v3673
  %v4529 = vunpack.c.l.b16 %v3674
  %v4530 = vunpack.c.l.b16 %v3675
  %v4531 = vunpack.c.h.b16 %v3675
  %v4532 = vunpack.c.l.b16 %v3676
  %v4533 = vunpack.c.l.b16 %v3677
  %v4534 = vunpack.c.h.b16 %v3677
  %v4535 = vunpack.c.l.b16 %v3678
  %v4536 = vunpack.c.l.b16 %v3679
  %v4537 = vunpack.c.h.b16 %v3679
  %v4538 = vunpack.c.l.b16 %v3680
  %v4539 = vunpack.c.l.b16 %v3681
  %v4540 = vunpack.c.h.b16 %v3681
  %v4541 = vunpack.c.l.b16 %v3682
  %v4542 = vunpack.c.l.b16 %v3683
  %v4543 = vunpack.c.h.b16 %v3683
  %v4544 = vunpack.c.l.b16 %v3684
  %v4545 = vunpack.c.l.b16 %v3685
  %v4546 = vunpack.c.h.b16 %v3685
  %v4547 = vunpack.c.l.b16 %v3686
  %v4548 = vunpack.c.l.b16 %v3687
  %v4549 = vunpack.c.h.b16 %v3687
  %v4550 = vunpack.c.l.b16 %v3688
  %v4551 = vunpack.c.l.b16 %v3689
  %v4552 = vunpack.c.h.b16 %v3689
  %v4553 = vunpack.c.l.b16 %v3690
  %v4554 = vunpack.c.l.b16 %v3691
  %v4555 = vunpack.c.h.b16 %v3691
  %v4556 = vunpack.c.l.b16 %v3692
  %v4557 = vunpack.c.l.b16 %v3693
  %v4558 = vunpack.c.h.b16 %v3693
  %v4559 = vunpack.c.l.b16 %v3694
  %v4560 = vunpack.c.l.b16 %v3695
  %v4561 = vunpack.c.h.b16 %v3695
  %v4562 = vunpack.c.l.b16 %v3696
  %v4563 = vunpack.c.l.b16 %v3697
  %v4564 = vunpack.c.h.b16 %v3697
  %v4565 = vunpack.c.l.b16 %v3698
  %v4566 = vunpack.c.l.b16 %v3699
  %v4567 = vunpack.c.h.b16 %v3699
  %v4568 = vunpack.c.l.b16 %v3700
  %v4569 = vunpack.c.l.b16 %v3701
  %v4570 = vunpack.c.h.b16 %v3701
  %v4571 = vunpack.c.l.b16 %v3702
  %v4572 = vunpack.c.l.b16 %v3703
  %v4573 = vunpack.c.h.b16 %v3703
  %v4574 = vunpack.c.l.b16 %v3704
  %v4575 = vunpack.c.l.b16 %v3705
  %v4576 = vunpack.c.h.b16 %v3705
  %v4577 = vunpack.c.l.b16 %v3706
  %v4578 = vunpack.c.l.b16 %v3707
  %v4579 = vunpack.c.h.b16 %v3707
  %v4580 = vunpack.c.l.b16 %v3708
  %v4581 = vunpack.c.l.b16 %v3709
  %v4582 = vunpack.c.h.b16 %v3709
  %v4583 = vunpack.c.l.b16 %v3710
  %v4584 = vunpack.c.l.b16 %v3711
  %v4585 = vunpack.c.h.b16 %v3711
  %v4586 = vunpack.c.l.b16 %v3712
  %v4587 = vunpack.c.l.b16 %v3713
  %v4588 = vunpack.c.h.b16 %v3713
  %v4589 = vunpack.c.l.b16 %v3714
  %v4590 = vunpack.c.l.b16 %v3715
  %v4591 = vunpack.c.h.b16 %v3715
  %v4592 = vunpack.c.l.b16 %v3716
  %v4593 = vunpack.c.l.b16 %v3717
  %v4594 = vunpack.c.h.b16 %v3717
  %v4595 = vunpack.c.l.b16 %v3718
  %v4596 = vunpack.c.l.b16 %v3719
  %v4597 = vunpack.c.h.b16 %v3719
  %v4598 = vunpack.c.l.b16 %v3720
  %v4599 = vunpack.c.l.b16 %v3721
  %v4600 = vunpack.c.h.b16 %v3721
  %v4601 = vunpack.c.l.b16 %v3722
  %v4602 = vunpack.c.l.b16 %v3723
  %v4603 = vunpack.c.h.b16 %v3723
  %v4604 = vunpack.c.l.b16 %v3724
  %v4605 = vunpack.c.l.b16 %v3725
  %v4606 = vunpack.c.h.b16 %v3725
  %v4607 = vunpack.c.l.b16 %v3726
  %v4608 = vunpack.c.l.b16 %v3727
  %v4609 = vunpack.c.h.b16 %v3727
  %v4610 = vunpack.c.l.b16 %v3728
  %v4611 = vunpack.c.l.b16 %v3729
  %v4612 = vunpack.c.h.b16 %v3729
  %v4613 = vunpack.c.l.b16 %v3730
  %v4614 = vunpack.c.l.b16 %v3731
  %v4615 = vunpack.c.h.b16 %v3731
  %v4616 = vunpack.c.l.b16 %v3732
  %v4617 = vunpack.c.l.b16 %v3733
  %v4618 = vunpack.c.h.b16 %v3733
  %v4619 = vunpack.c.l.b16 %v3734
  %v4620 = vunpack.c.l.b16 %v3735
  %v4621 = vunpack.c.h.b16 %v3735
  %v4622 = vunpack.c.l.b16 %v3736
  %v4623 = vunpack.c.l.b16 %v3737
  %v4624 = vunpack.c.h.b16 %v3737
  %v4625 = vunpack.c.l.b16 %v3738
  %v4626 = vunpack.c.l.b16 %v3739
  %v4627 = vunpack.c.h.b16 %v3739
  %v4628 = vunpack.c.l.b16 %v3740
  %v4629 = vunpack.c.l.b16 %v3741
  %v4630 = vunpack.c.h.b16 %v3741
  %v4631 = vunpack.c.l.b16 %v3742
  %v4632 = vunpack.c.l.b16 %v3743
  %v4633 = vunpack.c.h.b16 %v3743
  %v4634 = vunpack.c.l.b16 %v3744
  %v4635 = vunpack.c.l.b16 %v3745
  %v4636 = vunpack.c.h.b16 %v3745
  %v4637 = vunpack.c.l.b16 %v3746
  %v4638 = vunpack.c.l.b16 %v3747
  %v4639 = vunpack.c.h.b16 %v3747
  %v4640 = vunpack.c.l.b16 %v3748
  %v4641 = vunpack.c.l.b16 %v3749
  %v4642 = vunpack.c.h.b16 %v3749
  %v4643 = vunpack.c.l.b16 %v3750
  %v4644 = vunpack.c.l.b16 %v3751
  %v4645 = vunpack.c.h.b16 %v3751
  %v4646 = vunpack.c.l.b16 %v3752
  %v4647 = vunpack.c.l.b16 %v3753
  %v4648 = vunpack.c.h.b16 %v3753
  %v4649 = vunpack.c.l.b16 %v3754
  %v4650 = vunpack.c.l.b16 %v3755
  %v4651 = vunpack.c.h.b16 %v3755
  %v4652 = vunpack.c.l.b16 %v3756
  %v4653 = vunpack.c.l.b16 %v3757
  %v4654 = vunpack.c.h.b16 %v3757
  %v4655 = vunpack.c.l.b16 %v3758
  %v4656 = vunpack.c.l.b16 %v3759
  %v4657 = vunpack.c.h.b16 %v3759
  %v4658 = vunpack.c.l.b16 %v3760
  %v4659 = vunpack.c.l.b16 %v3761
  %v4660 = vunpack.c.h.b16 %v3761
  %v4661 = vunpack.c.l.b16 %v3762
  %v4662 = vunpack.c.l.b16 %v3763
  %v4663 = vunpack.c.h.b16 %v3763
  %v4664 = vunpack.c.l.b16 %v3764
  %v4665 = vunpack.c.l.b16 %v3765
  %v4666 = vunpack.c.h.b16 %v3765
  %v4667 = vunpack.c.l.b16 %v3766
  %v4668 = vunpack.c.l.b16 %v3767
  %v4669 = vunpack.c.h.b16 %v3767
  %v4670 = vunpack.c.l.b16 %v3768
  %v4671 = vunpack.c.l.b16 %v3769
  %v4672 = vunpack.c.h.b16 %v3769
  %v4673 = vunpack.c.l.b16 %v3770
  %v4674 = vunpack.c.l.b16 %v3771
  %v4675 = vunpack.c.h.b16 %v3771
  %v4676 = vunpack.c.l.b16 %v3772
  %v4677 = vunpack.c.l.b16 %v3773
  %v4678 = vunpack.c.h.b16 %v3773
  %v4679 = vunpack.c.l.b16 %v3774
  %v4680 = vunpack.c.l.b16 %v3775
  %v4681 = vunpack.c.h.b16 %v3775
  %v4682 = vunpack.c.l.b16 %v3776
  %v4683 = vunpack.c.l.b16 %v3777
  %v4684 = vunpack.c.h.b16 %v3777
  %v4685 = vunpack.c.l.b16 %v3778
  %v4686 = vunpack.c.l.b16 %v3779
  %v4687 = vunpack.c.h.b16 %v3779
  %v4688 = vunpack.c.l.b16 %v3780
  %v4689 = vunpack.c.l.b16 %v3781
  %v4690 = vunpack.c.h.b16 %v3781
  %v4691 = vunpack.c.l.b16 %v3782
  %v4692 = vunpack.c.l.b16 %v3783
  %v4693 = vunpack.c.h.b16 %v3783
  %v4694 = vunpack.c.l.b16 %v3784
  %v4695 = vunpack.c.l.b16 %v3785
  %v4696 = vunpack.c.h.b16 %v3785
  %v4697 = vunpack.c.l.b16 %v3786
  %v4698 = vunpack.c.l.b16 %v3787
  %v4699 = vunpack.c.h.b16 %v3787
  %v4700 = vunpack.c.l.b16 %v3788
  %v4701 = vunpack.c.l.b16 %v3789
  %v4702 = vunpack.c.h.b16 %v3789
  %v4703 = vunpack.c.l.b16 %v3790
  %v4704 = vunpack.c.l.b16 %v3791
  %v4705 = vunpack.c.h.b16 %v3791
  %v4706 = vunpack.c.l.b16 %v3792
  %v4707 = vunpack.c.l.b16 %v3793
  %v4708 = vunpack.c.h.b16 %v3793
  %v4709 = vunpack.c.l.b16 %v3794
  %v4710 = vunpack.c.l.b16 %v3795
  %v4711 = vunpack.c.h.b16 %v3795
  %v4712 = vunpack.c.l.b16 %v3796
  %v4713 = vunpack.c.l.b16 %v3797
  %v4714 = vunpack.c.h.b16 %v3797
  %v4715 = vunpack.c.l.b16 %v3798
  %v4716 = vunpack.c.l.b16 %v3799
  %v4717 = vunpack.c.h.b16 %v3799
  %v4718 = vunpack.c.l.b16 %v3800
  %v4719 = vunpack.c.l.b16 %v3801
  %v4720 = vunpack.c.h.b16 %v3801
  %v4721 = vunpack.c.l.b16 %v3802
  %v4722 = vunpack.c.l.b16 %v3803
  %v4723 = vunpack.c.h.b16 %v3803
  %v4724 = vunpack.c.l.b16 %v3804
  %v4725 = vunpack.c.l.b16 %v3805
  %v4726 = vunpack.c.h.b16 %v3805
  %v4727 = vunpack.c.l.b16 %v3806
  %v4728 = vunpack.c.l.b16 %v3807
  %v4729 = vunpack.c.h.b16 %v3807
  %v4730 = vunpack.c.l.b16 %v3808
  %v4731 = vunpack.c.l.b16 %v3809
  %v4732 = vunpack.c.h.b16 %v3809
  %v4733 = vunpack.c.l.b16 %v3810
  %v4734 = vunpack.c.l.b16 %v3811
  %v4735 = vunpack.c.h.b16 %v3811
  %v4736 = vunpack.c.l.b16 %v3812
  %v4737 = vunpack.c.l.b16 %v3813
  %v4738 = vunpack.c.h.b16 %v3813
  %v4739 = vunpack.c.l.b16 %v3814
  %v4740 = vunpack.c.l.b16 %v3815
  %v4741 = vunpack.c.h.b16 %v3815
  %v4742 = vunpack.c.l.b16 %v3816
  %v4743 = vunpack.c.l.b16 %v3817
  %v4744 = vunpack.c.h.b16 %v3817
  %v4745 = vunpack.c.l.b16 %v3818
  %v4746 = vunpack.c.l.b16 %v3819
  %v4747 = vunpack.c.h.b16 %v3819
  %v4748 = vunpack.c.l.b16 %v3820
  %v4749 = vunpack.c.l.b16 %v3821
  %v4750 = vunpack.c.h.b16 %v3821
  %v4751 = vunpack.c.l.b16 %v3822
  %v4752 = vunpack.c.l.b16 %v3823
  %v4753 = vunpack.c.h.b16 %v3823
  %v4754 = vunpack.c.l.b16 %v3824
  %v4755 = vunpack.c.l.b16 %v3825
  %v4756 = vunpack.c.h.b16 %v3825
  %v4757 = vunpack.c.l.b16 %v3826
  %v4758 = vunpack.c.l.b16 %v3827
  %v4759 = vunpack.c.h.b16 %v3827
  %v4760 = vunpack.c.l.b16 %v3828
  %v4761 = vunpack.c.l.b16 %v3829
  %v4762 = vunpack.c.h.b16 %v3829
  %v4763 = vunpack.c.l.b16 %v3830
  %v4764 = vunpack.c.l.b16 %v3831
  %v4765 = vunpack.c.h.b16 %v3831
  %v4766 = vunpack.c.l.b16 %v3832
  %v4767 = vunpack.c.l.b16 %v3833
  %v4768 = vunpack.c.h.b16 %v3833
  %v4769 = vunpack.c.l.b16 %v3834
  %v4770 = vunpack.c.l.b16 %v3835
  %v4771 = vunpack.c.h.b16 %v3835
  %v4772 = vunpack.c.l.b16 %v3836
  %v4773 = vunpack.c.l.b16 %v3837
  %v4774 = vunpack.c.h.b16 %v3837
  %v4775 = vunpack.c.l.b16 %v3838
  %v4776 = vunpack.c.l.b16 %v3839
  %v4777 = vunpack.c.h.b16 %v3839
  %v4778 = vunpack.c.l.b16 %v3840
  %v4779 = vunpack.c.l.b16 %v3841
  %v4780 = vunpack.c.h.b16 %v3841
  %v4781 = vunpack.c.l.b16 %v3842
  %v4782 = vunpack.c.l.b16 %v3843
  %v4783 = vunpack.c.h.b16 %v3843
  %v4784 = vunpack.c.l.b16 %v3844
  %v4785 = vunpack.c.l.b16 %v3845
  %v4786 = vunpack.c.h.b16 %v3845
  %v4787 = vunpack.c.l.b16 %v3846
  %v4788 = vunpack.c.l.b16 %v3847
  %v4789 = vunpack.c.h.b16 %v3847
  %v4790 = vunpack.c.l.b16 %v3848
  %v4791 = vunpack.c.l.b16 %v3849
  %v4792 = vunpack.c.h.b16 %v3849
  %v4793 = vunpack.c.l.b16 %v3850
  %v4794 = vunpack.c.l.b16 %v3851
  %v4795 = vunpack.c.h.b16 %v3851
  %v4796 = vunpack.c.l.b16 %v3852
  %v4797 = vunpack.c.l.b16 %v3853
  %v4798 = vunpack.c.h.b16 %v3853
  %v4799 = vunpack.c.l.b16 %v3854
  %v4800 = vunpack.c.l.b16 %v3855
  %v4801 = vunpack.c.h.b16 %v3855
  %v4802 = vunpack.c.l.b16 %v3856
  %v4803 = vunpack.c.l.b16 %v3857
  %v4804 = vunpack.c.h.b16 %v3857
  %v4805 = vunpack.c.l.b16 %v3858
  %v4806 = vunpack.c.l.b16 %v3859
  %v4807 = vunpack.c.h.b16 %v3859
  %v4808 = vunpack.c.l.b16 %v3860
  %v4809 = vunpack.c.l.b16 %v3861
  %v4810 = vunpack.c.h.b16 %v3861
  %v4811 = vunpack.c.l.b16 %v3862
  %v4812 = vunpack.c.l.b16 %v3863
  %v4813 = vunpack.c.h.b16 %v3863
  %v4814 = vunpack.c.l.b16 %v3864
  %v4815 = vunpack.c.l.b16 %v3865
  %v4816 = vunpack.c.h.b16 %v3865
  %v4817 = vunpack.c.l.b16 %v3866
  %v4818 = vunpack.c.l.b16 %v3867
  %v4819 = vunpack.c.h.b16 %v3867
  %v4820 = vunpack.c.l.b16 %v3868
  %v4821 = vunpack.c.l.b16 %v3869
  %v4822 = vunpack.c.h.b16 %v3869
  %v4823 = vunpack.c.l.b16 %v3870
  %v4824 = vunpack.c.l.b16 %v3871
  %v4825 = vunpack.c.h.b16 %v3871
  %v4826 = vunpack.c.l.b16 %v3872
  %v4827 = vunpack.c.l.b16 %v3873
  %v4828 = vunpack.c.h.b16 %v3873
  %v4829 = vunpack.c.l.b16 %v3874
  %v4830 = vunpack.c.l.b16 %v3875
  %v4831 = vunpack.c.h.b16 %v3875
  %v4832 = vunpack.c.l.b16 %v3876
  %v4833 = vunpack.c.l.b16 %v3877
  %v4834 = vunpack.c.h.b16 %v3877
  %v4835 = vunpack.c.l.b16 %v3878
  %v4836 = vunpack.c.l.b16 %v3879
  %v4837 = vunpack.c.h.b16 %v3879
  %v4838 = vunpack.c.l.b16 %v3880
  %v4839 = vunpack.c.l.b16 %v3881
  %v4840 = vunpack.c.h.b16 %v3881
  %v4841 = vunpack.c.l.b16 %v3882
  %v4842 = vunpack.c.l.b16 %v3883
  %v4843 = vunpack.c.h.b16 %v3883
  %v4844 = vunpack.c.l.b16 %v3884
  %v4845 = vunpack.c.l.b16 %v3885
  %v4846 = vunpack.c.h.b16 %v3885
  %v4847 = vunpack.c.l.b16 %v3886
  %v4848 = vunpack.c.l.b16 %v3887
  %v4849 = vunpack.c.h.b16 %v3887
  %v4850 = vunpack.c.l.b16 %v3888
  %v4851 = vunpack.c.l.b16 %v3889
  %v4852 = vunpack.c.h.b16 %v3889
  %v4853 = vunpack.c.l.b16 %v3890
  %v4854 = vunpack.c.l.b16 %v3891
  %v4855 = vunpack.c.h.b16 %v3891
  %v4856 = vunpack.c.l.b16 %v3892
  %v4857 = vunpack.c.l.b16 %v3893
  %v4858 = vunpack.c.h.b16 %v3893
  %v4859 = vunpack.c.l.b16 %v3894
  %v4860 = vunpack.c.l.b16 %v3895
  %v4861 = vunpack.c.h.b16 %v3895
  %v4862 = vunpack.c.l.b16 %v3896
  %v4863 = vunpack.c.l.b16 %v3897
  %v4864 = vunpack.c.h.b16 %v3897
  %v4865 = vunpack.c.l.b16 %v3898
  %v4866 = vunpack.c.l.b16 %v3899
  %v4867 = vunpack.c.h.b16 %v3899
  %v4868 = vunpack.c.l.b16 %v3900
  %v4869 = vpack.c.b16 %v4296, %v4293
  %v4870 = vpack.c.b16 %v4297, %v4294
  %v4871 = vpack.c.b16 %v4298, %v4295
  %v4872 = vpack.c.b16 %v4302, %v4299
  %v4873 = vpack.c.b16 %v4303, %v4300
  %v4874 = vpack.c.b16 %v4304, %v4301
  %v4875 = vpack.c.b16 %v4308, %v4305
  %v4876 = vpack.c.b16 %v4309, %v4306
  %v4877 = vpack.c.b16 %v4310, %v4307
  %v4878 = vpack.c.b16 %v4314, %v4311
  %v4879 = vpack.c.b16 %v4315, %v4312
  %v4880 = vpack.c.b16 %v4316, %v4313
  %v4881 = vpack.c.b16 %v4320, %v4317
  %v4882 = vpack.c.b16 %v4321, %v4318
  %v4883 = vpack.c.b16 %v4322, %v4319
  %v4884 = vpack.c.b16 %v4326, %v4323
  %v4885 = vpack.c.b16 %v4327, %v4324
  %v4886 = vpack.c.b16 %v4328, %v4325
  %v4887 = vpack.c.b16 %v4332, %v4329
  %v4888 = vpack.c.b16 %v4333, %v4330
  %v4889 = vpack.c.b16 %v4334, %v4331
  %v4890 = vpack.c.b16 %v4338, %v4335
  %v4891 = vpack.c.b16 %v4339, %v4336
  %v4892 = vpack.c.b16 %v4340, %v4337
  %v4893 = vpack.c.b16 %v4344, %v4341
  %v4894 = vpack.c.b16 %v4345, %v4342
  %v4895 = vpack.c.b16 %v4346, %v4343
  %v4896 = vpack.c.b16 %v4350, %v4347
  %v4897 = vpack.c.b16 %v4351, %v4348
  %v4898 = vpack.c.b16 %v4352, %v4349
  %v4899 = vpack.c.b16 %v4356, %v4353
  %v4900 = vpack.c.b16 %v4357, %v4354
  %v4901 = vpack.c.b16 %v4358, %v4355
  %v4902 = vpack.c.b16 %v4362, %v4359
  %v4903 = vpack.c.b16 %v4363, %v4360
  %v4904 = vpack.c.b16 %v4364, %v4361
  %v4905 = vpack.c.b16 %v4368, %v4365
  %v4906 = vpack.c.b16 %v4369, %v4366
  %v4907 = vpack.c.b16 %v4370, %v4367
  %v4908 = vpack.c.b16 %v4374, %v4371
  %v4909 = vpack.c.b16 %v4375, %v4372
  %v4910 = vpack.c.b16 %v4376, %v4373
  %v4911 = vpack.c.b16 %v4380, %v4377
  %v4912 = vpack.c.b16 %v4381, %v4378
  %v4913 = vpack.c.b16 %v4382, %v4379
  %v4914 = vpack.c.b16 %v4386, %v4383
  %v4915 = vpack.c.b16 %v4387, %v4384
  %v4916 = vpack.c.b16 %v4388, %v4385
  %v4917 = vpack.c.b16 %v4392, %v4389
  %v4918 = vpack.c.b16 %v4393, %v4390
  %v4919 = vpack.c.b16 %v4394, %v4391
  %v4920 = vpack.c.b16 %v4398, %v4395
  %v4921 = vpack.c.b16 %v4399, %v4396
  %v4922 = vpack.c.b16 %v4400, %v4397
  %v4923 = vpack.c.b16 %v4404, %v4401
  %v4924 = vpack.c.b16 %v4405, %v4402
  %v4925 = vpack.c.b16 %v4406, %v4403
  %v4926 = vpack.c.b16 %v4410, %v4407
  %v4927 = vpack.c.b16 %v4411, %v4408
  %v4928 = vpack.c.b16 %v4412, %v4409
  %v4929 = vpack.c.b16 %v4416, %v4413
  %v4930 = vpack.c.b16 %v4417, %v4414
  %v4931 = vpack.c.b16 %v4418, %v4415
  %v4932 = vpack.c.b16 %v4422, %v4419
  %v4933 = vpack.c.b16 %v4423, %v4420
  %v4934 = vpack.c.b16 %v4424, %v4421
  %v4935 = vpack.c.b16 %v4428, %v4425
  %v4936 = vpack.c.b16 %v4429, %v4426
  %v4937 = vpack.c.b16 %v4430, %v4427
  %v4938 = vpack.c.b16 %v4434, %v4431
  %v4939 = vpack.c.b16 %v4435, %v4432
  %v4940 = vpack.c.b16 %v4436, %v4433
  %v4941 = vpack.c.b16 %v4440, %v4437
  %v4942 = vpack.c.b16 %v4441, %v4438
  %v4943 = vpack.c.b16 %v4442, %v4439
  %v4944 = vpack.c.b16 %v4446, %v4443
  %v4945 = vpack.c.b16 %v4447, %v4444
  %v4946 = vpack.c.b16 %v4448, %v4445
  %v4947 = vpack.c.b16 %v4452, %v4449
  %v4948 = vpack.c.b16 %v4453, %v4450
  %v4949 = vpack.c.b16 %v4454, %v4451
  %v4950 = vpack.c.b16 %v4458, %v4455
  %v4951 = vpack.c.b16 %v4459, %v4456
  %v4952 = vpack.c.b16 %v4460, %v4457
  %v4953 = vpack.c.b16 %v4464, %v4461
  %v4954 = vpack.c.b16 %v4465, %v4462
  %v4955 = vpack.c.b16 %v4466, %v4463
  %v4956 = vpack.c.b16 %v4470, %v4467
  %v4957 = vpack.c.b16 %v4471, %v4468
  %v4958 = vpack.c.b16 %v4472, %v4469
  %v4959 = vpack.c.b16 %v4476, %v4473
  %v4960 = vpack.c.b16 %v4477, %v4474
  %v4961 = vpack.c.b16 %v4478, %v4475
  %v4962 = vpack.c.b16 %v4482, %v4479
  %v4963 = vpack.c.b16 %v4483, %v4480
  %v4964 = vpack.c.b16 %v4484, %v4481
  %v4965 = vpack.c.b16 %v4488, %v4485
  %v4966 = vpack.c.b16 %v4489, %v4486
  %v4967 = vpack.c.b16 %v4490, %v4487
  %v4968 = vpack.c.b16 %v4494, %v4491
  %v4969 = vpack.c.b16 %v4495, %v4492
  %v4970 = vpack.c.b16 %v4496, %v4493
  %v4971 = vpack.c.b16 %v4500, %v4497
  %v4972 = vpack.c.b16 %v4501, %v4498
  %v4973 = vpack.c.b16 %v4502, %v4499
  %v4974 = vpack.c.b16 %v4506, %v4503
  %v4975 = vpack.c.b16 %v4507, %v4504
  %v4976 = vpack.c.b16 %v4508, %v4505
  %v4977 = vpack.c.b16 %v4512, %v4509
  %v4978 = vpack.c.b16 %v4513, %v4510
  %v4979 = vpack.c.b16 %v4514, %v4511
  %v4980 = vpack.c.b16 %v4518, %v4515
  %v4981 = vpack.c.b16 %v4519, %v4516
  %v4982 = vpack.c.b16 %v4520, %v4517
  %v4983 = vpack.c.b16 %v4524, %v4521
  %v4984 = vpack.c.b16 %v4525, %v4522
  %v4985 = vpack.c.b16 %v4526, %v4523
  %v4986 = vpack.c.b16 %v4530, %v4527
  %v4987 = vpack.c.b16 %v4531, %v4528
  %v4988 = vpack.c.b16 %v4532, %v4529
  %v4989 = vpack.c.b16 %v4536, %v4533
  %v4990 = vpack.c.b16 %v4537, %v4534
  %v4991 = vpack.c.b16 %v4538, %v4535
  %v4992 = vpack.c.b16 %v4542, %v4539
  %v4993 = vpack.c.b16 %v4543, %v4540
  %v4994 = vpack.c.b16 %v4544, %v4541
  %v4995 = vpack.c.b16 %v4548, %v4545
  %v4996 = vpack.c.b16 %v4549, %v4546
  %v4997 = vpack.c.b16 %v4550, %v4547
  %v4998 = vpack.c.b16 %v4554, %v4551
  %v4999 = vpack.c.b16 %v4555, %v4552
  %v5000 = vpack.c.b16 %v4556, %v4553
  %v5001 = vpack.c.b16 %v4560, %v4557
  %v5002 = vpack.c.b16 %v4561, %v4558
  %v5003 = vpack.c.b16 %v4562, %v4559
  %v5004 = vpack.c.b16 %v4566, %v4563
  %v5005 = vpack.c.b16 %v4567, %v4564
  %v5006 = vpack.c.b16 %v4568, %v4565
  %v5007 = vpack.c.b16 %v4572, %v4569
  %v5008 = vpack.c.b16 %v4573, %v4570
  %v5009 = vpack.c.b16 %v4574, %v4571
  %v5010 = vpack.c.b16 %v4578, %v4575
  %v5011 = vpack.c.b16 %v4579, %v4576
  %v5012 = vpack.c.b16 %v4580, %v4577
  %v5013 = vpack.c.b16 %v4584, %v4581
  %v5014 = vpack.c.b16 %v4585, %v4582
  %v5015 = vpack.c.b16 %v4586, %v4583
  %v5016 = vpack.c.b16 %v4590, %v4587
  %v5017 = vpack.c.b16 %v4591, %v4588
  %v5018 = vpack.c.b16 %v4592, %v4589
  %v5019 = vpack.c.b16 %v4596, %v4593
  %v5020 = vpack.c.b16 %v4597, %v4594
  %v5021 = vpack.c.b16 %v4598, %v4595
  %v5022 = vpack.c.b16 %v4602, %v4599
  %v5023 = vpack.c.b16 %v4603, %v4600
  %v5024 = vpack.c.b16 %v4604, %v4601
  %v5025 = vpack.c.b16 %v4608, %v4605
  %v5026 = vpack.c.b16 %v4609, %v4606
  %v5027 = vpack.c.b16 %v4610, %v4607
  %v5028 = vpack.c.b16 %v4614, %v4611
  %v5029 = vpack.c.b16 %v4615, %v4612
  %v5030 = vpack.c.b16 %v4616, %v4613
  %v5031 = vpack.c.b16 %v4620, %v4617
  %v5032 = vpack.c.b16 %v4621, %v4618
  %v5033 = vpack.c.b16 %v4622, %v4619
  %v5034 = vpack.c.b16 %v4626, %v4623
  %v5035 = vpack.c.b16 %v4627, %v4624
  %v5036 = vpack.c.b16 %v4628, %v4625
  %v5037 = vpack.c.b16 %v4632, %v4629
  %v5038 = vpack.c.b16 %v4633, %v4630
  %v5039 = vpack.c.b16 %v4634, %v4631
  %v5040 = vpack.c.b16 %v4638, %v4635
  %v5041 = vpack.c.b16 %v4639, %v4636
  %v5042 = vpack.c.b16 %v4640, %v4637
  %v5043 = vpack.c.b16 %v4644, %v4641
  %v5044 = vpack.c.b16 %v4645, %v4642
  %v5045 = vpack.c.b16 %v4646, %v4643
  %v5046 = vpack.c.b16 %v4650, %v4647
  %v5047 = vpack.c.b16 %v4651, %v4648
  %v5048 = vpack.c.b16 %v4652, %v4649
  %v5049 = vpack.c.b16 %v4656, %v4653
  %v5050 = vpack.c.b16 %v4657, %v4654
  %v5051 = vpack.c.b16 %v4658, %v4655
  %v5052 = vpack.c.b16 %v4662, %v4659
  %v5053 = vpack.c.b16 %v4663, %v4660
  %v5054 = vpack.c.b16 %v4664, %v4661
  %v5055 = vpack.c.b16 %v4668, %v4665
  %v5056 = vpack.c.b16 %v4669, %v4666
  %v5057 = vpack.c.b16 %v4670, %v4667
  %v5058 = vpack.c.b16 %v4674, %v4671
  %v5059 = vpack.c.b16 %v4675, %v4672
  %v5060 = vpack.c.b16 %v4676, %v4673
  %v5061 = vpack.c.b16 %v4680, %v4677
  %v5062 = vpack.c.b16 %v4681, %v4678
  %v5063 = vpack.c.b16 %v4682, %v4679
  %v5064 = vpack.c.b16 %v4686, %v4683
  %v5065 = vpack.c.b16 %v4687, %v4684
  %v5066 = vpack.c.b16 %v4688, %v4685
  %v5067 = vpack.c.b16 %v4692, %v4689
  %v5068 = vpack.c.b16 %v4693, %v4690
  %v5069 = vpack.c.b16 %v4694, %v4691
  %v5070 = vpack.c.b16 %v4698, %v4695
  %v5071 = vpack.c.b16 %v4699, %v4696
  %v5072 = vpack.c.b16 %v4700, %v4697
  %v5073 = vpack.c.b16 %v4704, %v4701
  %v5074 = vpack.c.b16 %v4705, %v4702
  %v5075 = vpack.c.b16 %v4706, %v4703
  %v5076 = vpack.c.b16 %v4710, %v4707
  %v5077 = vpack.c.b16 %v4711, %v4708
  %v5078 = vpack.c.b16 %v4712, %v4709
  %v5079 = vpack.c.b16 %v4716, %v4713
  %v5080 = vpack.c.b16 %v4717, %v4714
  %v5081 = vpack.c.b16 %v4718, %v4715
  %v5082 = vpack.c.b16 %v4722, %v4719
  %v5083 = vpack.c.b16 %v4723, %v4720
  %v5084 = vpack.c.b16 %v4724, %v4721
  %v5085 = vpack.c.b16 %v4728, %v4725
  %v5086 = vpack.c.b16 %v4729, %v4726
  %v5087 = vpack.c.b16 %v4730, %v4727
  %v5088 = vpack.c.b16 %v4734, %v4731
  %v5089 = vpack.c.b16 %v4735, %v4732
  %v5090 = vpack.c.b16 %v4736, %v4733
  %v5091 = vpack.c.b16 %v4740, %v4737
  %v5092 = vpack.c.b16 %v4741, %v4738
  %v5093 = vpack.c.b16 %v4742, %v4739
  %v5094 = vpack.c.b16 %v4746, %v4743
  %v5095 = vpack.c.b16 %v4747, %v4744
  %v5096 = vpack.c.b16 %v4748, %v4745
  %v5097 = vpack.c.b16 %v4752, %v4749
  %v5098 = vpack.c.b16 %v4753, %v4750
  %v5099 = vpack.c.b16 %v4754, %v4751
  %v5100 = vpack.c.b16 %v4758, %v4755
  %v5101 = vpack.c.b16 %v4759, %v4756
  %v5102 = vpack.c.b16 %v4760, %v4757
  %v5103 = vpack.c.b16 %v4764, %v4761
  %v5104 = vpack.c.b16 %v4765, %v4762
  %v5105 = vpack.c.b16 %v4766, %v4763
  %v5106 = vpack.c.b16 %v4770, %v4767
  %v5107 = vpack.c.b16 %v4771, %v4768
  %v5108 = vpack.c.b16 %v4772, %v4769
  %v5109 = vpack.c.b16 %v4776, %v4773
  %v5110 = vpack.c.b16 %v4777, %v4774
  %v5111 = vpack.c.b16 %v4778, %v4775
  %v5112 = vpack.c.b16 %v4782, %v4779
  %v5113 = vpack.c.b16 %v4783, %v4780
  %v5114 = vpack.c.b16 %v4784, %v4781
  %v5115 = vpack.c.b16 %v4788, %v4785
  %v5116 = vpack.c.b16 %v4789, %v4786
  %v5117 = vpack.c.b16 %v4790, %v4787
  %v5118 = vpack.c.b16 %v4794, %v4791
  %v5119 = vpack.c.b16 %v4795, %v4792
  %v5120 = vpack.c.b16 %v4796, %v4793
  %v5121 = vpack.c.b16 %v4800, %v4797
  %v5122 = vpack.c.b16 %v4801, %v4798
  %v5123 = vpack.c.b16 %v4802, %v4799
  %v5124 = vpack.c.b16 %v4806, %v4803
  %v5125 = vpack.c.b16 %v4807, %v4804
  %v5126 = vpack.c.b16 %v4808, %v4805
  %v5127 = vpack.c.b16 %v4812, %v4809
  %v5128 = vpack.c.b16 %v4813, %v4810
  %v5129 = vpack.c.b16 %v4814, %v4811
  %v5130 = vpack.c.b16 %v4818, %v4815
  %v5131 = vpack.c.b16 %v4819, %v4816
  %v5132 = vpack.c.b16 %v4820, %v4817
  %v5133 = vpack.c.b16 %v4824, %v4821
  %v5134 = vpack.c.b16 %v4825, %v4822
  %v5135 = vpack.c.b16 %v4826, %v4823
  %v5136 = vpack.c.b16 %v4830, %v4827
  %v5137 = vpack.c.b16 %v4831, %v4828
  %v5138 = vpack.c.b16 %v4832, %v4829
  %v5139 = vpack.c.b16 %v4836, %v4833
  %v5140 = vpack.c.b16 %v4837, %v4834
  %v5141 = vpack.c.b16 %v4838, %v4835
  %v5142 = vpack.c.b16 %v4842, %v4839
  %v5143 = vpack.c.b16 %v4843, %v4840
  %v5144 = vpack.c.b16 %v4844, %v4841
  %v5145 = vpack.c.b16 %v4848, %v4845
  %v5146 = vpack.c.b16 %v4849, %v4846
  %v5147 = vpack.c.b16 %v4850, %v4847
  %v5148 = vpack.c.b16 %v4854, %v4851
  %v5149 = vpack.c.b16 %v4855, %v4852
  %v5150 = vpack.c.b16 %v4856, %v4853
  %v5151 = vpack.c.b16 %v4860, %v4857
  %v5152 = vpack.c.b16 %v4861, %v4858
  %v5153 = vpack.c.b16 %v4862, %v4859
  %v5154 = vpack.c.b16 %v4866, %v4863
  %v5155 = vpack.c.b16 %v4867, %v4864
  %v5156 = vpack.c.b16 %v4868, %v4865
  %5445 = vmatpush.bf16.msra.mxu0 %v4890
  %5446 = vmatpush.bf16.msra.mxu0 %v4887
  %5447 = vmatpush.bf16.msra.mxu0 %v4884
  %5448 = vmatpush.bf16.msra.mxu0 %v4881
  %5449 = vmatpush.bf16.msra.mxu0 %v4878
  %5450 = vmatpush.bf16.msra.mxu0 %v4875
  %5451 = vmatpush.bf16.msra.mxu0 %v4872
  %5452 = vmatpush.bf16.msra.mxu0 %v4869
  %5453 = vmatmul.bf16.gmra.mxu0 %v3505
  %v5454 = vpop.f32.mrf.mxu0
  %v5455 = vadd.f32 %v3903, %v5454
  %v5456 = vpop.f32.mrf.mxu0
  %5457 = vdwg.mxu0
  %5458 = vmatpush.bf16.msra.mxu0 %v4914
  %5459 = vmatpush.bf16.msra.mxu0 %v4911
  %5460 = vmatpush.bf16.msra.mxu0 %v4908
  %5461 = vmatpush.bf16.msra.mxu0 %v4905
  %5462 = vmatpush.bf16.msra.mxu0 %v4902
  %5463 = vmatpush.bf16.msra.mxu0 %v4899
  %5464 = vmatpush.bf16.msra.mxu0 %v4896
  %5465 = vmatpush.bf16.msra.mxu0 %v4893
  %5466 = vmatmul.bf16.gmra.mxu0 %v3506
  %v5467 = vpop.f32.mrf.mxu0
  %v5468 = vadd.f32 %v5455, %v5467
  %v5469 = vpop.f32.mrf.mxu0
  %5470 = vdwg.mxu0
  %5471 = vmatpush.bf16.msra.mxu0 %v4938
  %5472 = vmatpush.bf16.msra.mxu0 %v4935
  %5473 = vmatpush.bf16.msra.mxu0 %v4932
  %5474 = vmatpush.bf16.msra.mxu0 %v4929
  %5475 = vmatpush.bf16.msra.mxu0 %v4926
  %5476 = vmatpush.bf16.msra.mxu0 %v4923
  %5477 = vmatpush.bf16.msra.mxu0 %v4920
  %5478 = vmatpush.bf16.msra.mxu0 %v4917
  %5479 = vmatmul.bf16.gmra.mxu0 %v3507
  %v5480 = vpop.f32.mrf.mxu0
  %v5481 = vadd.f32 %v5468, %v5480
  %v5482 = vpop.f32.mrf.mxu0
  %5483 = vdwg.mxu0
  %5484 = vmatpush.bf16.msra.mxu0 %v4962
  %5485 = vmatpush.bf16.msra.mxu0 %v4959
  %5486 = vmatpush.bf16.msra.mxu0 %v4956
  %5487 = vmatpush.bf16.msra.mxu0 %v4953
  %5488 = vmatpush.bf16.msra.mxu0 %v4950
  %5489 = vmatpush.bf16.msra.mxu0 %v4947
  %5490 = vmatpush.bf16.msra.mxu0 %v4944
  %5491 = vmatpush.bf16.msra.mxu0 %v4941
  %5492 = vmatmul.bf16.gmra.mxu0 %v3508
  %v5493 = vpop.f32.mrf.mxu0
  %v5494 = vadd.f32 %v5481, %v5493
  %v5495 = vpop.f32.mrf.mxu0
  %5496 = vdwg.mxu0
  %5497 = vmatpush.bf16.msra.mxu0 %v4986
  %5498 = vmatpush.bf16.msra.mxu0 %v4983
  %5499 = vmatpush.bf16.msra.mxu0 %v4980
  %5500 = vmatpush.bf16.msra.mxu0 %v4977
  %5501 = vmatpush.bf16.msra.mxu0 %v4974
  %5502 = vmatpush.bf16.msra.mxu0 %v4971
  %5503 = vmatpush.bf16.msra.mxu0 %v4968
  %5504 = vmatpush.bf16.msra.mxu0 %v4965
  %5505 = vmatmul.bf16.gmra.mxu0 %v3509
  %v5506 = vpop.f32.mrf.mxu0
  %v5507 = vadd.f32 %v5494, %v5506
  %v5508 = vpop.f32.mrf.mxu0
  %5509 = vdwg.mxu0
  %5510 = vmatpush.bf16.msra.mxu0 %v5010
  %5511 = vmatpush.bf16.msra.mxu0 %v5007
  %5512 = vmatpush.bf16.msra.mxu0 %v5004
  %5513 = vmatpush.bf16.msra.mxu0 %v5001
  %5514 = vmatpush.bf16.msra.mxu0 %v4998
  %5515 = vmatpush.bf16.msra.mxu0 %v4995
  %5516 = vmatpush.bf16.msra.mxu0 %v4992
  %5517 = vmatpush.bf16.msra.mxu0 %v4989
  %5518 = vmatmul.bf16.gmra.mxu0 %v3510
  %v5519 = vpop.f32.mrf.mxu0
  %v5520 = vadd.f32 %v5507, %v5519
  %v5521 = vpop.f32.mrf.mxu0
  %5522 = vdwg.mxu0
  %5523 = vmatpush.bf16.msra.mxu0 %v5034
  %5524 = vmatpush.bf16.msra.mxu0 %v5031
  %5525 = vmatpush.bf16.msra.mxu0 %v5028
  %5526 = vmatpush.bf16.msra.mxu0 %v5025
  %5527 = vmatpush.bf16.msra.mxu0 %v5022
  %5528 = vmatpush.bf16.msra.mxu0 %v5019
  %5529 = vmatpush.bf16.msra.mxu0 %v5016
  %5530 = vmatpush.bf16.msra.mxu0 %v5013
  %5531 = vmatmul.bf16.gmra.mxu0 %v3511
  %v5532 = vpop.f32.mrf.mxu0
  %v5533 = vadd.f32 %v5520, %v5532
  %v5534 = vpop.f32.mrf.mxu0
  %5535 = vdwg.mxu0
  %5536 = vmatpush.bf16.msra.mxu0 %v5058
  %5537 = vmatpush.bf16.msra.mxu0 %v5055
  %5538 = vmatpush.bf16.msra.mxu0 %v5052
  %5539 = vmatpush.bf16.msra.mxu0 %v5049
  %5540 = vmatpush.bf16.msra.mxu0 %v5046
  %5541 = vmatpush.bf16.msra.mxu0 %v5043
  %5542 = vmatpush.bf16.msra.mxu0 %v5040
  %5543 = vmatpush.bf16.msra.mxu0 %v5037
  %5544 = vmatmul.bf16.gmra.mxu0 %v3512
  %v5545 = vpop.f32.mrf.mxu0
  %v5546 = vadd.f32 %v5533, %v5545
  %v5547 = vpop.f32.mrf.mxu0
  %5548 = vdwg.mxu0
  %5549 = vmatpush.bf16.msra.mxu0 %v5082
  %5550 = vmatpush.bf16.msra.mxu0 %v5079
  %5551 = vmatpush.bf16.msra.mxu0 %v5076
  %5552 = vmatpush.bf16.msra.mxu0 %v5073
  %5553 = vmatpush.bf16.msra.mxu0 %v5070
  %5554 = vmatpush.bf16.msra.mxu0 %v5067
  %5555 = vmatpush.bf16.msra.mxu0 %v5064
  %5556 = vmatpush.bf16.msra.mxu0 %v5061
  %5557 = vmatmul.bf16.gmra.mxu0 %v3513
  %v5558 = vpop.f32.mrf.mxu0
  %v5559 = vadd.f32 %v5546, %v5558
  %v5560 = vpop.f32.mrf.mxu0
  %5561 = vdwg.mxu0
  %5562 = vmatpush.bf16.msra.mxu0 %v5106
  %5563 = vmatpush.bf16.msra.mxu0 %v5103
  %5564 = vmatpush.bf16.msra.mxu0 %v5100
  %5565 = vmatpush.bf16.msra.mxu0 %v5097
  %5566 = vmatpush.bf16.msra.mxu0 %v5094
  %5567 = vmatpush.bf16.msra.mxu0 %v5091
  %5568 = vmatpush.bf16.msra.mxu0 %v5088
  %5569 = vmatpush.bf16.msra.mxu0 %v5085
  %5570 = vmatmul.bf16.gmra.mxu0 %v3514
  %v5571 = vpop.f32.mrf.mxu0
  %v5572 = vadd.f32 %v5559, %v5571
  %v5573 = vpop.f32.mrf.mxu0
  %5574 = vdwg.mxu0
  %5575 = vmatpush.bf16.msra.mxu0 %v5130
  %5576 = vmatpush.bf16.msra.mxu0 %v5127
  %5577 = vmatpush.bf16.msra.mxu0 %v5124
  %5578 = vmatpush.bf16.msra.mxu0 %v5121
  %5579 = vmatpush.bf16.msra.mxu0 %v5118
  %5580 = vmatpush.bf16.msra.mxu0 %v5115
  %5581 = vmatpush.bf16.msra.mxu0 %v5112
  %5582 = vmatpush.bf16.msra.mxu0 %v5109
  %5583 = vmatmul.bf16.gmra.mxu0 %v3515
  %v5584 = vpop.f32.mrf.mxu0
  %v5585 = vadd.f32 %v5572, %v5584
  %v5586 = vpop.f32.mrf.mxu0
  %5587 = vdwg.mxu0
  %5588 = vmatpush.bf16.msra.mxu0 %v5154
  %5589 = vmatpush.bf16.msra.mxu0 %v5151
  %5590 = vmatpush.bf16.msra.mxu0 %v5148
  %5591 = vmatpush.bf16.msra.mxu0 %v5145
  %5592 = vmatpush.bf16.msra.mxu0 %v5142
  %5593 = vmatpush.bf16.msra.mxu0 %v5139
  %5594 = vmatpush.bf16.msra.mxu0 %v5136
  %5595 = vmatpush.bf16.msra.mxu0 %v5133
  %5596 = vmatmul.bf16.gmra.mxu0 %v3516
  %v5597 = vpop.f32.mrf.mxu0
  %v5598 = vadd.f32 %v5585, %v5597
  %v5599 = vpop.f32.mrf.mxu0
  %5600 = vdwg.mxu0
  %5601 = vmatpush.bf16.msra.mxu0 %v4891
  %5602 = vmatpush.bf16.msra.mxu0 %v4888
  %5603 = vmatpush.bf16.msra.mxu0 %v4885
  %5604 = vmatpush.bf16.msra.mxu0 %v4882
  %5605 = vmatpush.bf16.msra.mxu0 %v4879
  %5606 = vmatpush.bf16.msra.mxu0 %v4876
  %5607 = vmatpush.bf16.msra.mxu0 %v4873
  %5608 = vmatpush.bf16.msra.mxu0 %v4870
  %5609 = vmatmul.bf16.gmra.mxu0 %v3505
  %v5610 = vpop.f32.mrf.mxu0
  %v5611 = vadd.f32 %v3904, %v5610
  %v5612 = vpop.f32.mrf.mxu0
  %5613 = vdwg.mxu0
  %5614 = vmatpush.bf16.msra.mxu0 %v4915
  %5615 = vmatpush.bf16.msra.mxu0 %v4912
  %5616 = vmatpush.bf16.msra.mxu0 %v4909
  %5617 = vmatpush.bf16.msra.mxu0 %v4906
  %5618 = vmatpush.bf16.msra.mxu0 %v4903
  %5619 = vmatpush.bf16.msra.mxu0 %v4900
  %5620 = vmatpush.bf16.msra.mxu0 %v4897
  %5621 = vmatpush.bf16.msra.mxu0 %v4894
  %5622 = vmatmul.bf16.gmra.mxu0 %v3506
  %v5623 = vpop.f32.mrf.mxu0
  %v5624 = vadd.f32 %v5611, %v5623
  %v5625 = vpop.f32.mrf.mxu0
  %5626 = vdwg.mxu0
  %5627 = vmatpush.bf16.msra.mxu0 %v4939
  %5628 = vmatpush.bf16.msra.mxu0 %v4936
  %5629 = vmatpush.bf16.msra.mxu0 %v4933
  %5630 = vmatpush.bf16.msra.mxu0 %v4930
  %5631 = vmatpush.bf16.msra.mxu0 %v4927
  %5632 = vmatpush.bf16.msra.mxu0 %v4924
  %5633 = vmatpush.bf16.msra.mxu0 %v4921
  %5634 = vmatpush.bf16.msra.mxu0 %v4918
  %5635 = vmatmul.bf16.gmra.mxu0 %v3507
  %v5636 = vpop.f32.mrf.mxu0
  %v5637 = vadd.f32 %v5624, %v5636
  %v5638 = vpop.f32.mrf.mxu0
  %5639 = vdwg.mxu0
  %5640 = vmatpush.bf16.msra.mxu0 %v4963
  %5641 = vmatpush.bf16.msra.mxu0 %v4960
  %5642 = vmatpush.bf16.msra.mxu0 %v4957
  %5643 = vmatpush.bf16.msra.mxu0 %v4954
  %5644 = vmatpush.bf16.msra.mxu0 %v4951
  %5645 = vmatpush.bf16.msra.mxu0 %v4948
  %5646 = vmatpush.bf16.msra.mxu0 %v4945
  %5647 = vmatpush.bf16.msra.mxu0 %v4942
  %5648 = vmatmul.bf16.gmra.mxu0 %v3508
  %v5649 = vpop.f32.mrf.mxu0
  %v5650 = vadd.f32 %v5637, %v5649
  %v5651 = vpop.f32.mrf.mxu0
  %5652 = vdwg.mxu0
  %5653 = vmatpush.bf16.msra.mxu0 %v4987
  %5654 = vmatpush.bf16.msra.mxu0 %v4984
  %5655 = vmatpush.bf16.msra.mxu0 %v4981
  %5656 = vmatpush.bf16.msra.mxu0 %v4978
  %5657 = vmatpush.bf16.msra.mxu0 %v4975
  %5658 = vmatpush.bf16.msra.mxu0 %v4972
  %5659 = vmatpush.bf16.msra.mxu0 %v4969
  %5660 = vmatpush.bf16.msra.mxu0 %v4966
  %5661 = vmatmul.bf16.gmra.mxu0 %v3509
  %v5662 = vpop.f32.mrf.mxu0
  %v5663 = vadd.f32 %v5650, %v5662
  %v5664 = vpop.f32.mrf.mxu0
  %5665 = vdwg.mxu0
  %5666 = vmatpush.bf16.msra.mxu0 %v5011
  %5667 = vmatpush.bf16.msra.mxu0 %v5008
  %5668 = vmatpush.bf16.msra.mxu0 %v5005
  %5669 = vmatpush.bf16.msra.mxu0 %v5002
  %5670 = vmatpush.bf16.msra.mxu0 %v4999
  %5671 = vmatpush.bf16.msra.mxu0 %v4996
  %5672 = vmatpush.bf16.msra.mxu0 %v4993
  %5673 = vmatpush.bf16.msra.mxu0 %v4990
  %5674 = vmatmul.bf16.gmra.mxu0 %v3510
  %v5675 = vpop.f32.mrf.mxu0
  %v5676 = vadd.f32 %v5663, %v5675
  %v5677 = vpop.f32.mrf.mxu0
  %5678 = vdwg.mxu0
  %5679 = vmatpush.bf16.msra.mxu0 %v5035
  %5680 = vmatpush.bf16.msra.mxu0 %v5032
  %5681 = vmatpush.bf16.msra.mxu0 %v5029
  %5682 = vmatpush.bf16.msra.mxu0 %v5026
  %5683 = vmatpush.bf16.msra.mxu0 %v5023
  %5684 = vmatpush.bf16.msra.mxu0 %v5020
  %5685 = vmatpush.bf16.msra.mxu0 %v5017
  %5686 = vmatpush.bf16.msra.mxu0 %v5014
  %5687 = vmatmul.bf16.gmra.mxu0 %v3511
  %v5688 = vpop.f32.mrf.mxu0
  %v5689 = vadd.f32 %v5676, %v5688
  %v5690 = vpop.f32.mrf.mxu0
  %5691 = vdwg.mxu0
  %5692 = vmatpush.bf16.msra.mxu0 %v5059
  %5693 = vmatpush.bf16.msra.mxu0 %v5056
  %5694 = vmatpush.bf16.msra.mxu0 %v5053
  %5695 = vmatpush.bf16.msra.mxu0 %v5050
  %5696 = vmatpush.bf16.msra.mxu0 %v5047
  %5697 = vmatpush.bf16.msra.mxu0 %v5044
  %5698 = vmatpush.bf16.msra.mxu0 %v5041
  %5699 = vmatpush.bf16.msra.mxu0 %v5038
  %5700 = vmatmul.bf16.gmra.mxu0 %v3512
  %v5701 = vpop.f32.mrf.mxu0
  %v5702 = vadd.f32 %v5689, %v5701
  %v5703 = vpop.f32.mrf.mxu0
  %5704 = vdwg.mxu0
  %5705 = vmatpush.bf16.msra.mxu0 %v5083
  %5706 = vmatpush.bf16.msra.mxu0 %v5080
  %5707 = vmatpush.bf16.msra.mxu0 %v5077
  %5708 = vmatpush.bf16.msra.mxu0 %v5074
  %5709 = vmatpush.bf16.msra.mxu0 %v5071
  %5710 = vmatpush.bf16.msra.mxu0 %v5068
  %5711 = vmatpush.bf16.msra.mxu0 %v5065
  %5712 = vmatpush.bf16.msra.mxu0 %v5062
  %5713 = vmatmul.bf16.gmra.mxu0 %v3513
  %v5714 = vpop.f32.mrf.mxu0
  %v5715 = vadd.f32 %v5702, %v5714
  %v5716 = vpop.f32.mrf.mxu0
  %5717 = vdwg.mxu0
  %5718 = vmatpush.bf16.msra.mxu0 %v5107
  %5719 = vmatpush.bf16.msra.mxu0 %v5104
  %5720 = vmatpush.bf16.msra.mxu0 %v5101
  %5721 = vmatpush.bf16.msra.mxu0 %v5098
  %5722 = vmatpush.bf16.msra.mxu0 %v5095
  %5723 = vmatpush.bf16.msra.mxu0 %v5092
  %5724 = vmatpush.bf16.msra.mxu0 %v5089
  %5725 = vmatpush.bf16.msra.mxu0 %v5086
  %5726 = vmatmul.bf16.gmra.mxu0 %v3514
  %v5727 = vpop.f32.mrf.mxu0
  %v5728 = vadd.f32 %v5715, %v5727
  %v5729 = vpop.f32.mrf.mxu0
  %5730 = vdwg.mxu0
  %5731 = vmatpush.bf16.msra.mxu0 %v5131
  %5732 = vmatpush.bf16.msra.mxu0 %v5128
  %5733 = vmatpush.bf16.msra.mxu0 %v5125
  %5734 = vmatpush.bf16.msra.mxu0 %v5122
  %5735 = vmatpush.bf16.msra.mxu0 %v5119
  %5736 = vmatpush.bf16.msra.mxu0 %v5116
  %5737 = vmatpush.bf16.msra.mxu0 %v5113
  %5738 = vmatpush.bf16.msra.mxu0 %v5110
  %5739 = vmatmul.bf16.gmra.mxu0 %v3515
  %v5740 = vpop.f32.mrf.mxu0
  %v5741 = vadd.f32 %v5728, %v5740
  %v5742 = vpop.f32.mrf.mxu0
  %5743 = vdwg.mxu0
  %5744 = vmatpush.bf16.msra.mxu0 %v5155
  %5745 = vmatpush.bf16.msra.mxu0 %v5152
  %5746 = vmatpush.bf16.msra.mxu0 %v5149
  %5747 = vmatpush.bf16.msra.mxu0 %v5146
  %5748 = vmatpush.bf16.msra.mxu0 %v5143
  %5749 = vmatpush.bf16.msra.mxu0 %v5140
  %5750 = vmatpush.bf16.msra.mxu0 %v5137
  %5751 = vmatpush.bf16.msra.mxu0 %v5134
  %5752 = vmatmul.bf16.gmra.mxu0 %v3516
  %v5753 = vpop.f32.mrf.mxu0
  %v5754 = vadd.f32 %v5741, %v5753
  %v5755 = vpop.f32.mrf.mxu0
  %5756 = vdwg.mxu0
  %5757 = vmatpush.bf16.msra.mxu0 %v4892
  %5758 = vmatpush.bf16.msra.mxu0 %v4889
  %5759 = vmatpush.bf16.msra.mxu0 %v4886
  %5760 = vmatpush.bf16.msra.mxu0 %v4883
  %5761 = vmatpush.bf16.msra.mxu0 %v4880
  %5762 = vmatpush.bf16.msra.mxu0 %v4877
  %5763 = vmatpush.bf16.msra.mxu0 %v4874
  %5764 = vmatpush.bf16.msra.mxu0 %v4871
  %5765 = vmatmul.bf16.gmra.mxu0 %v3505
  %v5766 = vpop.f32.mrf.mxu0
  %v5767 = vadd.f32 %v3905, %v5766
  %v5768 = vpop.f32.mrf.mxu0
  %5769 = vdwg.mxu0
  %5770 = vmatpush.bf16.msra.mxu0 %v4916
  %5771 = vmatpush.bf16.msra.mxu0 %v4913
  %5772 = vmatpush.bf16.msra.mxu0 %v4910
  %5773 = vmatpush.bf16.msra.mxu0 %v4907
  %5774 = vmatpush.bf16.msra.mxu0 %v4904
  %5775 = vmatpush.bf16.msra.mxu0 %v4901
  %5776 = vmatpush.bf16.msra.mxu0 %v4898
  %5777 = vmatpush.bf16.msra.mxu0 %v4895
  %5778 = vmatmul.bf16.gmra.mxu0 %v3506
  %v5779 = vpop.f32.mrf.mxu0
  %v5780 = vadd.f32 %v5767, %v5779
  %v5781 = vpop.f32.mrf.mxu0
  %5782 = vdwg.mxu0
  %5783 = vmatpush.bf16.msra.mxu0 %v4940
  %5784 = vmatpush.bf16.msra.mxu0 %v4937
  %5785 = vmatpush.bf16.msra.mxu0 %v4934
  %5786 = vmatpush.bf16.msra.mxu0 %v4931
  %5787 = vmatpush.bf16.msra.mxu0 %v4928
  %5788 = vmatpush.bf16.msra.mxu0 %v4925
  %5789 = vmatpush.bf16.msra.mxu0 %v4922
  %5790 = vmatpush.bf16.msra.mxu0 %v4919
  %5791 = vmatmul.bf16.gmra.mxu0 %v3507
  %v5792 = vpop.f32.mrf.mxu0
  %v5793 = vadd.f32 %v5780, %v5792
  %v5794 = vpop.f32.mrf.mxu0
  %5795 = vdwg.mxu0
  %5796 = vmatpush.bf16.msra.mxu0 %v4964
  %5797 = vmatpush.bf16.msra.mxu0 %v4961
  %5798 = vmatpush.bf16.msra.mxu0 %v4958
  %5799 = vmatpush.bf16.msra.mxu0 %v4955
  %5800 = vmatpush.bf16.msra.mxu0 %v4952
  %5801 = vmatpush.bf16.msra.mxu0 %v4949
  %5802 = vmatpush.bf16.msra.mxu0 %v4946
  %5803 = vmatpush.bf16.msra.mxu0 %v4943
  %5804 = vmatmul.bf16.gmra.mxu0 %v3508
  %v5805 = vpop.f32.mrf.mxu0
  %v5806 = vadd.f32 %v5793, %v5805
  %v5807 = vpop.f32.mrf.mxu0
  %5808 = vdwg.mxu0
  %5809 = vmatpush.bf16.msra.mxu0 %v4988
  %5810 = vmatpush.bf16.msra.mxu0 %v4985
  %5811 = vmatpush.bf16.msra.mxu0 %v4982
  %5812 = vmatpush.bf16.msra.mxu0 %v4979
  %5813 = vmatpush.bf16.msra.mxu0 %v4976
  %5814 = vmatpush.bf16.msra.mxu0 %v4973
  %5815 = vmatpush.bf16.msra.mxu0 %v4970
  %5816 = vmatpush.bf16.msra.mxu0 %v4967
  %5817 = vmatmul.bf16.gmra.mxu0 %v3509
  %v5818 = vpop.f32.mrf.mxu0
  %v5819 = vadd.f32 %v5806, %v5818
  %v5820 = vpop.f32.mrf.mxu0
  %5821 = vdwg.mxu0
  %5822 = vmatpush.bf16.msra.mxu0 %v5012
  %5823 = vmatpush.bf16.msra.mxu0 %v5009
  %5824 = vmatpush.bf16.msra.mxu0 %v5006
  %5825 = vmatpush.bf16.msra.mxu0 %v5003
  %5826 = vmatpush.bf16.msra.mxu0 %v5000
  %5827 = vmatpush.bf16.msra.mxu0 %v4997
  %5828 = vmatpush.bf16.msra.mxu0 %v4994
  %5829 = vmatpush.bf16.msra.mxu0 %v4991
  %5830 = vmatmul.bf16.gmra.mxu0 %v3510
  %v5831 = vpop.f32.mrf.mxu0
  %v5832 = vadd.f32 %v5819, %v5831
  %v5833 = vpop.f32.mrf.mxu0
  %5834 = vdwg.mxu0
  %5835 = vmatpush.bf16.msra.mxu0 %v5036
  %5836 = vmatpush.bf16.msra.mxu0 %v5033
  %5837 = vmatpush.bf16.msra.mxu0 %v5030
  %5838 = vmatpush.bf16.msra.mxu0 %v5027
  %5839 = vmatpush.bf16.msra.mxu0 %v5024
  %5840 = vmatpush.bf16.msra.mxu0 %v5021
  %5841 = vmatpush.bf16.msra.mxu0 %v5018
  %5842 = vmatpush.bf16.msra.mxu0 %v5015
  %5843 = vmatmul.bf16.gmra.mxu0 %v3511
  %v5844 = vpop.f32.mrf.mxu0
  %v5845 = vadd.f32 %v5832, %v5844
  %v5846 = vpop.f32.mrf.mxu0
  %5847 = vdwg.mxu0
  %5848 = vmatpush.bf16.msra.mxu0 %v5060
  %5849 = vmatpush.bf16.msra.mxu0 %v5057
  %5850 = vmatpush.bf16.msra.mxu0 %v5054
  %5851 = vmatpush.bf16.msra.mxu0 %v5051
  %5852 = vmatpush.bf16.msra.mxu0 %v5048
  %5853 = vmatpush.bf16.msra.mxu0 %v5045
  %5854 = vmatpush.bf16.msra.mxu0 %v5042
  %5855 = vmatpush.bf16.msra.mxu0 %v5039
  %5856 = vmatmul.bf16.gmra.mxu0 %v3512
  %v5857 = vpop.f32.mrf.mxu0
  %v5858 = vadd.f32 %v5845, %v5857
  %v5859 = vpop.f32.mrf.mxu0
  %5860 = vdwg.mxu0
  %5861 = vmatpush.bf16.msra.mxu0 %v5084
  %5862 = vmatpush.bf16.msra.mxu0 %v5081
  %5863 = vmatpush.bf16.msra.mxu0 %v5078
  %5864 = vmatpush.bf16.msra.mxu0 %v5075
  %5865 = vmatpush.bf16.msra.mxu0 %v5072
  %5866 = vmatpush.bf16.msra.mxu0 %v5069
  %5867 = vmatpush.bf16.msra.mxu0 %v5066
  %5868 = vmatpush.bf16.msra.mxu0 %v5063
  %5869 = vmatmul.bf16.gmra.mxu0 %v3513
  %v5870 = vpop.f32.mrf.mxu0
  %v5871 = vadd.f32 %v5858, %v5870
  %v5872 = vpop.f32.mrf.mxu0
  %5873 = vdwg.mxu0
  %5874 = vmatpush.bf16.msra.mxu0 %v5108
  %5875 = vmatpush.bf16.msra.mxu0 %v5105
  %5876 = vmatpush.bf16.msra.mxu0 %v5102
  %5877 = vmatpush.bf16.msra.mxu0 %v5099
  %5878 = vmatpush.bf16.msra.mxu0 %v5096
  %5879 = vmatpush.bf16.msra.mxu0 %v5093
  %5880 = vmatpush.bf16.msra.mxu0 %v5090
  %5881 = vmatpush.bf16.msra.mxu0 %v5087
  %5882 = vmatmul.bf16.gmra.mxu0 %v3514
  %v5883 = vpop.f32.mrf.mxu0
  %v5884 = vadd.f32 %v5871, %v5883
  %v5885 = vpop.f32.mrf.mxu0
  %5886 = vdwg.mxu0
  %5887 = vmatpush.bf16.msra.mxu0 %v5132
  %5888 = vmatpush.bf16.msra.mxu0 %v5129
  %5889 = vmatpush.bf16.msra.mxu0 %v5126
  %5890 = vmatpush.bf16.msra.mxu0 %v5123
  %5891 = vmatpush.bf16.msra.mxu0 %v5120
  %5892 = vmatpush.bf16.msra.mxu0 %v5117
  %5893 = vmatpush.bf16.msra.mxu0 %v5114
  %5894 = vmatpush.bf16.msra.mxu0 %v5111
  %5895 = vmatmul.bf16.gmra.mxu0 %v3515
  %v5896 = vpop.f32.mrf.mxu0
  %v5897 = vadd.f32 %v5884, %v5896
  %v5898 = vpop.f32.mrf.mxu0
  %5899 = vdwg.mxu0
  %5900 = vmatpush.bf16.msra.mxu0 %v5156
  %5901 = vmatpush.bf16.msra.mxu0 %v5153
  %5902 = vmatpush.bf16.msra.mxu0 %v5150
  %5903 = vmatpush.bf16.msra.mxu0 %v5147
  %5904 = vmatpush.bf16.msra.mxu0 %v5144
  %5905 = vmatpush.bf16.msra.mxu0 %v5141
  %5906 = vmatpush.bf16.msra.mxu0 %v5138
  %5907 = vmatpush.bf16.msra.mxu0 %v5135
  %5908 = vmatmul.bf16.gmra.mxu0 %v3516
  %v5909 = vpop.f32.mrf.mxu0
  %v5910 = vadd.f32 %v5897, %v5909
  %v5911 = vpop.f32.mrf.mxu0
  %5912 = vdwg.mxu0
  %5913 = vst [vmem:[%s9] sm:$0xff] %v5598
  %5914 = vst [vmem:[%s9 + $0x8] sm:$0xff] %v5754
  %5915 = vst [vmem:[%s9 + $0x10] sm:$0xff] %v5910
  // Predicated region
  $region38: #{cnn_forward.1} parent=0 // pred_check
    _
  $region39: #{cnn_forward.1} parent=0 // pred_check_branch
    %5917 = sbr.rel (0) target = $region41
  $region40: #{cnn_forward.1} parent=0 // pred_region
    _
  $region41: #{cnn_forward.1} parent=0 // pred_fallthru
    _
  // Predicated region
  $region42: #{cnn_forward.1} parent=0 // pred_check
    _
  $region43: #{cnn_forward.1} parent=0 // pred_check_branch
    %5919 = sbr.rel (0) target = $region45
  $region44: #{cnn_forward.1} parent=0 // pred_region
    _
  $region45: #{cnn_forward.1} parent=0 // pred_fallthru
    _

</llo_original>
